<compile_context>
chip_gen: v5e
topology: v5e:2x2
jax: 0.10.0
libtpu: 0.0.40
codegen_flags: <defaults>
</compile_context>

<pallas_src>
import jax
import jax.numpy as jnp
import numpy as np
from jax import lax
from jax.experimental import pallas as pl
from jax.experimental.pallas import tpu as pltpu


# ---------------------------------------------------------------------------
# Pallas kernel: fused zero-pad + 3x3 conv (single K=9*Cin matmul) +
# folded-BN shift + optional residual + optional ReLU.  One batch element per
# grid step.
# ---------------------------------------------------------------------------
def _make_conv_kernel(taps, phase_dims, apply_relu, add_residual,
                      H, Ho, Wo, Cin, Cout):
  """taps: tuple of (phase, dy, col_start), ordered t = dy*3 + dx so it matches
  w.reshape(9*Cin, Cout).  phase_dims: (in_width, pad_width, col_offset) per
  input phase slab (2 phases only for the stride-(1,2) DownSample convs)."""
  num_phases = len(phase_dims)
  K = 9 * Cin

  def kernel(*refs):
    i = 0
    x_refs = refs[i:i + num_phases]; i += num_phases          # bf16 unpadded
    w_ref = refs[i]; i += 1                                    # (9*Cin, Cout) bf16
    shift_ref = refs[i]; i += 1                                # (1, Cout) f32
    res_ref = None
    if add_residual:
      res_ref = refs[i]; i += 1                                # (Ho, Wo, Cout) bf16
    o_ref = refs[i]; i += 1                                    # (Ho, Wo, Cout) bf16
    pad_refs = refs[i:i + num_phases]; i += num_phases         # bf16 VMEM scratch
    col_ref = refs[i]                                          # (Ho, Wo, 9*Cin) bf16

    # Fused zero-pad: zero the padded scratch, copy the interior (input is
    # already bf16 — no wrapper-side pad/cast pass over HBM).
    for p, (in_w, _, off) in enumerate(phase_dims):
      pad_refs[p][...] = jnp.zeros_like(pad_refs[p])
      pad_refs[p][1:H + 1, off:off + in_w, :] = x_refs[p][...]

    # Build the (Ho, Wo, 9*Cin) im2col operand with 9 contiguous slab copies
    # (no per-tap reshape — only one collapse-reshape before the matmul).
    for t, (p, dy, cs) in enumerate(taps):
      col_ref[:, :, t * Cin:(t + 1) * Cin] = \
          pad_refs[p][dy:dy + Ho, cs:cs + Wo, :]

    # Single deep-K MXU matmul with f32 accumulation.
    col = col_ref[...].reshape(Ho * Wo, K)
    y = jnp.dot(col, w_ref[...], preferred_element_type=jnp.float32)
    y = y + shift_ref[...]                                     # folded BN shift
    y = y.reshape(Ho, Wo, Cout)
    if add_residual:
      y = y + res_ref[...].astype(jnp.float32)
    if apply_relu:
      y = jnp.maximum(y, 0.0)
    o_ref[...] = y.astype(o_ref.dtype)                         # bf16 store

  return kernel


def conv3x3_bn_act(x, w, scale, shift, *, stride=(1, 1), residual=None,
                   relu=True):
  """3x3 conv (pad=1) + per-channel affine + optional residual + optional ReLU.

  x: (N, H, W, Cin) (cast to bf16), w: (3, 3, Cin, Cout) f32,
  scale/shift: (Cout,) f32, residual: (N, Ho, Wo, Cout) or None.
  stride is (1, 1) or (1, 2).  Returns (N, Ho, Wo, Cout) bf16.
  """
  x = x.astype(jnp.bfloat16)
  N, H, W, Cin = x.shape
  Cout = w.shape[-1]
  sh, sw = stride
  assert sh == 1, "Feature_Extractor only uses H-stride 1"
  Ho = H
  Wo = (W + 2 - 3) // sw + 1

  # Fold BN scale into the weights; bf16 for the MXU, shift stays f32.
  w_eff = (w * scale.reshape(1, 1, 1, Cout)).reshape(9 * Cin, Cout)
  w_eff = w_eff.astype(jnp.bfloat16)
  shift2 = shift.reshape(1, Cout).astype(jnp.float32)

  if sw == 1:
    phase_arrays = [x]
    phase_dims = ((W, W + 2, 1),)
    taps = tuple((0, dy, dx) for dy in range(3) for dx in range(3))
  elif sw == 2:
    assert W % 2 == 0
    # Even/odd padded-column phases so every in-kernel tap slice is contiguous.
    ph_e = x[:, :, 1::2, :]   # occupies padded even columns 1..Wo (col 0 = pad)
    ph_o = x[:, :, 0::2, :]   # occupies padded odd columns 0..Wo-1
    phase_arrays = [ph_e, ph_o]
    phase_dims = ((W // 2, Wo + 1, 1), (W // 2, Wo, 0))
    # dx=0 -> even phase cols [0:Wo]; dx=1 -> odd phase cols [0:Wo];
    # dx=2 -> even phase cols [1:Wo+1]
    taps = tuple((0 if dx != 1 else 1, dy, 0 if dx < 2 else 1)
                 for dy in range(3) for dx in range(3))
  else:
    raise ValueError(f"unsupported stride {stride}")

  add_res = residual is not None

  args, in_specs = [], []
  for arr in phase_arrays:
    wi = arr.shape[2]
    args.append(arr)
    in_specs.append(pl.BlockSpec((None, H, wi, Cin), lambda n: (n, 0, 0, 0)))
  args += [w_eff, shift2]
  in_specs += [pl.BlockSpec((9 * Cin, Cout), lambda n: (0, 0)),
               pl.BlockSpec((1, Cout), lambda n: (0, 0))]
  if add_res:
    args.append(residual.astype(jnp.bfloat16))
    in_specs.append(pl.BlockSpec((None, Ho, Wo, Cout), lambda n: (n, 0, 0, 0)))

  scratch_shapes = [pltpu.VMEM((H + 2, pw, Cin), jnp.bfloat16)
                    for _, pw, _ in phase_dims]
  scratch_shapes.append(pltpu.VMEM((Ho, Wo, 9 * Cin), jnp.bfloat16))

  # Cost hint for XLA scheduling of surrounding ops.
  bytes_acc = sum(int(np.prod(a.shape)) * 2 for a in phase_arrays)
  bytes_acc += 9 * Cin * Cout * 2 + Cout * 4
  bytes_acc += N * Ho * Wo * Cout * 2                       # bf16 output
  if add_res:
    bytes_acc += N * Ho * Wo * Cout * 2
  flops = 2 * N * Ho * Wo * 9 * Cin * Cout + 3 * N * Ho * Wo * Cout
  cost = pl.CostEstimate(flops=int(flops), transcendentals=0,
                         bytes_accessed=int(bytes_acc))

  # VMEM budget: double-buffered blocks + weights + scratch, headroom included,
  # capped below v7x's 64 MiB physical VMEM.
  blk = sum(int(np.prod(a.shape[1:])) * 2 for a in phase_arrays)
  blk += Ho * Wo * Cout * 2 * (2 if add_res else 1)
  scr = sum((H + 2) * pw * Cin * 2 for _, pw, _ in phase_dims)
  scr += Ho * Wo * 9 * Cin * 2
  wgt = 9 * Cin * Cout * 2 + Cout * 4
  vmem_limit = int(min(max(4 * blk + 2 * wgt + 2 * scr + (8 << 20), 32 << 20),
                       56 << 20))

  out = pl.pallas_call(
      _make_conv_kernel(taps, phase_dims, relu, add_res, H, Ho, Wo, Cin, Cout),
      out_shape=jax.ShapeDtypeStruct((N, Ho, Wo, Cout), jnp.bfloat16),
      grid=(N,),
      in_specs=in_specs,
      out_specs=pl.BlockSpec((None, Ho, Wo, Cout), lambda n: (n, 0, 0, 0)),
      scratch_shapes=scratch_shapes,
      compiler_params=pltpu.CompilerParams(
          dimension_semantics=("parallel",),
          vmem_limit_bytes=vmem_limit),
      cost_estimate=cost,
  )(*args)
  return out


# ---------------------------------------------------------------------------
# Pure-JAX reference (lax.conv) with matching bf16-storage / f32-accumulate
# numerics, for correctness checking.  Same signature as the Pallas path.
# ---------------------------------------------------------------------------
def _ref_conv_bn_act(x, w, scale, shift, *, stride=(1, 1), residual=None,
                     relu=True):
  Cout = w.shape[-1]
  w_eff = (w * scale.reshape(1, 1, 1, Cout)).astype(jnp.bfloat16)
  y = lax.conv_general_dilated(
      x.astype(jnp.bfloat16), w_eff, stride, ((1, 1), (1, 1)),
      dimension_numbers=("NHWC", "HWIO", "NHWC"),
      preferred_element_type=jnp.float32)
  y = y + shift.reshape(1, 1, 1, -1).astype(jnp.float32)
  if residual is not None:
    y = y + residual.astype(jnp.float32)
  if relu:
    y = jnp.maximum(y, 0.0)
  return y.astype(jnp.bfloat16)


# ---------------------------------------------------------------------------
# Parameter init (deterministic, synthetic).
# ---------------------------------------------------------------------------
def _init_conv(key, cin, cout):
  fan_in = 9 * cin
  return (jax.random.normal(key, (3, 3, cin, cout), jnp.float32)
          * (2.0 / fan_in) ** 0.5)


def _init_bn(key, c):
  k1, k2, k3, k4 = jax.random.split(key, 4)
  return dict(
      gamma=1.0 + 0.1 * jax.random.normal(k1, (c,), jnp.float32),
      beta=0.1 * jax.random.normal(k2, (c,), jnp.float32),
      mean=0.1 * jax.random.normal(k3, (c,), jnp.float32),
      var=1.0 + 0.1 * jax.random.uniform(k4, (c,), jnp.float32),
  )


def _bn_fold(bn, eps=1e-5):
  scale = bn["gamma"] / jnp.sqrt(bn["var"] + eps)
  shift = bn["beta"] - bn["mean"] * scale
  return scale, shift


def init_basic_block(key, cin, cout):
  ks = jax.random.split(key, 6)
  p = dict(
      w1=_init_conv(ks[0], cin, cout), bn1=_init_bn(ks[1], cout),
      w2=_init_conv(ks[2], cout, cout), bn2=_init_bn(ks[3], cout),
  )
  if cin != cout:  # projection conv (3x3, stride 1, pad 1, with bias) per spec
    p["wp"] = _init_conv(ks[4], cin, cout)
    p["bp"] = 0.1 * jax.random.normal(ks[5], (cout,), jnp.float32)
  return p


def init_downsample(key, cin, cout):
  ks = jax.random.split(key, 6)
  return dict(
      w1=_init_conv(ks[0], cin, cout), bn1=_init_bn(ks[1], cout),
      w2=_init_conv(ks[2], cout, cout), bn2=_init_bn(ks[3], cout),
      wp=_init_conv(ks[4], cin, cout),
      bp=0.1 * jax.random.normal(ks[5], (cout,), jnp.float32),
  )


def init_feature_extractor(key, cin, cout, num_blocks=6,
                           down_sample_input=False):
  keys = jax.random.split(key, num_blocks + 1)
  params = {"down_sample_input": down_sample_input, "blocks": []}
  if down_sample_input:
    params["down_sample"] = init_downsample(keys[0], cin, cout)
  for i in range(num_blocks):
    bc_in = cout if (i > 0 or down_sample_input) else cin
    params["blocks"].append(init_basic_block(keys[i + 1], bc_in, cout))
  return params


# ---------------------------------------------------------------------------
# Forward passes (conv_fn is either the Pallas path or the lax reference).
# ---------------------------------------------------------------------------
def basic_block_fwd(x, p, conv_fn):
  s1, b1 = _bn_fold(p["bn1"])
  out = conv_fn(x, p["w1"], s1, b1, relu=True)
  residual = x
  if "wp" in p:
    cout = p["wp"].shape[-1]
    residual = conv_fn(x, p["wp"], jnp.ones((cout,), jnp.float32), p["bp"],
                       relu=False)
  s2, b2 = _bn_fold(p["bn2"])
  return conv_fn(out, p["w2"], s2, b2, residual=residual, relu=True)


def downsample_fwd(x, p, conv_fn):
  s1, b1 = _bn_fold(p["bn1"])
  out = conv_fn(x, p["w1"], s1, b1, stride=(1, 2), relu=True)
  cout = p["wp"].shape[-1]
  residual = conv_fn(x, p["wp"], jnp.ones((cout,), jnp.float32), p["bp"],
                     stride=(1, 2), relu=False)
  s2, b2 = _bn_fold(p["bn2"])
  return conv_fn(out, p["w2"], s2, b2, residual=residual, relu=True)


def feature_extractor_fwd(x_nchw, params, conv_fn=conv3x3_bn_act):
  # NCHW f32 (PyTorch convention) -> NHWC bf16 for the kernels, back at the end.
  x = jnp.transpose(x_nchw, (0, 2, 3, 1)).astype(jnp.bfloat16)
  if params["down_sample_input"]:
    x = downsample_fwd(x, params["down_sample"], conv_fn)
  for p in params["blocks"]:
    x = basic_block_fwd(x, p, conv_fn)
  return jnp.transpose(x, (0, 3, 1, 2)).astype(jnp.float32)


# ---------------------------------------------------------------------------
if __name__ == "__main__":
  key = jax.random.PRNGKey(0)
  kx, kp, kp2 = jax.random.split(key, 3)

  N, Cin, H, W = 2, 4, 16, 16
  Cout = 8
  num_blocks = 2  # small config for the demo (module default is 6)

  x = jax.random.normal(kx, (N, Cin, H, W), jnp.float32)

  # --- Test 1: plain residual blocks (down_sample_input=False) -------------
  params = init_feature_extractor(kp, Cin, Cout, num_blocks=num_blocks,
                                  down_sample_input=False)
  y = jax.block_until_ready(
      feature_extractor_fwd(x, params, conv_fn=conv3x3_bn_act))
  y_ref = jax.block_until_ready(
      feature_extractor_fwd(x, params, conv_fn=_ref_conv_bn_act))
  assert y.shape == (N, Cout, H, W), y.shape
  np.testing.assert_allclose(np.asarray(y, np.float32),
                             np.asarray(y_ref, np.float32),
                             rtol=3e-2, atol=3e-2)

  # --- Test 2: DownSample path (stride (1, 2)) ------------------------------
  params2 = init_feature_extractor(kp2, Cin, Cout, num_blocks=1,
                                   down_sample_input=True)
  y2 = jax.block_until_ready(
      feature_extractor_fwd(x, params2, conv_fn=conv3x3_bn_act))
  y2_ref = jax.block_until_ready(
      feature_extractor_fwd(x, params2, conv_fn=_ref_conv_bn_act))
  assert y2.shape == (N, Cout, H, W // 2), y2.shape
  np.testing.assert_allclose(np.asarray(y2, np.float32),
                             np.asarray(y2_ref, np.float32),
                             rtol=3e-2, atol=3e-2)

  print("KERNEL_OK")
</pallas_src>

<mosaic_0001>
module attributes {stable_mosaic.version = 11 : i64} {
  func.func @kernel(%arg0: i32, %arg1: memref<1x16x16x4xbf16, #tpu.memory_space<vmem>>, %arg2: memref<36x8xbf16, #tpu.memory_space<vmem>>, %arg3: memref<1x8xf32, #tpu.memory_space<vmem>>, %arg4: memref<1x16x16x8xbf16, #tpu.memory_space<vmem>>, %arg5: memref<18x18x4xbf16, #tpu.memory_space<vmem>>, %arg6: memref<16x16x36xbf16, #tpu.memory_space<vmem>>) attributes {dimension_semantics = [#tpu.dimension_semantics<parallel>], iteration_bounds = array<i64: 2>, scalar_prefetch = 0 : i64, scratch_operands = 2 : i64, tpu.core_type = #tpu.core_type<tc>, window_params = [{transform_indices = @transform_0, window_bounds = array<i64: 1, 16, 16, 4>}, {pipeline_mode = #tpu.pipeline_mode<synchronous>, transform_indices = @transform_1, window_bounds = array<i64: 36, 8>}, {pipeline_mode = #tpu.pipeline_mode<synchronous>, transform_indices = @transform_2, window_bounds = array<i64: 1, 8>}, {transform_indices = @transform_3, window_bounds = array<i64: 1, 16, 16, 8>}]} {
    %cst = arith.constant 0.000000e+00 : bf16
    %0 = vector.broadcast %cst : bf16 to vector<18x18x4xbf16>
    %c0 = arith.constant 0 : index
    %c0_0 = arith.constant 0 : index
    %c0_1 = arith.constant 0 : index
    %1 = vector.load %arg5[%c0, %c0_0, %c0_1] : memref<18x18x4xbf16, #tpu.memory_space<vmem>>, vector<18x18x4xbf16>
    tpu.vector_store %arg5[%c0, %c0_0, %c0_1], %0 {strides = array<i32>} : memref<18x18x4xbf16, #tpu.memory_space<vmem>>, vector<18x18x4xbf16>,
    %c0_2 = arith.constant 0 : index
    %c0_3 = arith.constant 0 : index
    %c0_4 = arith.constant 0 : index
    %c0_5 = arith.constant 0 : index
    %2 = vector.load %arg1[%c0_2, %c0_3, %c0_4, %c0_5] : memref<1x16x16x4xbf16, #tpu.memory_space<vmem>>, vector<1x16x16x4xbf16>
    %3 = vector.shape_cast %2 : vector<1x16x16x4xbf16> to vector<16x16x4xbf16>
    %c1 = arith.constant 1 : index
    %c1_6 = arith.constant 1 : index
    %c0_7 = arith.constant 0 : index
    %4 = vector.load %arg5[%c1, %c1_6, %c0_7] : memref<18x18x4xbf16, #tpu.memory_space<vmem>>, vector<16x16x4xbf16>
    tpu.vector_store %arg5[%c1, %c1_6, %c0_7], %3 {strides = array<i32>} : memref<18x18x4xbf16, #tpu.memory_space<vmem>>, vector<16x16x4xbf16>,
    %c0_8 = arith.constant 0 : index
    %c0_9 = arith.constant 0 : index
    %c0_10 = arith.constant 0 : index
    %5 = vector.load %arg5[%c0_8, %c0_9, %c0_10] : memref<18x18x4xbf16, #tpu.memory_space<vmem>>, vector<16x16x4xbf16>
    %c0_11 = arith.constant 0 : index
    %c0_12 = arith.constant 0 : index
    %c0_13 = arith.constant 0 : index
    %6 = vector.load %arg6[%c0_11, %c0_12, %c0_13] : memref<16x16x36xbf16, #tpu.memory_space<vmem>>, vector<16x16x4xbf16>
    tpu.vector_store %arg6[%c0_11, %c0_12, %c0_13], %5 {strides = array<i32>} : memref<16x16x36xbf16, #tpu.memory_space<vmem>>, vector<16x16x4xbf16>,
    %c0_14 = arith.constant 0 : index
    %c1_15 = arith.constant 1 : index
    %c0_16 = arith.constant 0 : index
    %7 = vector.load %arg5[%c0_14, %c1_15, %c0_16] : memref<18x18x4xbf16, #tpu.memory_space<vmem>>, vector<16x16x4xbf16>
    %c0_17 = arith.constant 0 : index
    %c0_18 = arith.constant 0 : index
    %c4 = arith.constant 4 : index
    %8 = vector.load %arg6[%c0_17, %c0_18, %c4] : memref<16x16x36xbf16, #tpu.memory_space<vmem>>, vector<16x16x4xbf16>
    tpu.vector_store %arg6[%c0_17, %c0_18, %c4], %7 {strides = array<i32>} : memref<16x16x36xbf16, #tpu.memory_space<vmem>>, vector<16x16x4xbf16>,
    %c0_19 = arith.constant 0 : index
    %c2 = arith.constant 2 : index
    %c0_20 = arith.constant 0 : index
    %9 = vector.load %arg5[%c0_19, %c2, %c0_20] : memref<18x18x4xbf16, #tpu.memory_space<vmem>>, vector<16x16x4xbf16>
    %c0_21 = arith.constant 0 : index
    %c0_22 = arith.constant 0 : index
    %c8 = arith.constant 8 : index
    %10 = vector.load %arg6[%c0_21, %c0_22, %c8] : memref<16x16x36xbf16, #tpu.memory_space<vmem>>, vector<16x16x4xbf16>
    tpu.vector_store %arg6[%c0_21, %c0_22, %c8], %9 {strides = array<i32>} : memref<16x16x36xbf16, #tpu.memory_space<vmem>>, vector<16x16x4xbf16>,
    %c1_23 = arith.constant 1 : index
    %c0_24 = arith.constant 0 : index
    %c0_25 = arith.constant 0 : index
    %11 = vector.load %arg5[%c1_23, %c0_24, %c0_25] : memref<18x18x4xbf16, #tpu.memory_space<vmem>>, vector<16x16x4xbf16>
    %c0_26 = arith.constant 0 : index
    %c0_27 = arith.constant 0 : index
    %c12 = arith.constant 12 : index
    %12 = vector.load %arg6[%c0_26, %c0_27, %c12] : memref<16x16x36xbf16, #tpu.memory_space<vmem>>, vector<16x16x4xbf16>
    tpu.vector_store %arg6[%c0_26, %c0_27, %c12], %11 {strides = array<i32>} : memref<16x16x36xbf16, #tpu.memory_space<vmem>>, vector<16x16x4xbf16>,
    %c1_28 = arith.constant 1 : index
    %c1_29 = arith.constant 1 : index
    %c0_30 = arith.constant 0 : index
    %13 = vector.load %arg5[%c1_28, %c1_29, %c0_30] : memref<18x18x4xbf16, #tpu.memory_space<vmem>>, vector<16x16x4xbf16>
    %c0_31 = arith.constant 0 : index
    %c0_32 = arith.constant 0 : index
    %c16 = arith.constant 16 : index
    %14 = vector.load %arg6[%c0_31, %c0_32, %c16] : memref<16x16x36xbf16, #tpu.memory_space<vmem>>, vector<16x16x4xbf16>
    tpu.vector_store %arg6[%c0_31, %c0_32, %c16], %13 {strides = array<i32>} : memref<16x16x36xbf16, #tpu.memory_space<vmem>>, vector<16x16x4xbf16>,
    %c1_33 = arith.constant 1 : index
    %c2_34 = arith.constant 2 : index
    %c0_35 = arith.constant 0 : index
    %15 = vector.load %arg5[%c1_33, %c2_34, %c0_35] : memref<18x18x4xbf16, #tpu.memory_space<vmem>>, vector<16x16x4xbf16>
    %c0_36 = arith.constant 0 : index
    %c0_37 = arith.constant 0 : index
    %c20 = arith.constant 20 : index
    %16 = vector.load %arg6[%c0_36, %c0_37, %c20] : memref<16x16x36xbf16, #tpu.memory_space<vmem>>, vector<16x16x4xbf16>
    tpu.vector_store %arg6[%c0_36, %c0_37, %c20], %15 {strides = array<i32>} : memref<16x16x36xbf16, #tpu.memory_space<vmem>>, vector<16x16x4xbf16>,
    %c2_38 = arith.constant 2 : index
    %c0_39 = arith.constant 0 : index
    %c0_40 = arith.constant 0 : index
    %17 = vector.load %arg5[%c2_38, %c0_39, %c0_40] : memref<18x18x4xbf16, #tpu.memory_space<vmem>>, vector<16x16x4xbf16>
    %c0_41 = arith.constant 0 : index
    %c0_42 = arith.constant 0 : index
    %c24 = arith.constant 24 : index
    %18 = vector.load %arg6[%c0_41, %c0_42, %c24] : memref<16x16x36xbf16, #tpu.memory_space<vmem>>, vector<16x16x4xbf16>
    tpu.vector_store %arg6[%c0_41, %c0_42, %c24], %17 {strides = array<i32>} : memref<16x16x36xbf16, #tpu.memory_space<vmem>>, vector<16x16x4xbf16>,
    %c2_43 = arith.constant 2 : index
    %c1_44 = arith.constant 1 : index
    %c0_45 = arith.constant 0 : index
    %19 = vector.load %arg5[%c2_43, %c1_44, %c0_45] : memref<18x18x4xbf16, #tpu.memory_space<vmem>>, vector<16x16x4xbf16>
    %c0_46 = arith.constant 0 : index
    %c0_47 = arith.constant 0 : index
    %c28 = arith.constant 28 : index
    %20 = vector.load %arg6[%c0_46, %c0_47, %c28] : memref<16x16x36xbf16, #tpu.memory_space<vmem>>, vector<16x16x4xbf16>
    tpu.vector_store %arg6[%c0_46, %c0_47, %c28], %19 {strides = array<i32>} : memref<16x16x36xbf16, #tpu.memory_space<vmem>>, vector<16x16x4xbf16>,
    %c2_48 = arith.constant 2 : index
    %c2_49 = arith.constant 2 : index
    %c0_50 = arith.constant 0 : index
    %21 = vector.load %arg5[%c2_48, %c2_49, %c0_50] : memref<18x18x4xbf16, #tpu.memory_space<vmem>>, vector<16x16x4xbf16>
    %c0_51 = arith.constant 0 : index
    %c0_52 = arith.constant 0 : index
    %c32 = arith.constant 32 : index
    %22 = vector.load %arg6[%c0_51, %c0_52, %c32] : memref<16x16x36xbf16, #tpu.memory_space<vmem>>, vector<16x16x4xbf16>
    tpu.vector_store %arg6[%c0_51, %c0_52, %c32], %21 {strides = array<i32>} : memref<16x16x36xbf16, #tpu.memory_space<vmem>>, vector<16x16x4xbf16>,
    %c0_53 = arith.constant 0 : index
    %c0_54 = arith.constant 0 : index
    %c0_55 = arith.constant 0 : index
    %23 = vector.load %arg6[%c0_53, %c0_54, %c0_55] : memref<16x16x36xbf16, #tpu.memory_space<vmem>>, vector<16x16x36xbf16>
    %24 = vector.shape_cast %23 : vector<16x16x36xbf16> to vector<256x36xbf16>
    %c0_56 = arith.constant 0 : index
    %c0_57 = arith.constant 0 : index
    %25 = vector.load %arg2[%c0_56, %c0_57] : memref<36x8xbf16, #tpu.memory_space<vmem>>, vector<36x8xbf16>
    %cst_58 = arith.constant dense<0.000000e+00> : vector<256x8xf32>
    %26 = tpu.matmul %24, %25, %cst_58 {dimension_numbers = #tpu.dot_dimension_numbers<[1], [0], [0], [1], [0, 0, 1, 1], [], []>} : vector<256x36xbf16>, vector<36x8xbf16>, vector<256x8xf32> -> vector<256x8xf32>
    %c0_59 = arith.constant 0 : index
    %c0_60 = arith.constant 0 : index
    %27 = vector.load %arg3[%c0_59, %c0_60] : memref<1x8xf32, #tpu.memory_space<vmem>>, vector<1x8xf32>
    %28 = vector.broadcast %27 : vector<1x8xf32> to vector<256x8xf32>
    %29 = arith.addf %26, %28 : vector<256x8xf32>
    %30 = vector.shape_cast %29 : vector<256x8xf32> to vector<16x16x8xf32>
    %cst_61 = arith.constant 0.000000e+00 : f32
    %31 = vector.broadcast %cst_61 : f32 to vector<16x16x8xf32>
    %32 = arith.maximumf %30, %31 : vector<16x16x8xf32>
    %33 = arith.truncf %32 : vector<16x16x8xf32> to vector<16x16x8xbf16>
    %c0_62 = arith.constant 0 : index
    %c0_63 = arith.constant 0 : index
    %c0_64 = arith.constant 0 : index
    %c0_65 = arith.constant 0 : index
    %34 = vector.load %arg4[%c0_62, %c0_63, %c0_64, %c0_65] : memref<1x16x16x8xbf16, #tpu.memory_space<vmem>>, vector<1x16x16x8xbf16>
    %35 = vector.shape_cast %34 : vector<1x16x16x8xbf16> to vector<16x16x8xbf16>
    %36 = vector.shape_cast %33 : vector<16x16x8xbf16> to vector<1x16x16x8xbf16>
    tpu.vector_store %arg4[%c0_62, %c0_63, %c0_64, %c0_65], %36 {strides = array<i32>} : memref<1x16x16x8xbf16, #tpu.memory_space<vmem>>, vector<1x16x16x8xbf16>,
    return
  }
  func.func @transform_0(%arg0: i32) -> (i32, i32, i32, i32) {
    %c0_i32 = arith.constant 0 : i32
    %c0_i32_0 = arith.constant 0 : i32
    %c0_i32_1 = arith.constant 0 : i32
    %c0_i32_2 = arith.constant 0 : i32
    return %arg0, %c0_i32, %c0_i32_0, %c0_i32_1 : i32, i32, i32, i32
  }
  func.func @transform_1(%arg0: i32) -> (i32, i32) {
    %c0_i32 = arith.constant 0 : i32
    %c0_i32_0 = arith.constant 0 : i32
    %c0_i32_1 = arith.constant 0 : i32
    return %c0_i32, %c0_i32_0 : i32, i32
  }
  func.func @transform_2(%arg0: i32) -> (i32, i32) {
    %c0_i32 = arith.constant 0 : i32
    %c0_i32_0 = arith.constant 0 : i32
    %c0_i32_1 = arith.constant 0 : i32
    return %c0_i32, %c0_i32_0 : i32, i32
  }
  func.func @transform_3(%arg0: i32) -> (i32, i32, i32, i32) {
    %c0_i32 = arith.constant 0 : i32
    %c0_i32_0 = arith.constant 0 : i32
    %c0_i32_1 = arith.constant 0 : i32
    %c0_i32_2 = arith.constant 0 : i32
    return %arg0, %c0_i32, %c0_i32_0, %c0_i32_1 : i32, i32, i32, i32
  }
}

</mosaic_0001>

<llo_original>
// kernel: tpu_custom_call.1
$region0: #{tpu_custom_call.1}
  #allocation0 [shape = 'u32[]', space=smem, size = 0x4, offset = 0x4, fixed_abs, tag = 'smem constant byte address 0x4 - core index']
  #allocation1 [shape = 'u32[72,128]{1,0:T(1,128)}', space=vmem, size = 0x9000, scoped, tag = 'internal scratch']
  #allocation2 [shape = 'bf16[18,18,4]{2,1,0:T(8,128)(2,1)}', space=vmem, size = 0x1b000, scoped, tag = 'scratch operand']
  #allocation3 [shape = 'bf16[16,16,36]{2,1,0:T(8,128)(2,1)}', space=vmem, size = 0x10000, scoped, tag = 'scratch operand']
  %s0 = inlined_call_operand.vmem [shape: bf16[2,16,16,4], index: 0, kind: input, shape index: {}]
  %s1 = inlined_call_operand.vmem [shape: bf16[36,8], index: 1, kind: input, shape index: {}]
  %s2 = inlined_call_operand.vmem [shape: f32[1,8], index: 2, kind: input, shape index: {}]
  %s3 = inlined_call_operand.vmem [shape: bf16[2,16,16,8], index: 3, kind: output, shape index: {}]
  %s4 = sld [smem:[#allocation0]]
  $region45: #{tpu_custom_call.1} parent=0
    _
  %s6 = ssub.s32 1, %s4
  %s7 = scalar_select 0, %s6, %s4
  loop: start=0, step=1, limit=4
  $region2: #{tpu_custom_call.1} parent=0 // loop_pre_header
    _
  $region3: #{tpu_custom_call.1} parent=0 // loop_header
    %s9 = sphi 0, %s13
    %p10 = scmp.ge.s32.totalorder %s9, 4
    %s19 = sphi 0, %s21
    %s22 = sphi 0, %s19
    %s23 = sphi 0, %s22
    %s39 = sphi 0, %s23
    %s43 = sphi 0, %s43
    %s45 = sphi 0, %s43
    %s46 = sphi 0, %s45
    %s60 = sphi 0, %s46
    %s64 = sphi 0, %s64
    %s66 = sphi 0, %s64
    %s67 = sphi 0, %s66
    %s81 = sphi 0, %s67
    %s87 = sphi 0, %s89
    %s90 = sphi 0, %s87
    %s91 = sphi 0, %s90
    %s107 = sphi 0, %s91
  $region4: #{tpu_custom_call.1} parent=0 // loop_header_branch
    %12 = sbr.rel (%p10) target = $region8
  $region5: #{tpu_custom_call.1} parent=0 // loop_body
    %s14 = ssub.s32 %s9, 1
    %s15 = ssub.s32 %s9, 2
    %s16 = sadd.s32 %s9, 1
    %s17 = ssub.s32 %s9, %s16
    %p18 = scmp.eq.s32.totalorder %s17, 0
    %s20 = sadd.s32 %s19, 1
    %s21 = scalar_select %p18, %s19, %s20
    %p24 = pneg %p18
    %p25 = scmp.eq.s32.totalorder %s9, 1
    %p26 = por %p24, %p25
    %p27 = scmp.ne.s32.totalorder %s19, %s22
    %p28 = scmp.eq.s32.totalorder %s9, 0
    %p29 = por %p27, %p28
    %p30 = scmp.ne.s32.totalorder %s19, %s22
    %p31 = scmp.eq.s32.totalorder %s14, 1
    %p32 = por %p30, %p31
    %p33 = scmp.ne.s32.totalorder %s22, %s23
    %p34 = scmp.eq.s32.totalorder %s14, 0
    %p35 = por %p33, %p34
    %p36 = scmp.ne.s32.totalorder %s22, %s23
    %p37 = scmp.eq.s32.totalorder %s15, 1
    %p38 = por %p36, %p37
    %p40 = scmp.ne.s32.totalorder %s23, %s39
    %p41 = scmp.eq.s32.totalorder %s15, 0
    %p42 = por %p40, %p41
    %s44 = sadd.s32 %s43, 1
    %p47 = scmp.eq.s32.totalorder %s9, 1
    %p48 = scmp.ne.s32.totalorder %s43, %s45
    %p49 = scmp.eq.s32.totalorder %s9, 0
    %p50 = por %p48, %p49
    %p51 = scmp.ne.s32.totalorder %s43, %s45
    %p52 = scmp.eq.s32.totalorder %s14, 1
    %p53 = por %p51, %p52
    %p54 = scmp.ne.s32.totalorder %s45, %s46
    %p55 = scmp.eq.s32.totalorder %s14, 0
    %p56 = por %p54, %p55
    %p57 = scmp.ne.s32.totalorder %s45, %s46
    %p58 = scmp.eq.s32.totalorder %s15, 1
    %p59 = por %p57, %p58
    %p61 = scmp.ne.s32.totalorder %s46, %s60
    %p62 = scmp.eq.s32.totalorder %s15, 0
    %p63 = por %p61, %p62
    %s65 = sadd.s32 %s64, 1
    %p68 = scmp.eq.s32.totalorder %s9, 1
    %p69 = scmp.ne.s32.totalorder %s64, %s66
    %p70 = scmp.eq.s32.totalorder %s9, 0
    %p71 = por %p69, %p70
    %p72 = scmp.ne.s32.totalorder %s64, %s66
    %p73 = scmp.eq.s32.totalorder %s14, 1
    %p74 = por %p72, %p73
    %p75 = scmp.ne.s32.totalorder %s66, %s67
    %p76 = scmp.eq.s32.totalorder %s14, 0
    %p77 = por %p75, %p76
    %p78 = scmp.ne.s32.totalorder %s66, %s67
    %p79 = scmp.eq.s32.totalorder %s15, 1
    %p80 = por %p78, %p79
    %p82 = scmp.ne.s32.totalorder %s67, %s81
    %p83 = scmp.eq.s32.totalorder %s15, 0
    %p84 = por %p82, %p83
    %s85 = ssub.s32 %s9, %s16
    %p86 = scmp.eq.s32.totalorder %s85, 0
    %s88 = sadd.s32 %s87, 1
    %s89 = scalar_select %p86, %s87, %s88
    %p92 = pneg %p86
    %p93 = scmp.eq.s32.totalorder %s9, 1
    %p94 = por %p92, %p93
    %p95 = scmp.ne.s32.totalorder %s87, %s90
    %p96 = scmp.eq.s32.totalorder %s9, 0
    %p97 = por %p95, %p96
    %p98 = scmp.ne.s32.totalorder %s87, %s90
    %p99 = scmp.eq.s32.totalorder %s14, 1
    %p100 = por %p98, %p99
    %p101 = scmp.ne.s32.totalorder %s90, %s91
    %p102 = scmp.eq.s32.totalorder %s14, 0
    %p103 = por %p101, %p102
    %p104 = scmp.ne.s32.totalorder %s90, %s91
    %p105 = scmp.eq.s32.totalorder %s15, 1
    %p106 = por %p104, %p105
    %p108 = scmp.ne.s32.totalorder %s91, %s107
    %p109 = scmp.eq.s32.totalorder %s15, 0
    %p110 = por %p108, %p109
    %p111 = scmp.le.s32.totalorder 1, %s9
    %p112 = scmp.lt.s32.totalorder %s9, 3
    %p113 = pnand %p111, %p112
    %p114 = pneg %p113
    // Predicated region
    $region9: #{tpu_custom_call.1} parent=5 // pred_check
      _
    $region10: #{tpu_custom_call.1} parent=5 // pred_check_branch
      %116 = sbr.rel (%p113) target = $region12
    $region11: #{tpu_custom_call.1} parent=5 // pred_region
      %s117 = ssub.s32 %s9, 1
      // Predicated region
      $region13: #{tpu_custom_call.1} parent=11 // pred_check
        %p118 = pneg %p56
      $region14: #{tpu_custom_call.1} parent=11 // pred_check_branch
        %120 = sbr.rel (%p118) target = $region16
      $region15: #{tpu_custom_call.1} parent=11 // pred_region
        _
      $region16: #{tpu_custom_call.1} parent=11 // pred_fallthru
        _
      // Predicated region
      $region17: #{tpu_custom_call.1} parent=11 // pred_check
        %p121 = pneg %p77
      $region18: #{tpu_custom_call.1} parent=11 // pred_check_branch
        %123 = sbr.rel (%p121) target = $region20
      $region19: #{tpu_custom_call.1} parent=11 // pred_region
        _
      $region20: #{tpu_custom_call.1} parent=11 // pred_fallthru
        _
    $region12: #{tpu_custom_call.1} parent=5 // pred_fallthru
      _
    %p124 = scmp.lt.s32.totalorder %s9, 2
    // Predicated region
    $region21: #{tpu_custom_call.1} parent=5 // pred_check
      %p125 = pneg %p124
    $region22: #{tpu_custom_call.1} parent=5 // pred_check_branch
      %127 = sbr.rel (%p125) target = $region24
    $region23: #{tpu_custom_call.1} parent=5 // pred_region
      // Predicated region
      $region25: #{tpu_custom_call.1} parent=23 // pred_check
        %p128 = pneg %p29
      $region26: #{tpu_custom_call.1} parent=23 // pred_check_branch
        %130 = sbr.rel (%p128) target = $region28
      $region27: #{tpu_custom_call.1} parent=23 // pred_region
        %p131 = scmp.lt.s32.totalorder %s9, 1
        %s132 = scalar_select %p131, %s9, 1
        %s133 = smul.addr %s132, 32
        %s134 = smul.addr %s133, 4
        %s135 = scalar_lea.vmem %s0, %s134
      $region28: #{tpu_custom_call.1} parent=23 // pred_fallthru
        _
    $region24: #{tpu_custom_call.1} parent=5 // pred_fallthru
      _
    %p136 = scmp.le.s32.totalorder 1, %s9
    %p137 = scmp.lt.s32.totalorder %s9, 3
    %p138 = pnand %p136, %p137
    %p139 = pneg %p138
    // Predicated region
    $region29: #{tpu_custom_call.1} parent=5 // pred_check
      _
    $region30: #{tpu_custom_call.1} parent=5 // pred_check_branch
      %141 = sbr.rel (%p138) target = $region32
    $region31: #{tpu_custom_call.1} parent=5 // pred_region
      %s142 = ssub.s32 %s9, 1
      %p143 = scmp.lt.s32.totalorder %s14, 1
      %s144 = scalar_select %p143, %s14, 1
      %s145 = smul.addr %s144, 32
      %s146 = smul.addr %s145, 4
      %s147 = scalar_lea.vmem %s0, %s146
      %p148 = pneg %p35
      %p149 = pneg %p32
      %p150 = pneg %p56
      %p151 = pneg %p53
      %p152 = pneg %p77
      %p153 = pneg %p74
      %p154 = pneg %p103
      %p155 = pneg %p100
      %p156 = scmp.lt.s32.totalorder %s14, 1
      %s157 = scalar_select %p156, %s14, 1
      %s158 = smul.addr %s157, 32
      %s159 = smul.addr %s158, 4
      %s160 = scalar_lea.vmem %s3, %s159
      %p161 = scmp.lt.s32.totalorder %s14, 1
      %s162 = scalar_select %p161, %s14, 1
      %s163 = smul.addr %s162, 32
      %s164 = smul.addr %s163, 4
      %s165 = scalar_lea.vmem %s0, %s164
      %p166 = scmp.lt.s32.totalorder %s14, 1
      %s167 = scalar_select %p166, %s14, 1
      %s168 = smul.addr %s167, 32
      %s169 = smul.addr %s168, 4
      %s170 = scalar_lea.vmem %s3, %s169
      %vm172 = vcmask 27648
      %173 = vst.msk [vmem:[#allocation2] sm:$0xf] %vm172, 0
      %174 = vst.msk [vmem:[#allocation2 + $0x4] sm:$0xf] %vm172, 0
      %vm175 = vcmask 24576
      %176 = vst.msk [vmem:[#allocation2 + $0x8] sm:$0x1] %vm175, 0
      %177 = vst.msk [vmem:[#allocation2 + $0xc] sm:$0xf] %vm172, 0
      %178 = vst.msk [vmem:[#allocation2 + $0x10] sm:$0xf] %vm172, 0
      %179 = vst.msk [vmem:[#allocation2 + $0x14] sm:$0x1] %vm175, 0
      %180 = vst.msk [vmem:[#allocation2 + $0x18] sm:$0xf] %vm172, 0
      %181 = vst.msk [vmem:[#allocation2 + $0x1c] sm:$0xf] %vm172, 0
      %182 = vst.msk [vmem:[#allocation2 + $0x20] sm:$0x1] %vm175, 0
      %183 = vst.msk [vmem:[#allocation2 + $0x24] sm:$0xf] %vm172, 0
      %184 = vst.msk [vmem:[#allocation2 + $0x28] sm:$0xf] %vm172, 0
      %185 = vst.msk [vmem:[#allocation2 + $0x2c] sm:$0x1] %vm175, 0
      %186 = vst.msk [vmem:[#allocation2 + $0x30] sm:$0xf] %vm172, 0
      %187 = vst.msk [vmem:[#allocation2 + $0x34] sm:$0xf] %vm172, 0
      %188 = vst.msk [vmem:[#allocation2 + $0x38] sm:$0x1] %vm175, 0
      %189 = vst.msk [vmem:[#allocation2 + $0x3c] sm:$0xf] %vm172, 0
      %190 = vst.msk [vmem:[#allocation2 + $0x40] sm:$0xf] %vm172, 0
      %191 = vst.msk [vmem:[#allocation2 + $0x44] sm:$0x1] %vm175, 0
      %192 = vst.msk [vmem:[#allocation2 + $0x48] sm:$0xf] %vm172, 0
      %193 = vst.msk [vmem:[#allocation2 + $0x4c] sm:$0xf] %vm172, 0
      %194 = vst.msk [vmem:[#allocation2 + $0x50] sm:$0x1] %vm175, 0
      %195 = vst.msk [vmem:[#allocation2 + $0x54] sm:$0xf] %vm172, 0
      %196 = vst.msk [vmem:[#allocation2 + $0x58] sm:$0xf] %vm172, 0
      %197 = vst.msk [vmem:[#allocation2 + $0x5c] sm:$0x1] %vm175, 0
      %198 = vst.msk [vmem:[#allocation2 + $0x60] sm:$0xf] %vm172, 0
      %199 = vst.msk [vmem:[#allocation2 + $0x64] sm:$0xf] %vm172, 0
      %200 = vst.msk [vmem:[#allocation2 + $0x68] sm:$0x1] %vm175, 0
      %201 = vst.msk [vmem:[#allocation2 + $0x6c] sm:$0xf] %vm172, 0
      %202 = vst.msk [vmem:[#allocation2 + $0x70] sm:$0xf] %vm172, 0
      %203 = vst.msk [vmem:[#allocation2 + $0x74] sm:$0x1] %vm175, 0
      %204 = vst.msk [vmem:[#allocation2 + $0x78] sm:$0xf] %vm172, 0
      %205 = vst.msk [vmem:[#allocation2 + $0x7c] sm:$0xf] %vm172, 0
      %206 = vst.msk [vmem:[#allocation2 + $0x80] sm:$0x1] %vm175, 0
      %207 = vst.msk [vmem:[#allocation2 + $0x84] sm:$0xf] %vm172, 0
      %208 = vst.msk [vmem:[#allocation2 + $0x88] sm:$0xf] %vm172, 0
      %209 = vst.msk [vmem:[#allocation2 + $0x8c] sm:$0x1] %vm175, 0
      %210 = vst.msk [vmem:[#allocation2 + $0x90] sm:$0xf] %vm172, 0
      %211 = vst.msk [vmem:[#allocation2 + $0x94] sm:$0xf] %vm172, 0
      %212 = vst.msk [vmem:[#allocation2 + $0x98] sm:$0x1] %vm175, 0
      %213 = vst.msk [vmem:[#allocation2 + $0x9c] sm:$0xf] %vm172, 0
      %214 = vst.msk [vmem:[#allocation2 + $0xa0] sm:$0xf] %vm172, 0
      %215 = vst.msk [vmem:[#allocation2 + $0xa4] sm:$0x1] %vm175, 0
      %216 = vst.msk [vmem:[#allocation2 + $0xa8] sm:$0xf] %vm172, 0
      %217 = vst.msk [vmem:[#allocation2 + $0xac] sm:$0xf] %vm172, 0
      %218 = vst.msk [vmem:[#allocation2 + $0xb0] sm:$0x1] %vm175, 0
      %219 = vst.msk [vmem:[#allocation2 + $0xb4] sm:$0xf] %vm172, 0
      %220 = vst.msk [vmem:[#allocation2 + $0xb8] sm:$0xf] %vm172, 0
      %221 = vst.msk [vmem:[#allocation2 + $0xbc] sm:$0x1] %vm175, 0
      %222 = vst.msk [vmem:[#allocation2 + $0xc0] sm:$0xf] %vm172, 0
      %223 = vst.msk [vmem:[#allocation2 + $0xc4] sm:$0xf] %vm172, 0
      %224 = vst.msk [vmem:[#allocation2 + $0xc8] sm:$0x1] %vm175, 0
      %225 = vst.msk [vmem:[#allocation2 + $0xcc] sm:$0xf] %vm172, 0
      %226 = vst.msk [vmem:[#allocation2 + $0xd0] sm:$0xf] %vm172, 0
      %227 = vst.msk [vmem:[#allocation2 + $0xd4] sm:$0x1] %vm175, 0
      %v228 = vld [vmem:[%s165] sm:$0xf]
      %v229 = vld [vmem:[%s165 + $0x4] sm:$0xf]
      %v230 = vld [vmem:[%s165 + $0x8] sm:$0xf]
      %v231 = vld [vmem:[%s165 + $0xc] sm:$0xf]
      %v232 = vld [vmem:[%s165 + $0x10] sm:$0xf]
      %v233 = vld [vmem:[%s165 + $0x14] sm:$0xf]
      %v234 = vld [vmem:[%s165 + $0x18] sm:$0xf]
      %v235 = vld [vmem:[%s165 + $0x1c] sm:$0xf]
      %v236 = vld [vmem:[%s165 + $0x20] sm:$0xf]
      %v237 = vld [vmem:[%s165 + $0x24] sm:$0xf]
      %v238 = vld [vmem:[%s165 + $0x28] sm:$0xf]
      %v239 = vld [vmem:[%s165 + $0x2c] sm:$0xf]
      %v240 = vld [vmem:[%s165 + $0x30] sm:$0xf]
      %v241 = vld [vmem:[%s165 + $0x34] sm:$0xf]
      %v242 = vld [vmem:[%s165 + $0x38] sm:$0xf]
      %v243 = vld [vmem:[%s165 + $0x3c] sm:$0xf]
      %v244 = vld [vmem:[%s165 + $0x40] sm:$0xf]
      %v245 = vld [vmem:[%s165 + $0x44] sm:$0xf]
      %v246 = vld [vmem:[%s165 + $0x48] sm:$0xf]
      %v247 = vld [vmem:[%s165 + $0x4c] sm:$0xf]
      %v248 = vld [vmem:[%s165 + $0x50] sm:$0xf]
      %v249 = vld [vmem:[%s165 + $0x54] sm:$0xf]
      %v250 = vld [vmem:[%s165 + $0x58] sm:$0xf]
      %v251 = vld [vmem:[%s165 + $0x5c] sm:$0xf]
      %v252 = vld [vmem:[%s165 + $0x60] sm:$0xf]
      %v253 = vld [vmem:[%s165 + $0x64] sm:$0xf]
      %v254 = vld [vmem:[%s165 + $0x68] sm:$0xf]
      %v255 = vld [vmem:[%s165 + $0x6c] sm:$0xf]
      %v256 = vld [vmem:[%s165 + $0x70] sm:$0xf]
      %v257 = vld [vmem:[%s165 + $0x74] sm:$0xf]
      %v258 = vld [vmem:[%s165 + $0x78] sm:$0xf]
      %v259 = vld [vmem:[%s165 + $0x7c] sm:$0xf]
      %vm260 = vsmask.f32 256
      %vm261 = vsmask.f32 4368
      %vm262 = vmor %vm260, %vm261
      %v264 = vshrl.u32 %v228, 16
      %v266 = vrot.slane %v264, 7
      %v267 = vshll.u32 %v228, 16
      %v269 = vor.u32 %v266, %v267
      %v270 = vrot.slane %v266, 4
      %v272 = vshrl.u32 %v229, 16
      %v274 = vrot.slane %v272, 7
      %v275 = vshll.u32 %v229, 16
      %v277 = vor.u32 %v274, %v275
      %v278 = vsel %vm262, %v270, %v277
      %v279 = vrot.slane %v274, 4
      %v281 = vshrl.u32 %v230, 16
      %v283 = vrot.slane %v281, 7
      %v284 = vshll.u32 %v230, 16
      %v286 = vor.u32 %v283, %v284
      %v287 = vrot.slane %v283, 4
      %v289 = vshrl.u32 %v231, 16
      %v291 = vrot.slane %v289, 7
      %v292 = vshll.u32 %v231, 16
      %v294 = vor.u32 %v291, %v292
      %v295 = vsel %vm262, %v287, %v294
      %v296 = vrot.slane %v291, 4
      %v298 = vshrl.u32 %v232, 16
      %v300 = vrot.slane %v298, 7
      %v301 = vshll.u32 %v232, 16
      %v303 = vor.u32 %v300, %v301
      %v304 = vrot.slane %v300, 4
      %v306 = vshrl.u32 %v233, 16
      %v308 = vrot.slane %v306, 7
      %v309 = vshll.u32 %v233, 16
      %v311 = vor.u32 %v308, %v309
      %v312 = vsel %vm262, %v304, %v311
      %v313 = vrot.slane %v308, 4
      %v315 = vshrl.u32 %v234, 16
      %v317 = vrot.slane %v315, 7
      %v318 = vshll.u32 %v234, 16
      %v320 = vor.u32 %v317, %v318
      %v321 = vrot.slane %v317, 4
      %v323 = vshrl.u32 %v235, 16
      %v325 = vrot.slane %v323, 7
      %v326 = vshll.u32 %v235, 16
      %v328 = vor.u32 %v325, %v326
      %v329 = vsel %vm262, %v321, %v328
      %v330 = vrot.slane %v325, 4
      %v332 = vshrl.u32 %v236, 16
      %v334 = vrot.slane %v332, 7
      %v335 = vshll.u32 %v236, 16
      %v337 = vor.u32 %v334, %v335
      %v338 = vrot.slane %v334, 4
      %v340 = vshrl.u32 %v237, 16
      %v342 = vrot.slane %v340, 7
      %v343 = vshll.u32 %v237, 16
      %v345 = vor.u32 %v342, %v343
      %v346 = vsel %vm262, %v338, %v345
      %v347 = vrot.slane %v342, 4
      %v349 = vshrl.u32 %v238, 16
      %v351 = vrot.slane %v349, 7
      %v352 = vshll.u32 %v238, 16
      %v354 = vor.u32 %v351, %v352
      %v355 = vrot.slane %v351, 4
      %v357 = vshrl.u32 %v239, 16
      %v359 = vrot.slane %v357, 7
      %v360 = vshll.u32 %v239, 16
      %v362 = vor.u32 %v359, %v360
      %v363 = vsel %vm262, %v355, %v362
      %v364 = vrot.slane %v359, 4
      %v366 = vshrl.u32 %v240, 16
      %v368 = vrot.slane %v366, 7
      %v369 = vshll.u32 %v240, 16
      %v371 = vor.u32 %v368, %v369
      %v372 = vrot.slane %v368, 4
      %v374 = vshrl.u32 %v241, 16
      %v376 = vrot.slane %v374, 7
      %v377 = vshll.u32 %v241, 16
      %v379 = vor.u32 %v376, %v377
      %v380 = vsel %vm262, %v372, %v379
      %v381 = vrot.slane %v376, 4
      %v383 = vshrl.u32 %v242, 16
      %v385 = vrot.slane %v383, 7
      %v386 = vshll.u32 %v242, 16
      %v388 = vor.u32 %v385, %v386
      %v389 = vrot.slane %v385, 4
      %v391 = vshrl.u32 %v243, 16
      %v393 = vrot.slane %v391, 7
      %v394 = vshll.u32 %v243, 16
      %v396 = vor.u32 %v393, %v394
      %v397 = vsel %vm262, %v389, %v396
      %v398 = vrot.slane %v393, 4
      %v400 = vshrl.u32 %v244, 16
      %v402 = vrot.slane %v400, 7
      %v403 = vshll.u32 %v244, 16
      %v405 = vor.u32 %v402, %v403
      %v406 = vrot.slane %v402, 4
      %v408 = vshrl.u32 %v245, 16
      %v410 = vrot.slane %v408, 7
      %v411 = vshll.u32 %v245, 16
      %v413 = vor.u32 %v410, %v411
      %v414 = vsel %vm262, %v406, %v413
      %v415 = vrot.slane %v410, 4
      %v417 = vshrl.u32 %v246, 16
      %v419 = vrot.slane %v417, 7
      %v420 = vshll.u32 %v246, 16
      %v422 = vor.u32 %v419, %v420
      %v423 = vrot.slane %v419, 4
      %v425 = vshrl.u32 %v247, 16
      %v427 = vrot.slane %v425, 7
      %v428 = vshll.u32 %v247, 16
      %v430 = vor.u32 %v427, %v428
      %v431 = vsel %vm262, %v423, %v430
      %v432 = vrot.slane %v427, 4
      %v434 = vshrl.u32 %v248, 16
      %v436 = vrot.slane %v434, 7
      %v437 = vshll.u32 %v248, 16
      %v439 = vor.u32 %v436, %v437
      %v440 = vrot.slane %v436, 4
      %v442 = vshrl.u32 %v249, 16
      %v444 = vrot.slane %v442, 7
      %v445 = vshll.u32 %v249, 16
      %v447 = vor.u32 %v444, %v445
      %v448 = vsel %vm262, %v440, %v447
      %v449 = vrot.slane %v444, 4
      %v451 = vshrl.u32 %v250, 16
      %v453 = vrot.slane %v451, 7
      %v454 = vshll.u32 %v250, 16
      %v456 = vor.u32 %v453, %v454
      %v457 = vrot.slane %v453, 4
      %v459 = vshrl.u32 %v251, 16
      %v461 = vrot.slane %v459, 7
      %v462 = vshll.u32 %v251, 16
      %v464 = vor.u32 %v461, %v462
      %v465 = vsel %vm262, %v457, %v464
      %v466 = vrot.slane %v461, 4
      %v468 = vshrl.u32 %v252, 16
      %v470 = vrot.slane %v468, 7
      %v471 = vshll.u32 %v252, 16
      %v473 = vor.u32 %v470, %v471
      %v474 = vrot.slane %v470, 4
      %v476 = vshrl.u32 %v253, 16
      %v478 = vrot.slane %v476, 7
      %v479 = vshll.u32 %v253, 16
      %v481 = vor.u32 %v478, %v479
      %v482 = vsel %vm262, %v474, %v481
      %v483 = vrot.slane %v478, 4
      %v485 = vshrl.u32 %v254, 16
      %v487 = vrot.slane %v485, 7
      %v488 = vshll.u32 %v254, 16
      %v490 = vor.u32 %v487, %v488
      %v491 = vrot.slane %v487, 4
      %v493 = vshrl.u32 %v255, 16
      %v495 = vrot.slane %v493, 7
      %v496 = vshll.u32 %v255, 16
      %v498 = vor.u32 %v495, %v496
      %v499 = vsel %vm262, %v491, %v498
      %v500 = vrot.slane %v495, 4
      %v502 = vshrl.u32 %v256, 16
      %v504 = vrot.slane %v502, 7
      %v505 = vshll.u32 %v256, 16
      %v507 = vor.u32 %v504, %v505
      %v508 = vrot.slane %v504, 4
      %v510 = vshrl.u32 %v257, 16
      %v512 = vrot.slane %v510, 7
      %v513 = vshll.u32 %v257, 16
      %v515 = vor.u32 %v512, %v513
      %v516 = vsel %vm262, %v508, %v515
      %v517 = vrot.slane %v512, 4
      %v519 = vshrl.u32 %v258, 16
      %v521 = vrot.slane %v519, 7
      %v522 = vshll.u32 %v258, 16
      %v524 = vor.u32 %v521, %v522
      %v525 = vrot.slane %v521, 4
      %v527 = vshrl.u32 %v259, 16
      %v529 = vrot.slane %v527, 7
      %v530 = vshll.u32 %v259, 16
      %v532 = vor.u32 %v529, %v530
      %v533 = vsel %vm262, %v525, %v532
      %v534 = vrot.slane %v529, 4
      %s583 = scalar_lea.vmem [#allocation2], 12
      %vm584 = vcmask 27648
      %vm585 = vsmask.f32 7938
      %vm586 = vmand %vm584, %vm585
      %v587 = vld [vmem:[%s583] sm:$0xf]
      %v588 = vsel %vm586, %v269, %v587
      %589 = vst [vmem:[%s583] sm:$0xf] %v588
      %590 = vst.msk [vmem:[%s583 + $0x4] sm:$0xf] %vm172, %v278
      %vm591 = vcmask 24576
      %vm592 = vmand %vm591, %vm260
      %v593 = vld [vmem:[%s583 + $0x8] sm:$0x1]
      %v594 = vsel %vm592, %v279, %v593
      %595 = vst [vmem:[%s583 + $0x8] sm:$0x1] %v594
      %v596 = vld [vmem:[%s583 + $0xc] sm:$0xf]
      %v597 = vsel %vm586, %v286, %v596
      %598 = vst [vmem:[%s583 + $0xc] sm:$0xf] %v597
      %599 = vst.msk [vmem:[%s583 + $0x10] sm:$0xf] %vm172, %v295
      %v600 = vld [vmem:[%s583 + $0x14] sm:$0x1]
      %v601 = vsel %vm592, %v296, %v600
      %602 = vst [vmem:[%s583 + $0x14] sm:$0x1] %v601
      %v603 = vld [vmem:[%s583 + $0x18] sm:$0xf]
      %v604 = vsel %vm586, %v303, %v603
      %605 = vst [vmem:[%s583 + $0x18] sm:$0xf] %v604
      %606 = vst.msk [vmem:[%s583 + $0x1c] sm:$0xf] %vm172, %v312
      %v607 = vld [vmem:[%s583 + $0x20] sm:$0x1]
      %v608 = vsel %vm592, %v313, %v607
      %609 = vst [vmem:[%s583 + $0x20] sm:$0x1] %v608
      %v610 = vld [vmem:[%s583 + $0x24] sm:$0xf]
      %v611 = vsel %vm586, %v320, %v610
      %612 = vst [vmem:[%s583 + $0x24] sm:$0xf] %v611
      %613 = vst.msk [vmem:[%s583 + $0x28] sm:$0xf] %vm172, %v329
      %v614 = vld [vmem:[%s583 + $0x2c] sm:$0x1]
      %v615 = vsel %vm592, %v330, %v614
      %616 = vst [vmem:[%s583 + $0x2c] sm:$0x1] %v615
      %v617 = vld [vmem:[%s583 + $0x30] sm:$0xf]
      %v618 = vsel %vm586, %v337, %v617
      %619 = vst [vmem:[%s583 + $0x30] sm:$0xf] %v618
      %620 = vst.msk [vmem:[%s583 + $0x34] sm:$0xf] %vm172, %v346
      %v621 = vld [vmem:[%s583 + $0x38] sm:$0x1]
      %v622 = vsel %vm592, %v347, %v621
      %623 = vst [vmem:[%s583 + $0x38] sm:$0x1] %v622
      %v624 = vld [vmem:[%s583 + $0x3c] sm:$0xf]
      %v625 = vsel %vm586, %v354, %v624
      %626 = vst [vmem:[%s583 + $0x3c] sm:$0xf] %v625
      %627 = vst.msk [vmem:[%s583 + $0x40] sm:$0xf] %vm172, %v363
      %v628 = vld [vmem:[%s583 + $0x44] sm:$0x1]
      %v629 = vsel %vm592, %v364, %v628
      %630 = vst [vmem:[%s583 + $0x44] sm:$0x1] %v629
      %v631 = vld [vmem:[%s583 + $0x48] sm:$0xf]
      %v632 = vsel %vm586, %v371, %v631
      %633 = vst [vmem:[%s583 + $0x48] sm:$0xf] %v632
      %634 = vst.msk [vmem:[%s583 + $0x4c] sm:$0xf] %vm172, %v380
      %v635 = vld [vmem:[%s583 + $0x50] sm:$0x1]
      %v636 = vsel %vm592, %v381, %v635
      %637 = vst [vmem:[%s583 + $0x50] sm:$0x1] %v636
      %v638 = vld [vmem:[%s583 + $0x54] sm:$0xf]
      %v639 = vsel %vm586, %v388, %v638
      %640 = vst [vmem:[%s583 + $0x54] sm:$0xf] %v639
      %641 = vst.msk [vmem:[%s583 + $0x58] sm:$0xf] %vm172, %v397
      %v642 = vld [vmem:[%s583 + $0x5c] sm:$0x1]
      %v643 = vsel %vm592, %v398, %v642
      %644 = vst [vmem:[%s583 + $0x5c] sm:$0x1] %v643
      %v645 = vld [vmem:[%s583 + $0x60] sm:$0xf]
      %v646 = vsel %vm586, %v405, %v645
      %647 = vst [vmem:[%s583 + $0x60] sm:$0xf] %v646
      %648 = vst.msk [vmem:[%s583 + $0x64] sm:$0xf] %vm172, %v414
      %v649 = vld [vmem:[%s583 + $0x68] sm:$0x1]
      %v650 = vsel %vm592, %v415, %v649
      %651 = vst [vmem:[%s583 + $0x68] sm:$0x1] %v650
      %v652 = vld [vmem:[%s583 + $0x6c] sm:$0xf]
      %v653 = vsel %vm586, %v422, %v652
      %654 = vst [vmem:[%s583 + $0x6c] sm:$0xf] %v653
      %655 = vst.msk [vmem:[%s583 + $0x70] sm:$0xf] %vm172, %v431
      %v656 = vld [vmem:[%s583 + $0x74] sm:$0x1]
      %v657 = vsel %vm592, %v432, %v656
      %658 = vst [vmem:[%s583 + $0x74] sm:$0x1] %v657
      %v659 = vld [vmem:[%s583 + $0x78] sm:$0xf]
      %v660 = vsel %vm586, %v439, %v659
      %661 = vst [vmem:[%s583 + $0x78] sm:$0xf] %v660
      %662 = vst.msk [vmem:[%s583 + $0x7c] sm:$0xf] %vm172, %v448
      %v663 = vld [vmem:[%s583 + $0x80] sm:$0x1]
      %v664 = vsel %vm592, %v449, %v663
      %665 = vst [vmem:[%s583 + $0x80] sm:$0x1] %v664
      %v666 = vld [vmem:[%s583 + $0x84] sm:$0xf]
      %v667 = vsel %vm586, %v456, %v666
      %668 = vst [vmem:[%s583 + $0x84] sm:$0xf] %v667
      %669 = vst.msk [vmem:[%s583 + $0x88] sm:$0xf] %vm172, %v465
      %v670 = vld [vmem:[%s583 + $0x8c] sm:$0x1]
      %v671 = vsel %vm592, %v466, %v670
      %672 = vst [vmem:[%s583 + $0x8c] sm:$0x1] %v671
      %v673 = vld [vmem:[%s583 + $0x90] sm:$0xf]
      %v674 = vsel %vm586, %v473, %v673
      %675 = vst [vmem:[%s583 + $0x90] sm:$0xf] %v674
      %676 = vst.msk [vmem:[%s583 + $0x94] sm:$0xf] %vm172, %v482
      %v677 = vld [vmem:[%s583 + $0x98] sm:$0x1]
      %v678 = vsel %vm592, %v483, %v677
      %679 = vst [vmem:[%s583 + $0x98] sm:$0x1] %v678
      %v680 = vld [vmem:[%s583 + $0x9c] sm:$0xf]
      %v681 = vsel %vm586, %v490, %v680
      %682 = vst [vmem:[%s583 + $0x9c] sm:$0xf] %v681
      %683 = vst.msk [vmem:[%s583 + $0xa0] sm:$0xf] %vm172, %v499
      %v684 = vld [vmem:[%s583 + $0xa4] sm:$0x1]
      %v685 = vsel %vm592, %v500, %v684
      %686 = vst [vmem:[%s583 + $0xa4] sm:$0x1] %v685
      %v687 = vld [vmem:[%s583 + $0xa8] sm:$0xf]
      %v688 = vsel %vm586, %v507, %v687
      %689 = vst [vmem:[%s583 + $0xa8] sm:$0xf] %v688
      %690 = vst.msk [vmem:[%s583 + $0xac] sm:$0xf] %vm172, %v516
      %v691 = vld [vmem:[%s583 + $0xb0] sm:$0x1]
      %v692 = vsel %vm592, %v517, %v691
      %693 = vst [vmem:[%s583 + $0xb0] sm:$0x1] %v692
      %v694 = vld [vmem:[%s583 + $0xb4] sm:$0xf]
      %v695 = vsel %vm586, %v524, %v694
      %696 = vst [vmem:[%s583 + $0xb4] sm:$0xf] %v695
      %697 = vst.msk [vmem:[%s583 + $0xb8] sm:$0xf] %vm172, %v533
      %v698 = vld [vmem:[%s583 + $0xbc] sm:$0x1]
      %v699 = vsel %vm592, %v534, %v698
      %700 = vst [vmem:[%s583 + $0xbc] sm:$0x1] %v699
      %v701 = vld [vmem:[#allocation2] sm:$0xf]
      %v702 = vld [vmem:[#allocation2 + $0x4] sm:$0xf]
      %v703 = vld [vmem:[#allocation2 + $0xc] sm:$0xf]
      %v704 = vld [vmem:[#allocation2 + $0x10] sm:$0xf]
      %v705 = vld [vmem:[#allocation2 + $0x18] sm:$0xf]
      %v706 = vld [vmem:[#allocation2 + $0x1c] sm:$0xf]
      %v707 = vld [vmem:[#allocation2 + $0x24] sm:$0xf]
      %v708 = vld [vmem:[#allocation2 + $0x28] sm:$0xf]
      %v709 = vld [vmem:[#allocation2 + $0x30] sm:$0xf]
      %v710 = vld [vmem:[#allocation2 + $0x34] sm:$0xf]
      %v711 = vld [vmem:[#allocation2 + $0x3c] sm:$0xf]
      %v712 = vld [vmem:[#allocation2 + $0x40] sm:$0xf]
      %v713 = vld [vmem:[#allocation2 + $0x48] sm:$0xf]
      %v714 = vld [vmem:[#allocation2 + $0x4c] sm:$0xf]
      %v715 = vld [vmem:[#allocation2 + $0x54] sm:$0xf]
      %v716 = vld [vmem:[#allocation2 + $0x58] sm:$0xf]
      %v717 = vld [vmem:[#allocation2 + $0x60] sm:$0xf]
      %v718 = vld [vmem:[#allocation2 + $0x64] sm:$0xf]
      %v719 = vld [vmem:[#allocation2 + $0x6c] sm:$0xf]
      %v720 = vld [vmem:[#allocation2 + $0x70] sm:$0xf]
      %v721 = vld [vmem:[#allocation2 + $0x78] sm:$0xf]
      %v722 = vld [vmem:[#allocation2 + $0x7c] sm:$0xf]
      %v723 = vld [vmem:[#allocation2 + $0x84] sm:$0xf]
      %v724 = vld [vmem:[#allocation2 + $0x88] sm:$0xf]
      %v725 = vld [vmem:[#allocation2 + $0x90] sm:$0xf]
      %v726 = vld [vmem:[#allocation2 + $0x94] sm:$0xf]
      %v727 = vld [vmem:[#allocation2 + $0x9c] sm:$0xf]
      %v728 = vld [vmem:[#allocation2 + $0xa0] sm:$0xf]
      %v729 = vld [vmem:[#allocation2 + $0xa8] sm:$0xf]
      %v730 = vld [vmem:[#allocation2 + $0xac] sm:$0xf]
      %v731 = vld [vmem:[#allocation2 + $0xb4] sm:$0xf]
      %v732 = vld [vmem:[#allocation2 + $0xb8] sm:$0xf]
      %733 = vst.msk [vmem:[#allocation3] sm:$0xf] %vm172, %v701
      %734 = vst.msk [vmem:[#allocation3 + $0x4] sm:$0xf] %vm172, %v702
      %735 = vst.msk [vmem:[#allocation3 + $0x8] sm:$0xf] %vm172, %v703
      %736 = vst.msk [vmem:[#allocation3 + $0xc] sm:$0xf] %vm172, %v704
      %737 = vst.msk [vmem:[#allocation3 + $0x10] sm:$0xf] %vm172, %v705
      %738 = vst.msk [vmem:[#allocation3 + $0x14] sm:$0xf] %vm172, %v706
      %739 = vst.msk [vmem:[#allocation3 + $0x18] sm:$0xf] %vm172, %v707
      %740 = vst.msk [vmem:[#allocation3 + $0x1c] sm:$0xf] %vm172, %v708
      %741 = vst.msk [vmem:[#allocation3 + $0x20] sm:$0xf] %vm172, %v709
      %742 = vst.msk [vmem:[#allocation3 + $0x24] sm:$0xf] %vm172, %v710
      %743 = vst.msk [vmem:[#allocation3 + $0x28] sm:$0xf] %vm172, %v711
      %744 = vst.msk [vmem:[#allocation3 + $0x2c] sm:$0xf] %vm172, %v712
      %745 = vst.msk [vmem:[#allocation3 + $0x30] sm:$0xf] %vm172, %v713
      %746 = vst.msk [vmem:[#allocation3 + $0x34] sm:$0xf] %vm172, %v714
      %747 = vst.msk [vmem:[#allocation3 + $0x38] sm:$0xf] %vm172, %v715
      %748 = vst.msk [vmem:[#allocation3 + $0x3c] sm:$0xf] %vm172, %v716
      %749 = vst.msk [vmem:[#allocation3 + $0x40] sm:$0xf] %vm172, %v717
      %750 = vst.msk [vmem:[#allocation3 + $0x44] sm:$0xf] %vm172, %v718
      %751 = vst.msk [vmem:[#allocation3 + $0x48] sm:$0xf] %vm172, %v719
      %752 = vst.msk [vmem:[#allocation3 + $0x4c] sm:$0xf] %vm172, %v720
      %753 = vst.msk [vmem:[#allocation3 + $0x50] sm:$0xf] %vm172, %v721
      %754 = vst.msk [vmem:[#allocation3 + $0x54] sm:$0xf] %vm172, %v722
      %755 = vst.msk [vmem:[#allocation3 + $0x58] sm:$0xf] %vm172, %v723
      %756 = vst.msk [vmem:[#allocation3 + $0x5c] sm:$0xf] %vm172, %v724
      %757 = vst.msk [vmem:[#allocation3 + $0x60] sm:$0xf] %vm172, %v725
      %758 = vst.msk [vmem:[#allocation3 + $0x64] sm:$0xf] %vm172, %v726
      %759 = vst.msk [vmem:[#allocation3 + $0x68] sm:$0xf] %vm172, %v727
      %760 = vst.msk [vmem:[#allocation3 + $0x6c] sm:$0xf] %vm172, %v728
      %761 = vst.msk [vmem:[#allocation3 + $0x70] sm:$0xf] %vm172, %v729
      %762 = vst.msk [vmem:[#allocation3 + $0x74] sm:$0xf] %vm172, %v730
      %763 = vst.msk [vmem:[#allocation3 + $0x78] sm:$0xf] %vm172, %v731
      %764 = vst.msk [vmem:[#allocation3 + $0x7c] sm:$0xf] %vm172, %v732
      %v765 = vld [vmem:[#allocation2] sm:$0xf]
      %v766 = vld [vmem:[#allocation2 + $0x4] sm:$0xf]
      %v767 = vld [vmem:[#allocation2 + $0x8] sm:$0x1]
      %v768 = vld [vmem:[#allocation2 + $0xc] sm:$0xf]
      %v769 = vld [vmem:[#allocation2 + $0x10] sm:$0xf]
      %v770 = vld [vmem:[#allocation2 + $0x14] sm:$0x1]
      %v771 = vld [vmem:[#allocation2 + $0x18] sm:$0xf]
      %v772 = vld [vmem:[#allocation2 + $0x1c] sm:$0xf]
      %v773 = vld [vmem:[#allocation2 + $0x20] sm:$0x1]
      %v774 = vld [vmem:[#allocation2 + $0x24] sm:$0xf]
      %v775 = vld [vmem:[#allocation2 + $0x28] sm:$0xf]
      %v776 = vld [vmem:[#allocation2 + $0x2c] sm:$0x1]
      %v777 = vld [vmem:[#allocation2 + $0x30] sm:$0xf]
      %v778 = vld [vmem:[#allocation2 + $0x34] sm:$0xf]
      %v779 = vld [vmem:[#allocation2 + $0x38] sm:$0x1]
      %v780 = vld [vmem:[#allocation2 + $0x3c] sm:$0xf]
      %v781 = vld [vmem:[#allocation2 + $0x40] sm:$0xf]
      %v782 = vld [vmem:[#allocation2 + $0x44] sm:$0x1]
      %v783 = vld [vmem:[#allocation2 + $0x48] sm:$0xf]
      %v784 = vld [vmem:[#allocation2 + $0x4c] sm:$0xf]
      %v785 = vld [vmem:[#allocation2 + $0x50] sm:$0x1]
      %v786 = vld [vmem:[#allocation2 + $0x54] sm:$0xf]
      %v787 = vld [vmem:[#allocation2 + $0x58] sm:$0xf]
      %v788 = vld [vmem:[#allocation2 + $0x5c] sm:$0x1]
      %v789 = vld [vmem:[#allocation2 + $0x60] sm:$0xf]
      %v790 = vld [vmem:[#allocation2 + $0x64] sm:$0xf]
      %v791 = vld [vmem:[#allocation2 + $0x68] sm:$0x1]
      %v792 = vld [vmem:[#allocation2 + $0x6c] sm:$0xf]
      %v793 = vld [vmem:[#allocation2 + $0x70] sm:$0xf]
      %v794 = vld [vmem:[#allocation2 + $0x74] sm:$0x1]
      %v795 = vld [vmem:[#allocation2 + $0x78] sm:$0xf]
      %v796 = vld [vmem:[#allocation2 + $0x7c] sm:$0xf]
      %v797 = vld [vmem:[#allocation2 + $0x80] sm:$0x1]
      %v798 = vld [vmem:[#allocation2 + $0x84] sm:$0xf]
      %v799 = vld [vmem:[#allocation2 + $0x88] sm:$0xf]
      %v800 = vld [vmem:[#allocation2 + $0x8c] sm:$0x1]
      %v801 = vld [vmem:[#allocation2 + $0x90] sm:$0xf]
      %v802 = vld [vmem:[#allocation2 + $0x94] sm:$0xf]
      %v803 = vld [vmem:[#allocation2 + $0x98] sm:$0x1]
      %v804 = vld [vmem:[#allocation2 + $0x9c] sm:$0xf]
      %v805 = vld [vmem:[#allocation2 + $0xa0] sm:$0xf]
      %v806 = vld [vmem:[#allocation2 + $0xa4] sm:$0x1]
      %v807 = vld [vmem:[#allocation2 + $0xa8] sm:$0xf]
      %v808 = vld [vmem:[#allocation2 + $0xac] sm:$0xf]
      %v809 = vld [vmem:[#allocation2 + $0xb0] sm:$0x1]
      %v810 = vld [vmem:[#allocation2 + $0xb4] sm:$0xf]
      %v811 = vld [vmem:[#allocation2 + $0xb8] sm:$0xf]
      %v812 = vld [vmem:[#allocation2 + $0xbc] sm:$0x1]
      %vm813 = vsmask.f32 3328
      %vm814 = vsmask.f32 7440
      %vm815 = vmor %vm813, %vm814
      %v817 = vshrl.u32 %v765, 16
      %v819 = vrot.slane %v817, 4
      %v820 = vshll.u32 %v765, 16
      %v822 = vrot.slane %v820, 5
      %v823 = vor.u32 %v819, %v822
      %v824 = vrot.slane %v823, 4
      %v826 = vshll.u32 %v766, 16
      %v828 = vrot.slane %v826, 5
      %v829 = vsel %vm815, %v824, %v828
      %v830 = vshrl.u32 %v766, 16
      %v832 = vrot.slane %v830, 4
      %v833 = vor.u32 %v832, %v828
      %v834 = vrot.slane %v833, 4
      %v836 = vshll.u32 %v767, 16
      %v838 = vrot.slane %v836, 5
      %v839 = vsel %vm815, %v834, %v838
      %v841 = vshrl.u32 %v768, 16
      %v843 = vrot.slane %v841, 4
      %v844 = vshll.u32 %v768, 16
      %v846 = vrot.slane %v844, 5
      %v847 = vor.u32 %v843, %v846
      %v848 = vrot.slane %v847, 4
      %v850 = vshll.u32 %v769, 16
      %v852 = vrot.slane %v850, 5
      %v853 = vsel %vm815, %v848, %v852
      %v854 = vshrl.u32 %v769, 16
      %v856 = vrot.slane %v854, 4
      %v857 = vor.u32 %v856, %v852
      %v858 = vrot.slane %v857, 4
      %v860 = vshll.u32 %v770, 16
      %v862 = vrot.slane %v860, 5
      %v863 = vsel %vm815, %v858, %v862
      %v865 = vshrl.u32 %v771, 16
      %v867 = vrot.slane %v865, 4
      %v868 = vshll.u32 %v771, 16
      %v870 = vrot.slane %v868, 5
      %v871 = vor.u32 %v867, %v870
      %v872 = vrot.slane %v871, 4
      %v874 = vshll.u32 %v772, 16
      %v876 = vrot.slane %v874, 5
      %v877 = vsel %vm815, %v872, %v876
      %v878 = vshrl.u32 %v772, 16
      %v880 = vrot.slane %v878, 4
      %v881 = vor.u32 %v880, %v876
      %v882 = vrot.slane %v881, 4
      %v884 = vshll.u32 %v773, 16
      %v886 = vrot.slane %v884, 5
      %v887 = vsel %vm815, %v882, %v886
      %v889 = vshrl.u32 %v774, 16
      %v891 = vrot.slane %v889, 4
      %v892 = vshll.u32 %v774, 16
      %v894 = vrot.slane %v892, 5
      %v895 = vor.u32 %v891, %v894
      %v896 = vrot.slane %v895, 4
      %v898 = vshll.u32 %v775, 16
      %v900 = vrot.slane %v898, 5
      %v901 = vsel %vm815, %v896, %v900
      %v902 = vshrl.u32 %v775, 16
      %v904 = vrot.slane %v902, 4
      %v905 = vor.u32 %v904, %v900
      %v906 = vrot.slane %v905, 4
      %v908 = vshll.u32 %v776, 16
      %v910 = vrot.slane %v908, 5
      %v911 = vsel %vm815, %v906, %v910
      %v913 = vshrl.u32 %v777, 16
      %v915 = vrot.slane %v913, 4
      %v916 = vshll.u32 %v777, 16
      %v918 = vrot.slane %v916, 5
      %v919 = vor.u32 %v915, %v918
      %v920 = vrot.slane %v919, 4
      %v922 = vshll.u32 %v778, 16
      %v924 = vrot.slane %v922, 5
      %v925 = vsel %vm815, %v920, %v924
      %v926 = vshrl.u32 %v778, 16
      %v928 = vrot.slane %v926, 4
      %v929 = vor.u32 %v928, %v924
      %v930 = vrot.slane %v929, 4
      %v932 = vshll.u32 %v779, 16
      %v934 = vrot.slane %v932, 5
      %v935 = vsel %vm815, %v930, %v934
      %v937 = vshrl.u32 %v780, 16
      %v939 = vrot.slane %v937, 4
      %v940 = vshll.u32 %v780, 16
      %v942 = vrot.slane %v940, 5
      %v943 = vor.u32 %v939, %v942
      %v944 = vrot.slane %v943, 4
      %v946 = vshll.u32 %v781, 16
      %v948 = vrot.slane %v946, 5
      %v949 = vsel %vm815, %v944, %v948
      %v950 = vshrl.u32 %v781, 16
      %v952 = vrot.slane %v950, 4
      %v953 = vor.u32 %v952, %v948
      %v954 = vrot.slane %v953, 4
      %v956 = vshll.u32 %v782, 16
      %v958 = vrot.slane %v956, 5
      %v959 = vsel %vm815, %v954, %v958
      %v961 = vshrl.u32 %v783, 16
      %v963 = vrot.slane %v961, 4
      %v964 = vshll.u32 %v783, 16
      %v966 = vrot.slane %v964, 5
      %v967 = vor.u32 %v963, %v966
      %v968 = vrot.slane %v967, 4
      %v970 = vshll.u32 %v784, 16
      %v972 = vrot.slane %v970, 5
      %v973 = vsel %vm815, %v968, %v972
      %v974 = vshrl.u32 %v784, 16
      %v976 = vrot.slane %v974, 4
      %v977 = vor.u32 %v976, %v972
      %v978 = vrot.slane %v977, 4
      %v980 = vshll.u32 %v785, 16
      %v982 = vrot.slane %v980, 5
      %v983 = vsel %vm815, %v978, %v982
      %v985 = vshrl.u32 %v786, 16
      %v987 = vrot.slane %v985, 4
      %v988 = vshll.u32 %v786, 16
      %v990 = vrot.slane %v988, 5
      %v991 = vor.u32 %v987, %v990
      %v992 = vrot.slane %v991, 4
      %v994 = vshll.u32 %v787, 16
      %v996 = vrot.slane %v994, 5
      %v997 = vsel %vm815, %v992, %v996
      %v998 = vshrl.u32 %v787, 16
      %v1000 = vrot.slane %v998, 4
      %v1001 = vor.u32 %v1000, %v996
      %v1002 = vrot.slane %v1001, 4
      %v1004 = vshll.u32 %v788, 16
      %v1006 = vrot.slane %v1004, 5
      %v1007 = vsel %vm815, %v1002, %v1006
      %v1009 = vshrl.u32 %v789, 16
      %v1011 = vrot.slane %v1009, 4
      %v1012 = vshll.u32 %v789, 16
      %v1014 = vrot.slane %v1012, 5
      %v1015 = vor.u32 %v1011, %v1014
      %v1016 = vrot.slane %v1015, 4
      %v1018 = vshll.u32 %v790, 16
      %v1020 = vrot.slane %v1018, 5
      %v1021 = vsel %vm815, %v1016, %v1020
      %v1022 = vshrl.u32 %v790, 16
      %v1024 = vrot.slane %v1022, 4
      %v1025 = vor.u32 %v1024, %v1020
      %v1026 = vrot.slane %v1025, 4
      %v1028 = vshll.u32 %v791, 16
      %v1030 = vrot.slane %v1028, 5
      %v1031 = vsel %vm815, %v1026, %v1030
      %v1033 = vshrl.u32 %v792, 16
      %v1035 = vrot.slane %v1033, 4
      %v1036 = vshll.u32 %v792, 16
      %v1038 = vrot.slane %v1036, 5
      %v1039 = vor.u32 %v1035, %v1038
      %v1040 = vrot.slane %v1039, 4
      %v1042 = vshll.u32 %v793, 16
      %v1044 = vrot.slane %v1042, 5
      %v1045 = vsel %vm815, %v1040, %v1044
      %v1046 = vshrl.u32 %v793, 16
      %v1048 = vrot.slane %v1046, 4
      %v1049 = vor.u32 %v1048, %v1044
      %v1050 = vrot.slane %v1049, 4
      %v1052 = vshll.u32 %v794, 16
      %v1054 = vrot.slane %v1052, 5
      %v1055 = vsel %vm815, %v1050, %v1054
      %v1057 = vshrl.u32 %v795, 16
      %v1059 = vrot.slane %v1057, 4
      %v1060 = vshll.u32 %v795, 16
      %v1062 = vrot.slane %v1060, 5
      %v1063 = vor.u32 %v1059, %v1062
      %v1064 = vrot.slane %v1063, 4
      %v1066 = vshll.u32 %v796, 16
      %v1068 = vrot.slane %v1066, 5
      %v1069 = vsel %vm815, %v1064, %v1068
      %v1070 = vshrl.u32 %v796, 16
      %v1072 = vrot.slane %v1070, 4
      %v1073 = vor.u32 %v1072, %v1068
      %v1074 = vrot.slane %v1073, 4
      %v1076 = vshll.u32 %v797, 16
      %v1078 = vrot.slane %v1076, 5
      %v1079 = vsel %vm815, %v1074, %v1078
      %v1081 = vshrl.u32 %v798, 16
      %v1083 = vrot.slane %v1081, 4
      %v1084 = vshll.u32 %v798, 16
      %v1086 = vrot.slane %v1084, 5
      %v1087 = vor.u32 %v1083, %v1086
      %v1088 = vrot.slane %v1087, 4
      %v1090 = vshll.u32 %v799, 16
      %v1092 = vrot.slane %v1090, 5
      %v1093 = vsel %vm815, %v1088, %v1092
      %v1094 = vshrl.u32 %v799, 16
      %v1096 = vrot.slane %v1094, 4
      %v1097 = vor.u32 %v1096, %v1092
      %v1098 = vrot.slane %v1097, 4
      %v1100 = vshll.u32 %v800, 16
      %v1102 = vrot.slane %v1100, 5
      %v1103 = vsel %vm815, %v1098, %v1102
      %v1105 = vshrl.u32 %v801, 16
      %v1107 = vrot.slane %v1105, 4
      %v1108 = vshll.u32 %v801, 16
      %v1110 = vrot.slane %v1108, 5
      %v1111 = vor.u32 %v1107, %v1110
      %v1112 = vrot.slane %v1111, 4
      %v1114 = vshll.u32 %v802, 16
      %v1116 = vrot.slane %v1114, 5
      %v1117 = vsel %vm815, %v1112, %v1116
      %v1118 = vshrl.u32 %v802, 16
      %v1120 = vrot.slane %v1118, 4
      %v1121 = vor.u32 %v1120, %v1116
      %v1122 = vrot.slane %v1121, 4
      %v1124 = vshll.u32 %v803, 16
      %v1126 = vrot.slane %v1124, 5
      %v1127 = vsel %vm815, %v1122, %v1126
      %v1129 = vshrl.u32 %v804, 16
      %v1131 = vrot.slane %v1129, 4
      %v1132 = vshll.u32 %v804, 16
      %v1134 = vrot.slane %v1132, 5
      %v1135 = vor.u32 %v1131, %v1134
      %v1136 = vrot.slane %v1135, 4
      %v1138 = vshll.u32 %v805, 16
      %v1140 = vrot.slane %v1138, 5
      %v1141 = vsel %vm815, %v1136, %v1140
      %v1142 = vshrl.u32 %v805, 16
      %v1144 = vrot.slane %v1142, 4
      %v1145 = vor.u32 %v1144, %v1140
      %v1146 = vrot.slane %v1145, 4
      %v1148 = vshll.u32 %v806, 16
      %v1150 = vrot.slane %v1148, 5
      %v1151 = vsel %vm815, %v1146, %v1150
      %v1153 = vshrl.u32 %v807, 16
      %v1155 = vrot.slane %v1153, 4
      %v1156 = vshll.u32 %v807, 16
      %v1158 = vrot.slane %v1156, 5
      %v1159 = vor.u32 %v1155, %v1158
      %v1160 = vrot.slane %v1159, 4
      %v1162 = vshll.u32 %v808, 16
      %v1164 = vrot.slane %v1162, 5
      %v1165 = vsel %vm815, %v1160, %v1164
      %v1166 = vshrl.u32 %v808, 16
      %v1168 = vrot.slane %v1166, 4
      %v1169 = vor.u32 %v1168, %v1164
      %v1170 = vrot.slane %v1169, 4
      %v1172 = vshll.u32 %v809, 16
      %v1174 = vrot.slane %v1172, 5
      %v1175 = vsel %vm815, %v1170, %v1174
      %v1177 = vshrl.u32 %v810, 16
      %v1179 = vrot.slane %v1177, 4
      %v1180 = vshll.u32 %v810, 16
      %v1182 = vrot.slane %v1180, 5
      %v1183 = vor.u32 %v1179, %v1182
      %v1184 = vrot.slane %v1183, 4
      %v1186 = vshll.u32 %v811, 16
      %v1188 = vrot.slane %v1186, 5
      %v1189 = vsel %vm815, %v1184, %v1188
      %v1190 = vshrl.u32 %v811, 16
      %v1192 = vrot.slane %v1190, 4
      %v1193 = vor.u32 %v1192, %v1188
      %v1194 = vrot.slane %v1193, 4
      %v1196 = vshll.u32 %v812, 16
      %v1198 = vrot.slane %v1196, 5
      %v1199 = vsel %vm815, %v1194, %v1198
      %1200 = vrot.lane.b32.xlu0 %v829, 4
      %v1201 = vpop.permute.xlu0 %1200
      %1202 = vrot.lane.b32.xlu0 %v839, 4
      %v1203 = vpop.permute.xlu0 %1202
      %1204 = vrot.lane.b32.xlu0 %v853, 4
      %v1205 = vpop.permute.xlu0 %1204
      %1206 = vrot.lane.b32.xlu0 %v863, 4
      %v1207 = vpop.permute.xlu0 %1206
      %1208 = vrot.lane.b32.xlu0 %v877, 4
      %v1209 = vpop.permute.xlu0 %1208
      %1210 = vrot.lane.b32.xlu0 %v887, 4
      %v1211 = vpop.permute.xlu0 %1210
      %1212 = vrot.lane.b32.xlu0 %v901, 4
      %v1213 = vpop.permute.xlu0 %1212
      %1214 = vrot.lane.b32.xlu0 %v911, 4
      %v1215 = vpop.permute.xlu0 %1214
      %1216 = vrot.lane.b32.xlu0 %v925, 4
      %v1217 = vpop.permute.xlu0 %1216
      %1218 = vrot.lane.b32.xlu0 %v935, 4
      %v1219 = vpop.permute.xlu0 %1218
      %1220 = vrot.lane.b32.xlu0 %v949, 4
      %v1221 = vpop.permute.xlu0 %1220
      %1222 = vrot.lane.b32.xlu0 %v959, 4
      %v1223 = vpop.permute.xlu0 %1222
      %1224 = vrot.lane.b32.xlu0 %v973, 4
      %v1225 = vpop.permute.xlu0 %1224
      %1226 = vrot.lane.b32.xlu0 %v983, 4
      %v1227 = vpop.permute.xlu0 %1226
      %1228 = vrot.lane.b32.xlu0 %v997, 4
      %v1229 = vpop.permute.xlu0 %1228
      %1230 = vrot.lane.b32.xlu0 %v1007, 4
      %v1231 = vpop.permute.xlu0 %1230
      %1232 = vrot.lane.b32.xlu0 %v1021, 4
      %v1233 = vpop.permute.xlu0 %1232
      %1234 = vrot.lane.b32.xlu0 %v1031, 4
      %v1235 = vpop.permute.xlu0 %1234
      %1236 = vrot.lane.b32.xlu0 %v1045, 4
      %v1237 = vpop.permute.xlu0 %1236
      %1238 = vrot.lane.b32.xlu0 %v1055, 4
      %v1239 = vpop.permute.xlu0 %1238
      %1240 = vrot.lane.b32.xlu0 %v1069, 4
      %v1241 = vpop.permute.xlu0 %1240
      %1242 = vrot.lane.b32.xlu0 %v1079, 4
      %v1243 = vpop.permute.xlu0 %1242
      %1244 = vrot.lane.b32.xlu0 %v1093, 4
      %v1245 = vpop.permute.xlu0 %1244
      %1246 = vrot.lane.b32.xlu0 %v1103, 4
      %v1247 = vpop.permute.xlu0 %1246
      %1248 = vrot.lane.b32.xlu0 %v1117, 4
      %v1249 = vpop.permute.xlu0 %1248
      %1250 = vrot.lane.b32.xlu0 %v1127, 4
      %v1251 = vpop.permute.xlu0 %1250
      %1252 = vrot.lane.b32.xlu0 %v1141, 4
      %v1253 = vpop.permute.xlu0 %1252
      %1254 = vrot.lane.b32.xlu0 %v1151, 4
      %v1255 = vpop.permute.xlu0 %1254
      %1256 = vrot.lane.b32.xlu0 %v1165, 4
      %v1257 = vpop.permute.xlu0 %1256
      %1258 = vrot.lane.b32.xlu0 %v1175, 4
      %v1259 = vpop.permute.xlu0 %1258
      %1260 = vrot.lane.b32.xlu0 %v1189, 4
      %v1261 = vpop.permute.xlu0 %1260
      %1262 = vrot.lane.b32.xlu0 %v1199, 4
      %v1263 = vpop.permute.xlu0 %1262
      %vm1296 = vcmask 60448
      %1297 = vst.msk [vmem:[#allocation3] sm:$0xf] %vm1296, %v1201
      %1298 = vst.msk [vmem:[#allocation3 + $0x4] sm:$0xf] %vm1296, %v1203
      %1299 = vst.msk [vmem:[#allocation3 + $0x8] sm:$0xf] %vm1296, %v1205
      %1300 = vst.msk [vmem:[#allocation3 + $0xc] sm:$0xf] %vm1296, %v1207
      %1301 = vst.msk [vmem:[#allocation3 + $0x10] sm:$0xf] %vm1296, %v1209
      %1302 = vst.msk [vmem:[#allocation3 + $0x14] sm:$0xf] %vm1296, %v1211
      %1303 = vst.msk [vmem:[#allocation3 + $0x18] sm:$0xf] %vm1296, %v1213
      %1304 = vst.msk [vmem:[#allocation3 + $0x1c] sm:$0xf] %vm1296, %v1215
      %1305 = vst.msk [vmem:[#allocation3 + $0x20] sm:$0xf] %vm1296, %v1217
      %1306 = vst.msk [vmem:[#allocation3 + $0x24] sm:$0xf] %vm1296, %v1219
      %1307 = vst.msk [vmem:[#allocation3 + $0x28] sm:$0xf] %vm1296, %v1221
      %1308 = vst.msk [vmem:[#allocation3 + $0x2c] sm:$0xf] %vm1296, %v1223
      %1309 = vst.msk [vmem:[#allocation3 + $0x30] sm:$0xf] %vm1296, %v1225
      %1310 = vst.msk [vmem:[#allocation3 + $0x34] sm:$0xf] %vm1296, %v1227
      %1311 = vst.msk [vmem:[#allocation3 + $0x38] sm:$0xf] %vm1296, %v1229
      %1312 = vst.msk [vmem:[#allocation3 + $0x3c] sm:$0xf] %vm1296, %v1231
      %1313 = vst.msk [vmem:[#allocation3 + $0x40] sm:$0xf] %vm1296, %v1233
      %1314 = vst.msk [vmem:[#allocation3 + $0x44] sm:$0xf] %vm1296, %v1235
      %1315 = vst.msk [vmem:[#allocation3 + $0x48] sm:$0xf] %vm1296, %v1237
      %1316 = vst.msk [vmem:[#allocation3 + $0x4c] sm:$0xf] %vm1296, %v1239
      %1317 = vst.msk [vmem:[#allocation3 + $0x50] sm:$0xf] %vm1296, %v1241
      %1318 = vst.msk [vmem:[#allocation3 + $0x54] sm:$0xf] %vm1296, %v1243
      %1319 = vst.msk [vmem:[#allocation3 + $0x58] sm:$0xf] %vm1296, %v1245
      %1320 = vst.msk [vmem:[#allocation3 + $0x5c] sm:$0xf] %vm1296, %v1247
      %1321 = vst.msk [vmem:[#allocation3 + $0x60] sm:$0xf] %vm1296, %v1249
      %1322 = vst.msk [vmem:[#allocation3 + $0x64] sm:$0xf] %vm1296, %v1251
      %1323 = vst.msk [vmem:[#allocation3 + $0x68] sm:$0xf] %vm1296, %v1253
      %1324 = vst.msk [vmem:[#allocation3 + $0x6c] sm:$0xf] %vm1296, %v1255
      %1325 = vst.msk [vmem:[#allocation3 + $0x70] sm:$0xf] %vm1296, %v1257
      %1326 = vst.msk [vmem:[#allocation3 + $0x74] sm:$0xf] %vm1296, %v1259
      %1327 = vst.msk [vmem:[#allocation3 + $0x78] sm:$0xf] %vm1296, %v1261
      %1328 = vst.msk [vmem:[#allocation3 + $0x7c] sm:$0xf] %vm1296, %v1263
      %v1329 = vld [vmem:[#allocation2] sm:$0xe]
      %v1330 = vld [vmem:[#allocation2 + $0x4] sm:$0xf]
      %v1331 = vld [vmem:[#allocation2 + $0x8] sm:$0x1]
      %v1332 = vld [vmem:[#allocation2 + $0xc] sm:$0xe]
      %v1333 = vld [vmem:[#allocation2 + $0x10] sm:$0xf]
      %v1334 = vld [vmem:[#allocation2 + $0x14] sm:$0x1]
      %v1335 = vld [vmem:[#allocation2 + $0x18] sm:$0xe]
      %v1336 = vld [vmem:[#allocation2 + $0x1c] sm:$0xf]
      %v1337 = vld [vmem:[#allocation2 + $0x20] sm:$0x1]
      %v1338 = vld [vmem:[#allocation2 + $0x24] sm:$0xe]
      %v1339 = vld [vmem:[#allocation2 + $0x28] sm:$0xf]
      %v1340 = vld [vmem:[#allocation2 + $0x2c] sm:$0x1]
      %v1341 = vld [vmem:[#allocation2 + $0x30] sm:$0xe]
      %v1342 = vld [vmem:[#allocation2 + $0x34] sm:$0xf]
      %v1343 = vld [vmem:[#allocation2 + $0x38] sm:$0x1]
      %v1344 = vld [vmem:[#allocation2 + $0x3c] sm:$0xe]
      %v1345 = vld [vmem:[#allocation2 + $0x40] sm:$0xf]
      %v1346 = vld [vmem:[#allocation2 + $0x44] sm:$0x1]
      %v1347 = vld [vmem:[#allocation2 + $0x48] sm:$0xe]
      %v1348 = vld [vmem:[#allocation2 + $0x4c] sm:$0xf]
      %v1349 = vld [vmem:[#allocation2 + $0x50] sm:$0x1]
      %v1350 = vld [vmem:[#allocation2 + $0x54] sm:$0xe]
      %v1351 = vld [vmem:[#allocation2 + $0x58] sm:$0xf]
      %v1352 = vld [vmem:[#allocation2 + $0x5c] sm:$0x1]
      %v1353 = vld [vmem:[#allocation2 + $0x60] sm:$0xe]
      %v1354 = vld [vmem:[#allocation2 + $0x64] sm:$0xf]
      %v1355 = vld [vmem:[#allocation2 + $0x68] sm:$0x1]
      %v1356 = vld [vmem:[#allocation2 + $0x6c] sm:$0xe]
      %v1357 = vld [vmem:[#allocation2 + $0x70] sm:$0xf]
      %v1358 = vld [vmem:[#allocation2 + $0x74] sm:$0x1]
      %v1359 = vld [vmem:[#allocation2 + $0x78] sm:$0xe]
      %v1360 = vld [vmem:[#allocation2 + $0x7c] sm:$0xf]
      %v1361 = vld [vmem:[#allocation2 + $0x80] sm:$0x1]
      %v1362 = vld [vmem:[#allocation2 + $0x84] sm:$0xe]
      %v1363 = vld [vmem:[#allocation2 + $0x88] sm:$0xf]
      %v1364 = vld [vmem:[#allocation2 + $0x8c] sm:$0x1]
      %v1365 = vld [vmem:[#allocation2 + $0x90] sm:$0xe]
      %v1366 = vld [vmem:[#allocation2 + $0x94] sm:$0xf]
      %v1367 = vld [vmem:[#allocation2 + $0x98] sm:$0x1]
      %v1368 = vld [vmem:[#allocation2 + $0x9c] sm:$0xe]
      %v1369 = vld [vmem:[#allocation2 + $0xa0] sm:$0xf]
      %v1370 = vld [vmem:[#allocation2 + $0xa4] sm:$0x1]
      %v1371 = vld [vmem:[#allocation2 + $0xa8] sm:$0xe]
      %v1372 = vld [vmem:[#allocation2 + $0xac] sm:$0xf]
      %v1373 = vld [vmem:[#allocation2 + $0xb0] sm:$0x1]
      %v1374 = vld [vmem:[#allocation2 + $0xb4] sm:$0xe]
      %v1375 = vld [vmem:[#allocation2 + $0xb8] sm:$0xf]
      %v1376 = vld [vmem:[#allocation2 + $0xbc] sm:$0x1]
      %vm1425 = vcmask 1042432
      %vm1426 = vcmask 1046532
      %vm1427 = vmor %vm1425, %vm1426
      %v1428 = vrot.slane %v1329, 5
      %v1429 = vrot.slane %v1428, 4
      %v1430 = vrot.slane %v1330, 5
      %v1431 = vsel %vm1427, %v1429, %v1430
      %v1432 = vrot.slane %v1430, 4
      %v1433 = vrot.slane %v1331, 5
      %v1434 = vsel %vm1427, %v1432, %v1433
      %v1435 = vrot.slane %v1332, 5
      %v1436 = vrot.slane %v1435, 4
      %v1437 = vrot.slane %v1333, 5
      %v1438 = vsel %vm1427, %v1436, %v1437
      %v1439 = vrot.slane %v1437, 4
      %v1440 = vrot.slane %v1334, 5
      %v1441 = vsel %vm1427, %v1439, %v1440
      %v1442 = vrot.slane %v1335, 5
      %v1443 = vrot.slane %v1442, 4
      %v1444 = vrot.slane %v1336, 5
      %v1445 = vsel %vm1427, %v1443, %v1444
      %v1446 = vrot.slane %v1444, 4
      %v1447 = vrot.slane %v1337, 5
      %v1448 = vsel %vm1427, %v1446, %v1447
      %v1449 = vrot.slane %v1338, 5
      %v1450 = vrot.slane %v1449, 4
      %v1451 = vrot.slane %v1339, 5
      %v1452 = vsel %vm1427, %v1450, %v1451
      %v1453 = vrot.slane %v1451, 4
      %v1454 = vrot.slane %v1340, 5
      %v1455 = vsel %vm1427, %v1453, %v1454
      %v1456 = vrot.slane %v1341, 5
      %v1457 = vrot.slane %v1456, 4
      %v1458 = vrot.slane %v1342, 5
      %v1459 = vsel %vm1427, %v1457, %v1458
      %v1460 = vrot.slane %v1458, 4
      %v1461 = vrot.slane %v1343, 5
      %v1462 = vsel %vm1427, %v1460, %v1461
      %v1463 = vrot.slane %v1344, 5
      %v1464 = vrot.slane %v1463, 4
      %v1465 = vrot.slane %v1345, 5
      %v1466 = vsel %vm1427, %v1464, %v1465
      %v1467 = vrot.slane %v1465, 4
      %v1468 = vrot.slane %v1346, 5
      %v1469 = vsel %vm1427, %v1467, %v1468
      %v1470 = vrot.slane %v1347, 5
      %v1471 = vrot.slane %v1470, 4
      %v1472 = vrot.slane %v1348, 5
      %v1473 = vsel %vm1427, %v1471, %v1472
      %v1474 = vrot.slane %v1472, 4
      %v1475 = vrot.slane %v1349, 5
      %v1476 = vsel %vm1427, %v1474, %v1475
      %v1477 = vrot.slane %v1350, 5
      %v1478 = vrot.slane %v1477, 4
      %v1479 = vrot.slane %v1351, 5
      %v1480 = vsel %vm1427, %v1478, %v1479
      %v1481 = vrot.slane %v1479, 4
      %v1482 = vrot.slane %v1352, 5
      %v1483 = vsel %vm1427, %v1481, %v1482
      %v1484 = vrot.slane %v1353, 5
      %v1485 = vrot.slane %v1484, 4
      %v1486 = vrot.slane %v1354, 5
      %v1487 = vsel %vm1427, %v1485, %v1486
      %v1488 = vrot.slane %v1486, 4
      %v1489 = vrot.slane %v1355, 5
      %v1490 = vsel %vm1427, %v1488, %v1489
      %v1491 = vrot.slane %v1356, 5
      %v1492 = vrot.slane %v1491, 4
      %v1493 = vrot.slane %v1357, 5
      %v1494 = vsel %vm1427, %v1492, %v1493
      %v1495 = vrot.slane %v1493, 4
      %v1496 = vrot.slane %v1358, 5
      %v1497 = vsel %vm1427, %v1495, %v1496
      %v1498 = vrot.slane %v1359, 5
      %v1499 = vrot.slane %v1498, 4
      %v1500 = vrot.slane %v1360, 5
      %v1501 = vsel %vm1427, %v1499, %v1500
      %v1502 = vrot.slane %v1500, 4
      %v1503 = vrot.slane %v1361, 5
      %v1504 = vsel %vm1427, %v1502, %v1503
      %v1505 = vrot.slane %v1362, 5
      %v1506 = vrot.slane %v1505, 4
      %v1507 = vrot.slane %v1363, 5
      %v1508 = vsel %vm1427, %v1506, %v1507
      %v1509 = vrot.slane %v1507, 4
      %v1510 = vrot.slane %v1364, 5
      %v1511 = vsel %vm1427, %v1509, %v1510
      %v1512 = vrot.slane %v1365, 5
      %v1513 = vrot.slane %v1512, 4
      %v1514 = vrot.slane %v1366, 5
      %v1515 = vsel %vm1427, %v1513, %v1514
      %v1516 = vrot.slane %v1514, 4
      %v1517 = vrot.slane %v1367, 5
      %v1518 = vsel %vm1427, %v1516, %v1517
      %v1519 = vrot.slane %v1368, 5
      %v1520 = vrot.slane %v1519, 4
      %v1521 = vrot.slane %v1369, 5
      %v1522 = vsel %vm1427, %v1520, %v1521
      %v1523 = vrot.slane %v1521, 4
      %v1524 = vrot.slane %v1370, 5
      %v1525 = vsel %vm1427, %v1523, %v1524
      %v1526 = vrot.slane %v1371, 5
      %v1527 = vrot.slane %v1526, 4
      %v1528 = vrot.slane %v1372, 5
      %v1529 = vsel %vm1427, %v1527, %v1528
      %v1530 = vrot.slane %v1528, 4
      %v1531 = vrot.slane %v1373, 5
      %v1532 = vsel %vm1427, %v1530, %v1531
      %v1533 = vrot.slane %v1374, 5
      %v1534 = vrot.slane %v1533, 4
      %v1535 = vrot.slane %v1375, 5
      %v1536 = vsel %vm1427, %v1534, %v1535
      %v1537 = vrot.slane %v1535, 4
      %v1538 = vrot.slane %v1376, 5
      %v1539 = vsel %vm1427, %v1537, %v1538
      %1540 = vrot.lane.b32.xlu0 %v1431, 8
      %v1541 = vpop.permute.xlu0 %1540
      %1542 = vrot.lane.b32.xlu0 %v1434, 8
      %v1543 = vpop.permute.xlu0 %1542
      %1544 = vrot.lane.b32.xlu0 %v1438, 8
      %v1545 = vpop.permute.xlu0 %1544
      %1546 = vrot.lane.b32.xlu0 %v1441, 8
      %v1547 = vpop.permute.xlu0 %1546
      %1548 = vrot.lane.b32.xlu0 %v1445, 8
      %v1549 = vpop.permute.xlu0 %1548
      %1550 = vrot.lane.b32.xlu0 %v1448, 8
      %v1551 = vpop.permute.xlu0 %1550
      %1552 = vrot.lane.b32.xlu0 %v1452, 8
      %v1553 = vpop.permute.xlu0 %1552
      %1554 = vrot.lane.b32.xlu0 %v1455, 8
      %v1555 = vpop.permute.xlu0 %1554
      %1556 = vrot.lane.b32.xlu0 %v1459, 8
      %v1557 = vpop.permute.xlu0 %1556
      %1558 = vrot.lane.b32.xlu0 %v1462, 8
      %v1559 = vpop.permute.xlu0 %1558
      %1560 = vrot.lane.b32.xlu0 %v1466, 8
      %v1561 = vpop.permute.xlu0 %1560
      %1562 = vrot.lane.b32.xlu0 %v1469, 8
      %v1563 = vpop.permute.xlu0 %1562
      %1564 = vrot.lane.b32.xlu0 %v1473, 8
      %v1565 = vpop.permute.xlu0 %1564
      %1566 = vrot.lane.b32.xlu0 %v1476, 8
      %v1567 = vpop.permute.xlu0 %1566
      %1568 = vrot.lane.b32.xlu0 %v1480, 8
      %v1569 = vpop.permute.xlu0 %1568
      %1570 = vrot.lane.b32.xlu0 %v1483, 8
      %v1571 = vpop.permute.xlu0 %1570
      %1572 = vrot.lane.b32.xlu0 %v1487, 8
      %v1573 = vpop.permute.xlu0 %1572
      %1574 = vrot.lane.b32.xlu0 %v1490, 8
      %v1575 = vpop.permute.xlu0 %1574
      %1576 = vrot.lane.b32.xlu0 %v1494, 8
      %v1577 = vpop.permute.xlu0 %1576
      %1578 = vrot.lane.b32.xlu0 %v1497, 8
      %v1579 = vpop.permute.xlu0 %1578
      %1580 = vrot.lane.b32.xlu0 %v1501, 8
      %v1581 = vpop.permute.xlu0 %1580
      %1582 = vrot.lane.b32.xlu0 %v1504, 8
      %v1583 = vpop.permute.xlu0 %1582
      %1584 = vrot.lane.b32.xlu0 %v1508, 8
      %v1585 = vpop.permute.xlu0 %1584
      %1586 = vrot.lane.b32.xlu0 %v1511, 8
      %v1587 = vpop.permute.xlu0 %1586
      %1588 = vrot.lane.b32.xlu0 %v1515, 8
      %v1589 = vpop.permute.xlu0 %1588
      %1590 = vrot.lane.b32.xlu0 %v1518, 8
      %v1591 = vpop.permute.xlu0 %1590
      %1592 = vrot.lane.b32.xlu0 %v1522, 8
      %v1593 = vpop.permute.xlu0 %1592
      %1594 = vrot.lane.b32.xlu0 %v1525, 8
      %v1595 = vpop.permute.xlu0 %1594
      %1596 = vrot.lane.b32.xlu0 %v1529, 8
      %v1597 = vpop.permute.xlu0 %1596
      %1598 = vrot.lane.b32.xlu0 %v1532, 8
      %v1599 = vpop.permute.xlu0 %1598
      %1600 = vrot.lane.b32.xlu0 %v1536, 8
      %v1601 = vpop.permute.xlu0 %1600
      %1602 = vrot.lane.b32.xlu0 %v1539, 8
      %v1603 = vpop.permute.xlu0 %1602
      %vm1636 = vcmask 93248
      %1637 = vst.msk [vmem:[#allocation3] sm:$0xf] %vm1636, %v1541
      %1638 = vst.msk [vmem:[#allocation3 + $0x4] sm:$0xf] %vm1636, %v1543
      %1639 = vst.msk [vmem:[#allocation3 + $0x8] sm:$0xf] %vm1636, %v1545
      %1640 = vst.msk [vmem:[#allocation3 + $0xc] sm:$0xf] %vm1636, %v1547
      %1641 = vst.msk [vmem:[#allocation3 + $0x10] sm:$0xf] %vm1636, %v1549
      %1642 = vst.msk [vmem:[#allocation3 + $0x14] sm:$0xf] %vm1636, %v1551
      %1643 = vst.msk [vmem:[#allocation3 + $0x18] sm:$0xf] %vm1636, %v1553
      %1644 = vst.msk [vmem:[#allocation3 + $0x1c] sm:$0xf] %vm1636, %v1555
      %1645 = vst.msk [vmem:[#allocation3 + $0x20] sm:$0xf] %vm1636, %v1557
      %1646 = vst.msk [vmem:[#allocation3 + $0x24] sm:$0xf] %vm1636, %v1559
      %1647 = vst.msk [vmem:[#allocation3 + $0x28] sm:$0xf] %vm1636, %v1561
      %1648 = vst.msk [vmem:[#allocation3 + $0x2c] sm:$0xf] %vm1636, %v1563
      %1649 = vst.msk [vmem:[#allocation3 + $0x30] sm:$0xf] %vm1636, %v1565
      %1650 = vst.msk [vmem:[#allocation3 + $0x34] sm:$0xf] %vm1636, %v1567
      %1651 = vst.msk [vmem:[#allocation3 + $0x38] sm:$0xf] %vm1636, %v1569
      %1652 = vst.msk [vmem:[#allocation3 + $0x3c] sm:$0xf] %vm1636, %v1571
      %1653 = vst.msk [vmem:[#allocation3 + $0x40] sm:$0xf] %vm1636, %v1573
      %1654 = vst.msk [vmem:[#allocation3 + $0x44] sm:$0xf] %vm1636, %v1575
      %1655 = vst.msk [vmem:[#allocation3 + $0x48] sm:$0xf] %vm1636, %v1577
      %1656 = vst.msk [vmem:[#allocation3 + $0x4c] sm:$0xf] %vm1636, %v1579
      %1657 = vst.msk [vmem:[#allocation3 + $0x50] sm:$0xf] %vm1636, %v1581
      %1658 = vst.msk [vmem:[#allocation3 + $0x54] sm:$0xf] %vm1636, %v1583
      %1659 = vst.msk [vmem:[#allocation3 + $0x58] sm:$0xf] %vm1636, %v1585
      %1660 = vst.msk [vmem:[#allocation3 + $0x5c] sm:$0xf] %vm1636, %v1587
      %1661 = vst.msk [vmem:[#allocation3 + $0x60] sm:$0xf] %vm1636, %v1589
      %1662 = vst.msk [vmem:[#allocation3 + $0x64] sm:$0xf] %vm1636, %v1591
      %1663 = vst.msk [vmem:[#allocation3 + $0x68] sm:$0xf] %vm1636, %v1593
      %1664 = vst.msk [vmem:[#allocation3 + $0x6c] sm:$0xf] %vm1636, %v1595
      %1665 = vst.msk [vmem:[#allocation3 + $0x70] sm:$0xf] %vm1636, %v1597
      %1666 = vst.msk [vmem:[#allocation3 + $0x74] sm:$0xf] %vm1636, %v1599
      %1667 = vst.msk [vmem:[#allocation3 + $0x78] sm:$0xf] %vm1636, %v1601
      %1668 = vst.msk [vmem:[#allocation3 + $0x7c] sm:$0xf] %vm1636, %v1603
      %v1669 = vld [vmem:[%s583] sm:$0xf]
      %v1670 = vld [vmem:[%s583 + $0x4] sm:$0xf]
      %v1671 = vld [vmem:[%s583 + $0xc] sm:$0xf]
      %v1672 = vld [vmem:[%s583 + $0x10] sm:$0xf]
      %v1673 = vld [vmem:[%s583 + $0x18] sm:$0xf]
      %v1674 = vld [vmem:[%s583 + $0x1c] sm:$0xf]
      %v1675 = vld [vmem:[%s583 + $0x24] sm:$0xf]
      %v1676 = vld [vmem:[%s583 + $0x28] sm:$0xf]
      %v1677 = vld [vmem:[%s583 + $0x30] sm:$0xf]
      %v1678 = vld [vmem:[%s583 + $0x34] sm:$0xf]
      %v1679 = vld [vmem:[%s583 + $0x3c] sm:$0xf]
      %v1680 = vld [vmem:[%s583 + $0x40] sm:$0xf]
      %v1681 = vld [vmem:[%s583 + $0x48] sm:$0xf]
      %v1682 = vld [vmem:[%s583 + $0x4c] sm:$0xf]
      %v1683 = vld [vmem:[%s583 + $0x54] sm:$0xf]
      %v1684 = vld [vmem:[%s583 + $0x58] sm:$0xf]
      %v1685 = vld [vmem:[%s583 + $0x60] sm:$0xf]
      %v1686 = vld [vmem:[%s583 + $0x64] sm:$0xf]
      %v1687 = vld [vmem:[%s583 + $0x6c] sm:$0xf]
      %v1688 = vld [vmem:[%s583 + $0x70] sm:$0xf]
      %v1689 = vld [vmem:[%s583 + $0x78] sm:$0xf]
      %v1690 = vld [vmem:[%s583 + $0x7c] sm:$0xf]
      %v1691 = vld [vmem:[%s583 + $0x84] sm:$0xf]
      %v1692 = vld [vmem:[%s583 + $0x88] sm:$0xf]
      %v1693 = vld [vmem:[%s583 + $0x90] sm:$0xf]
      %v1694 = vld [vmem:[%s583 + $0x94] sm:$0xf]
      %v1695 = vld [vmem:[%s583 + $0x9c] sm:$0xf]
      %v1696 = vld [vmem:[%s583 + $0xa0] sm:$0xf]
      %v1697 = vld [vmem:[%s583 + $0xa8] sm:$0xf]
      %v1698 = vld [vmem:[%s583 + $0xac] sm:$0xf]
      %v1699 = vld [vmem:[%s583 + $0xb4] sm:$0xf]
      %v1700 = vld [vmem:[%s583 + $0xb8] sm:$0xf]
      %1733 = vrot.lane.b32.xlu0 %v1669, 12
      %v1734 = vpop.permute.xlu0 %1733
      %1735 = vrot.lane.b32.xlu0 %v1670, 12
      %v1736 = vpop.permute.xlu0 %1735
      %1737 = vrot.lane.b32.xlu0 %v1671, 12
      %v1738 = vpop.permute.xlu0 %1737
      %1739 = vrot.lane.b32.xlu0 %v1672, 12
      %v1740 = vpop.permute.xlu0 %1739
      %1741 = vrot.lane.b32.xlu0 %v1673, 12
      %v1742 = vpop.permute.xlu0 %1741
      %1743 = vrot.lane.b32.xlu0 %v1674, 12
      %v1744 = vpop.permute.xlu0 %1743
      %1745 = vrot.lane.b32.xlu0 %v1675, 12
      %v1746 = vpop.permute.xlu0 %1745
      %1747 = vrot.lane.b32.xlu0 %v1676, 12
      %v1748 = vpop.permute.xlu0 %1747
      %1749 = vrot.lane.b32.xlu0 %v1677, 12
      %v1750 = vpop.permute.xlu0 %1749
      %1751 = vrot.lane.b32.xlu0 %v1678, 12
      %v1752 = vpop.permute.xlu0 %1751
      %1753 = vrot.lane.b32.xlu0 %v1679, 12
      %v1754 = vpop.permute.xlu0 %1753
      %1755 = vrot.lane.b32.xlu0 %v1680, 12
      %v1756 = vpop.permute.xlu0 %1755
      %1757 = vrot.lane.b32.xlu0 %v1681, 12
      %v1758 = vpop.permute.xlu0 %1757
      %1759 = vrot.lane.b32.xlu0 %v1682, 12
      %v1760 = vpop.permute.xlu0 %1759
      %1761 = vrot.lane.b32.xlu0 %v1683, 12
      %v1762 = vpop.permute.xlu0 %1761
      %1763 = vrot.lane.b32.xlu0 %v1684, 12
      %v1764 = vpop.permute.xlu0 %1763
      %1765 = vrot.lane.b32.xlu0 %v1685, 12
      %v1766 = vpop.permute.xlu0 %1765
      %1767 = vrot.lane.b32.xlu0 %v1686, 12
      %v1768 = vpop.permute.xlu0 %1767
      %1769 = vrot.lane.b32.xlu0 %v1687, 12
      %v1770 = vpop.permute.xlu0 %1769
      %1771 = vrot.lane.b32.xlu0 %v1688, 12
      %v1772 = vpop.permute.xlu0 %1771
      %1773 = vrot.lane.b32.xlu0 %v1689, 12
      %v1774 = vpop.permute.xlu0 %1773
      %1775 = vrot.lane.b32.xlu0 %v1690, 12
      %v1776 = vpop.permute.xlu0 %1775
      %1777 = vrot.lane.b32.xlu0 %v1691, 12
      %v1778 = vpop.permute.xlu0 %1777
      %1779 = vrot.lane.b32.xlu0 %v1692, 12
      %v1780 = vpop.permute.xlu0 %1779
      %1781 = vrot.lane.b32.xlu0 %v1693, 12
      %v1782 = vpop.permute.xlu0 %1781
      %1783 = vrot.lane.b32.xlu0 %v1694, 12
      %v1784 = vpop.permute.xlu0 %1783
      %1785 = vrot.lane.b32.xlu0 %v1695, 12
      %v1786 = vpop.permute.xlu0 %1785
      %1787 = vrot.lane.b32.xlu0 %v1696, 12
      %v1788 = vpop.permute.xlu0 %1787
      %1789 = vrot.lane.b32.xlu0 %v1697, 12
      %v1790 = vpop.permute.xlu0 %1789
      %1791 = vrot.lane.b32.xlu0 %v1698, 12
      %v1792 = vpop.permute.xlu0 %1791
      %1793 = vrot.lane.b32.xlu0 %v1699, 12
      %v1794 = vpop.permute.xlu0 %1793
      %1795 = vrot.lane.b32.xlu0 %v1700, 12
      %v1796 = vpop.permute.xlu0 %1795
      %vm1829 = vcmask 126048
      %1830 = vst.msk [vmem:[#allocation3] sm:$0xf] %vm1829, %v1734
      %1831 = vst.msk [vmem:[#allocation3 + $0x4] sm:$0xf] %vm1829, %v1736
      %1832 = vst.msk [vmem:[#allocation3 + $0x8] sm:$0xf] %vm1829, %v1738
      %1833 = vst.msk [vmem:[#allocation3 + $0xc] sm:$0xf] %vm1829, %v1740
      %1834 = vst.msk [vmem:[#allocation3 + $0x10] sm:$0xf] %vm1829, %v1742
      %1835 = vst.msk [vmem:[#allocation3 + $0x14] sm:$0xf] %vm1829, %v1744
      %1836 = vst.msk [vmem:[#allocation3 + $0x18] sm:$0xf] %vm1829, %v1746
      %1837 = vst.msk [vmem:[#allocation3 + $0x1c] sm:$0xf] %vm1829, %v1748
      %1838 = vst.msk [vmem:[#allocation3 + $0x20] sm:$0xf] %vm1829, %v1750
      %1839 = vst.msk [vmem:[#allocation3 + $0x24] sm:$0xf] %vm1829, %v1752
      %1840 = vst.msk [vmem:[#allocation3 + $0x28] sm:$0xf] %vm1829, %v1754
      %1841 = vst.msk [vmem:[#allocation3 + $0x2c] sm:$0xf] %vm1829, %v1756
      %1842 = vst.msk [vmem:[#allocation3 + $0x30] sm:$0xf] %vm1829, %v1758
      %1843 = vst.msk [vmem:[#allocation3 + $0x34] sm:$0xf] %vm1829, %v1760
      %1844 = vst.msk [vmem:[#allocation3 + $0x38] sm:$0xf] %vm1829, %v1762
      %1845 = vst.msk [vmem:[#allocation3 + $0x3c] sm:$0xf] %vm1829, %v1764
      %1846 = vst.msk [vmem:[#allocation3 + $0x40] sm:$0xf] %vm1829, %v1766
      %1847 = vst.msk [vmem:[#allocation3 + $0x44] sm:$0xf] %vm1829, %v1768
      %1848 = vst.msk [vmem:[#allocation3 + $0x48] sm:$0xf] %vm1829, %v1770
      %1849 = vst.msk [vmem:[#allocation3 + $0x4c] sm:$0xf] %vm1829, %v1772
      %1850 = vst.msk [vmem:[#allocation3 + $0x50] sm:$0xf] %vm1829, %v1774
      %1851 = vst.msk [vmem:[#allocation3 + $0x54] sm:$0xf] %vm1829, %v1776
      %1852 = vst.msk [vmem:[#allocation3 + $0x58] sm:$0xf] %vm1829, %v1778
      %1853 = vst.msk [vmem:[#allocation3 + $0x5c] sm:$0xf] %vm1829, %v1780
      %1854 = vst.msk [vmem:[#allocation3 + $0x60] sm:$0xf] %vm1829, %v1782
      %1855 = vst.msk [vmem:[#allocation3 + $0x64] sm:$0xf] %vm1829, %v1784
      %1856 = vst.msk [vmem:[#allocation3 + $0x68] sm:$0xf] %vm1829, %v1786
      %1857 = vst.msk [vmem:[#allocation3 + $0x6c] sm:$0xf] %vm1829, %v1788
      %1858 = vst.msk [vmem:[#allocation3 + $0x70] sm:$0xf] %vm1829, %v1790
      %1859 = vst.msk [vmem:[#allocation3 + $0x74] sm:$0xf] %vm1829, %v1792
      %1860 = vst.msk [vmem:[#allocation3 + $0x78] sm:$0xf] %vm1829, %v1794
      %1861 = vst.msk [vmem:[#allocation3 + $0x7c] sm:$0xf] %vm1829, %v1796
      %v1862 = vld [vmem:[%s583] sm:$0xf]
      %v1863 = vld [vmem:[%s583 + $0x4] sm:$0xf]
      %v1864 = vld [vmem:[%s583 + $0x8] sm:$0x1]
      %v1865 = vld [vmem:[%s583 + $0xc] sm:$0xf]
      %v1866 = vld [vmem:[%s583 + $0x10] sm:$0xf]
      %v1867 = vld [vmem:[%s583 + $0x14] sm:$0x1]
      %v1868 = vld [vmem:[%s583 + $0x18] sm:$0xf]
      %v1869 = vld [vmem:[%s583 + $0x1c] sm:$0xf]
      %v1870 = vld [vmem:[%s583 + $0x20] sm:$0x1]
      %v1871 = vld [vmem:[%s583 + $0x24] sm:$0xf]
      %v1872 = vld [vmem:[%s583 + $0x28] sm:$0xf]
      %v1873 = vld [vmem:[%s583 + $0x2c] sm:$0x1]
      %v1874 = vld [vmem:[%s583 + $0x30] sm:$0xf]
      %v1875 = vld [vmem:[%s583 + $0x34] sm:$0xf]
      %v1876 = vld [vmem:[%s583 + $0x38] sm:$0x1]
      %v1877 = vld [vmem:[%s583 + $0x3c] sm:$0xf]
      %v1878 = vld [vmem:[%s583 + $0x40] sm:$0xf]
      %v1879 = vld [vmem:[%s583 + $0x44] sm:$0x1]
      %v1880 = vld [vmem:[%s583 + $0x48] sm:$0xf]
      %v1881 = vld [vmem:[%s583 + $0x4c] sm:$0xf]
      %v1882 = vld [vmem:[%s583 + $0x50] sm:$0x1]
      %v1883 = vld [vmem:[%s583 + $0x54] sm:$0xf]
      %v1884 = vld [vmem:[%s583 + $0x58] sm:$0xf]
      %v1885 = vld [vmem:[%s583 + $0x5c] sm:$0x1]
      %v1886 = vld [vmem:[%s583 + $0x60] sm:$0xf]
      %v1887 = vld [vmem:[%s583 + $0x64] sm:$0xf]
      %v1888 = vld [vmem:[%s583 + $0x68] sm:$0x1]
      %v1889 = vld [vmem:[%s583 + $0x6c] sm:$0xf]
      %v1890 = vld [vmem:[%s583 + $0x70] sm:$0xf]
      %v1891 = vld [vmem:[%s583 + $0x74] sm:$0x1]
      %v1892 = vld [vmem:[%s583 + $0x78] sm:$0xf]
      %v1893 = vld [vmem:[%s583 + $0x7c] sm:$0xf]
      %v1894 = vld [vmem:[%s583 + $0x80] sm:$0x1]
      %v1895 = vld [vmem:[%s583 + $0x84] sm:$0xf]
      %v1896 = vld [vmem:[%s583 + $0x88] sm:$0xf]
      %v1897 = vld [vmem:[%s583 + $0x8c] sm:$0x1]
      %v1898 = vld [vmem:[%s583 + $0x90] sm:$0xf]
      %v1899 = vld [vmem:[%s583 + $0x94] sm:$0xf]
      %v1900 = vld [vmem:[%s583 + $0x98] sm:$0x1]
      %v1901 = vld [vmem:[%s583 + $0x9c] sm:$0xf]
      %v1902 = vld [vmem:[%s583 + $0xa0] sm:$0xf]
      %v1903 = vld [vmem:[%s583 + $0xa4] sm:$0x1]
      %v1904 = vld [vmem:[%s583 + $0xa8] sm:$0xf]
      %v1905 = vld [vmem:[%s583 + $0xac] sm:$0xf]
      %v1906 = vld [vmem:[%s583 + $0xb0] sm:$0x1]
      %v1907 = vld [vmem:[%s583 + $0xb4] sm:$0xf]
      %v1908 = vld [vmem:[%s583 + $0xb8] sm:$0xf]
      %v1909 = vld [vmem:[%s583 + $0xbc] sm:$0x1]
      %v1911 = vshrl.u32 %v1862, 16
      %v1913 = vrot.slane %v1911, 4
      %v1914 = vshll.u32 %v1862, 16
      %v1916 = vrot.slane %v1914, 5
      %v1917 = vor.u32 %v1913, %v1916
      %v1918 = vrot.slane %v1917, 4
      %v1920 = vshll.u32 %v1863, 16
      %v1922 = vrot.slane %v1920, 5
      %v1923 = vsel %vm815, %v1918, %v1922
      %v1924 = vshrl.u32 %v1863, 16
      %v1926 = vrot.slane %v1924, 4
      %v1927 = vor.u32 %v1926, %v1922
      %v1928 = vrot.slane %v1927, 4
      %v1930 = vshll.u32 %v1864, 16
      %v1932 = vrot.slane %v1930, 5
      %v1933 = vsel %vm815, %v1928, %v1932
      %v1935 = vshrl.u32 %v1865, 16
      %v1937 = vrot.slane %v1935, 4
      %v1938 = vshll.u32 %v1865, 16
      %v1940 = vrot.slane %v1938, 5
      %v1941 = vor.u32 %v1937, %v1940
      %v1942 = vrot.slane %v1941, 4
      %v1944 = vshll.u32 %v1866, 16
      %v1946 = vrot.slane %v1944, 5
      %v1947 = vsel %vm815, %v1942, %v1946
      %v1948 = vshrl.u32 %v1866, 16
      %v1950 = vrot.slane %v1948, 4
      %v1951 = vor.u32 %v1950, %v1946
      %v1952 = vrot.slane %v1951, 4
      %v1954 = vshll.u32 %v1867, 16
      %v1956 = vrot.slane %v1954, 5
      %v1957 = vsel %vm815, %v1952, %v1956
      %v1959 = vshrl.u32 %v1868, 16
      %v1961 = vrot.slane %v1959, 4
      %v1962 = vshll.u32 %v1868, 16
      %v1964 = vrot.slane %v1962, 5
      %v1965 = vor.u32 %v1961, %v1964
      %v1966 = vrot.slane %v1965, 4
      %v1968 = vshll.u32 %v1869, 16
      %v1970 = vrot.slane %v1968, 5
      %v1971 = vsel %vm815, %v1966, %v1970
      %v1972 = vshrl.u32 %v1869, 16
      %v1974 = vrot.slane %v1972, 4
      %v1975 = vor.u32 %v1974, %v1970
      %v1976 = vrot.slane %v1975, 4
      %v1978 = vshll.u32 %v1870, 16
      %v1980 = vrot.slane %v1978, 5
      %v1981 = vsel %vm815, %v1976, %v1980
      %v1983 = vshrl.u32 %v1871, 16
      %v1985 = vrot.slane %v1983, 4
      %v1986 = vshll.u32 %v1871, 16
      %v1988 = vrot.slane %v1986, 5
      %v1989 = vor.u32 %v1985, %v1988
      %v1990 = vrot.slane %v1989, 4
      %v1992 = vshll.u32 %v1872, 16
      %v1994 = vrot.slane %v1992, 5
      %v1995 = vsel %vm815, %v1990, %v1994
      %v1996 = vshrl.u32 %v1872, 16
      %v1998 = vrot.slane %v1996, 4
      %v1999 = vor.u32 %v1998, %v1994
      %v2000 = vrot.slane %v1999, 4
      %v2002 = vshll.u32 %v1873, 16
      %v2004 = vrot.slane %v2002, 5
      %v2005 = vsel %vm815, %v2000, %v2004
      %v2007 = vshrl.u32 %v1874, 16
      %v2009 = vrot.slane %v2007, 4
      %v2010 = vshll.u32 %v1874, 16
      %v2012 = vrot.slane %v2010, 5
      %v2013 = vor.u32 %v2009, %v2012
      %v2014 = vrot.slane %v2013, 4
      %v2016 = vshll.u32 %v1875, 16
      %v2018 = vrot.slane %v2016, 5
      %v2019 = vsel %vm815, %v2014, %v2018
      %v2020 = vshrl.u32 %v1875, 16
      %v2022 = vrot.slane %v2020, 4
      %v2023 = vor.u32 %v2022, %v2018
      %v2024 = vrot.slane %v2023, 4
      %v2026 = vshll.u32 %v1876, 16
      %v2028 = vrot.slane %v2026, 5
      %v2029 = vsel %vm815, %v2024, %v2028
      %v2031 = vshrl.u32 %v1877, 16
      %v2033 = vrot.slane %v2031, 4
      %v2034 = vshll.u32 %v1877, 16
      %v2036 = vrot.slane %v2034, 5
      %v2037 = vor.u32 %v2033, %v2036
      %v2038 = vrot.slane %v2037, 4
      %v2040 = vshll.u32 %v1878, 16
      %v2042 = vrot.slane %v2040, 5
      %v2043 = vsel %vm815, %v2038, %v2042
      %v2044 = vshrl.u32 %v1878, 16
      %v2046 = vrot.slane %v2044, 4
      %v2047 = vor.u32 %v2046, %v2042
      %v2048 = vrot.slane %v2047, 4
      %v2050 = vshll.u32 %v1879, 16
      %v2052 = vrot.slane %v2050, 5
      %v2053 = vsel %vm815, %v2048, %v2052
      %v2055 = vshrl.u32 %v1880, 16
      %v2057 = vrot.slane %v2055, 4
      %v2058 = vshll.u32 %v1880, 16
      %v2060 = vrot.slane %v2058, 5
      %v2061 = vor.u32 %v2057, %v2060
      %v2062 = vrot.slane %v2061, 4
      %v2064 = vshll.u32 %v1881, 16
      %v2066 = vrot.slane %v2064, 5
      %v2067 = vsel %vm815, %v2062, %v2066
      %v2068 = vshrl.u32 %v1881, 16
      %v2070 = vrot.slane %v2068, 4
      %v2071 = vor.u32 %v2070, %v2066
      %v2072 = vrot.slane %v2071, 4
      %v2074 = vshll.u32 %v1882, 16
      %v2076 = vrot.slane %v2074, 5
      %v2077 = vsel %vm815, %v2072, %v2076
      %v2079 = vshrl.u32 %v1883, 16
      %v2081 = vrot.slane %v2079, 4
      %v2082 = vshll.u32 %v1883, 16
      %v2084 = vrot.slane %v2082, 5
      %v2085 = vor.u32 %v2081, %v2084
      %v2086 = vrot.slane %v2085, 4
      %v2088 = vshll.u32 %v1884, 16
      %v2090 = vrot.slane %v2088, 5
      %v2091 = vsel %vm815, %v2086, %v2090
      %v2092 = vshrl.u32 %v1884, 16
      %v2094 = vrot.slane %v2092, 4
      %v2095 = vor.u32 %v2094, %v2090
      %v2096 = vrot.slane %v2095, 4
      %v2098 = vshll.u32 %v1885, 16
      %v2100 = vrot.slane %v2098, 5
      %v2101 = vsel %vm815, %v2096, %v2100
      %v2103 = vshrl.u32 %v1886, 16
      %v2105 = vrot.slane %v2103, 4
      %v2106 = vshll.u32 %v1886, 16
      %v2108 = vrot.slane %v2106, 5
      %v2109 = vor.u32 %v2105, %v2108
      %v2110 = vrot.slane %v2109, 4
      %v2112 = vshll.u32 %v1887, 16
      %v2114 = vrot.slane %v2112, 5
      %v2115 = vsel %vm815, %v2110, %v2114
      %v2116 = vshrl.u32 %v1887, 16
      %v2118 = vrot.slane %v2116, 4
      %v2119 = vor.u32 %v2118, %v2114
      %v2120 = vrot.slane %v2119, 4
      %v2122 = vshll.u32 %v1888, 16
      %v2124 = vrot.slane %v2122, 5
      %v2125 = vsel %vm815, %v2120, %v2124
      %v2127 = vshrl.u32 %v1889, 16
      %v2129 = vrot.slane %v2127, 4
      %v2130 = vshll.u32 %v1889, 16
      %v2132 = vrot.slane %v2130, 5
      %v2133 = vor.u32 %v2129, %v2132
      %v2134 = vrot.slane %v2133, 4
      %v2136 = vshll.u32 %v1890, 16
      %v2138 = vrot.slane %v2136, 5
      %v2139 = vsel %vm815, %v2134, %v2138
      %v2140 = vshrl.u32 %v1890, 16
      %v2142 = vrot.slane %v2140, 4
      %v2143 = vor.u32 %v2142, %v2138
      %v2144 = vrot.slane %v2143, 4
      %v2146 = vshll.u32 %v1891, 16
      %v2148 = vrot.slane %v2146, 5
      %v2149 = vsel %vm815, %v2144, %v2148
      %v2151 = vshrl.u32 %v1892, 16
      %v2153 = vrot.slane %v2151, 4
      %v2154 = vshll.u32 %v1892, 16
      %v2156 = vrot.slane %v2154, 5
      %v2157 = vor.u32 %v2153, %v2156
      %v2158 = vrot.slane %v2157, 4
      %v2160 = vshll.u32 %v1893, 16
      %v2162 = vrot.slane %v2160, 5
      %v2163 = vsel %vm815, %v2158, %v2162
      %v2164 = vshrl.u32 %v1893, 16
      %v2166 = vrot.slane %v2164, 4
      %v2167 = vor.u32 %v2166, %v2162
      %v2168 = vrot.slane %v2167, 4
      %v2170 = vshll.u32 %v1894, 16
      %v2172 = vrot.slane %v2170, 5
      %v2173 = vsel %vm815, %v2168, %v2172
      %v2175 = vshrl.u32 %v1895, 16
      %v2177 = vrot.slane %v2175, 4
      %v2178 = vshll.u32 %v1895, 16
      %v2180 = vrot.slane %v2178, 5
      %v2181 = vor.u32 %v2177, %v2180
      %v2182 = vrot.slane %v2181, 4
      %v2184 = vshll.u32 %v1896, 16
      %v2186 = vrot.slane %v2184, 5
      %v2187 = vsel %vm815, %v2182, %v2186
      %v2188 = vshrl.u32 %v1896, 16
      %v2190 = vrot.slane %v2188, 4
      %v2191 = vor.u32 %v2190, %v2186
      %v2192 = vrot.slane %v2191, 4
      %v2194 = vshll.u32 %v1897, 16
      %v2196 = vrot.slane %v2194, 5
      %v2197 = vsel %vm815, %v2192, %v2196
      %v2199 = vshrl.u32 %v1898, 16
      %v2201 = vrot.slane %v2199, 4
      %v2202 = vshll.u32 %v1898, 16
      %v2204 = vrot.slane %v2202, 5
      %v2205 = vor.u32 %v2201, %v2204
      %v2206 = vrot.slane %v2205, 4
      %v2208 = vshll.u32 %v1899, 16
      %v2210 = vrot.slane %v2208, 5
      %v2211 = vsel %vm815, %v2206, %v2210
      %v2212 = vshrl.u32 %v1899, 16
      %v2214 = vrot.slane %v2212, 4
      %v2215 = vor.u32 %v2214, %v2210
      %v2216 = vrot.slane %v2215, 4
      %v2218 = vshll.u32 %v1900, 16
      %v2220 = vrot.slane %v2218, 5
      %v2221 = vsel %vm815, %v2216, %v2220
      %v2223 = vshrl.u32 %v1901, 16
      %v2225 = vrot.slane %v2223, 4
      %v2226 = vshll.u32 %v1901, 16
      %v2228 = vrot.slane %v2226, 5
      %v2229 = vor.u32 %v2225, %v2228
      %v2230 = vrot.slane %v2229, 4
      %v2232 = vshll.u32 %v1902, 16
      %v2234 = vrot.slane %v2232, 5
      %v2235 = vsel %vm815, %v2230, %v2234
      %v2236 = vshrl.u32 %v1902, 16
      %v2238 = vrot.slane %v2236, 4
      %v2239 = vor.u32 %v2238, %v2234
      %v2240 = vrot.slane %v2239, 4
      %v2242 = vshll.u32 %v1903, 16
      %v2244 = vrot.slane %v2242, 5
      %v2245 = vsel %vm815, %v2240, %v2244
      %v2247 = vshrl.u32 %v1904, 16
      %v2249 = vrot.slane %v2247, 4
      %v2250 = vshll.u32 %v1904, 16
      %v2252 = vrot.slane %v2250, 5
      %v2253 = vor.u32 %v2249, %v2252
      %v2254 = vrot.slane %v2253, 4
      %v2256 = vshll.u32 %v1905, 16
      %v2258 = vrot.slane %v2256, 5
      %v2259 = vsel %vm815, %v2254, %v2258
      %v2260 = vshrl.u32 %v1905, 16
      %v2262 = vrot.slane %v2260, 4
      %v2263 = vor.u32 %v2262, %v2258
      %v2264 = vrot.slane %v2263, 4
      %v2266 = vshll.u32 %v1906, 16
      %v2268 = vrot.slane %v2266, 5
      %v2269 = vsel %vm815, %v2264, %v2268
      %v2271 = vshrl.u32 %v1907, 16
      %v2273 = vrot.slane %v2271, 4
      %v2274 = vshll.u32 %v1907, 16
      %v2276 = vrot.slane %v2274, 5
      %v2277 = vor.u32 %v2273, %v2276
      %v2278 = vrot.slane %v2277, 4
      %v2280 = vshll.u32 %v1908, 16
      %v2282 = vrot.slane %v2280, 5
      %v2283 = vsel %vm815, %v2278, %v2282
      %v2284 = vshrl.u32 %v1908, 16
      %v2286 = vrot.slane %v2284, 4
      %v2287 = vor.u32 %v2286, %v2282
      %v2288 = vrot.slane %v2287, 4
      %v2290 = vshll.u32 %v1909, 16
      %v2292 = vrot.slane %v2290, 5
      %v2293 = vsel %vm815, %v2288, %v2292
      %2294 = vrot.lane.b32.xlu0 %v1923, 16
      %v2295 = vpop.permute.xlu0 %2294
      %2296 = vrot.lane.b32.xlu0 %v1933, 16
      %v2297 = vpop.permute.xlu0 %2296
      %2298 = vrot.lane.b32.xlu0 %v1947, 16
      %v2299 = vpop.permute.xlu0 %2298
      %2300 = vrot.lane.b32.xlu0 %v1957, 16
      %v2301 = vpop.permute.xlu0 %2300
      %2302 = vrot.lane.b32.xlu0 %v1971, 16
      %v2303 = vpop.permute.xlu0 %2302
      %2304 = vrot.lane.b32.xlu0 %v1981, 16
      %v2305 = vpop.permute.xlu0 %2304
      %2306 = vrot.lane.b32.xlu0 %v1995, 16
      %v2307 = vpop.permute.xlu0 %2306
      %2308 = vrot.lane.b32.xlu0 %v2005, 16
      %v2309 = vpop.permute.xlu0 %2308
      %2310 = vrot.lane.b32.xlu0 %v2019, 16
      %v2311 = vpop.permute.xlu0 %2310
      %2312 = vrot.lane.b32.xlu0 %v2029, 16
      %v2313 = vpop.permute.xlu0 %2312
      %2314 = vrot.lane.b32.xlu0 %v2043, 16
      %v2315 = vpop.permute.xlu0 %2314
      %2316 = vrot.lane.b32.xlu0 %v2053, 16
      %v2317 = vpop.permute.xlu0 %2316
      %2318 = vrot.lane.b32.xlu0 %v2067, 16
      %v2319 = vpop.permute.xlu0 %2318
      %2320 = vrot.lane.b32.xlu0 %v2077, 16
      %v2321 = vpop.permute.xlu0 %2320
      %2322 = vrot.lane.b32.xlu0 %v2091, 16
      %v2323 = vpop.permute.xlu0 %2322
      %2324 = vrot.lane.b32.xlu0 %v2101, 16
      %v2325 = vpop.permute.xlu0 %2324
      %2326 = vrot.lane.b32.xlu0 %v2115, 16
      %v2327 = vpop.permute.xlu0 %2326
      %2328 = vrot.lane.b32.xlu0 %v2125, 16
      %v2329 = vpop.permute.xlu0 %2328
      %2330 = vrot.lane.b32.xlu0 %v2139, 16
      %v2331 = vpop.permute.xlu0 %2330
      %2332 = vrot.lane.b32.xlu0 %v2149, 16
      %v2333 = vpop.permute.xlu0 %2332
      %2334 = vrot.lane.b32.xlu0 %v2163, 16
      %v2335 = vpop.permute.xlu0 %2334
      %2336 = vrot.lane.b32.xlu0 %v2173, 16
      %v2337 = vpop.permute.xlu0 %2336
      %2338 = vrot.lane.b32.xlu0 %v2187, 16
      %v2339 = vpop.permute.xlu0 %2338
      %2340 = vrot.lane.b32.xlu0 %v2197, 16
      %v2341 = vpop.permute.xlu0 %2340
      %2342 = vrot.lane.b32.xlu0 %v2211, 16
      %v2343 = vpop.permute.xlu0 %2342
      %2344 = vrot.lane.b32.xlu0 %v2221, 16
      %v2345 = vpop.permute.xlu0 %2344
      %2346 = vrot.lane.b32.xlu0 %v2235, 16
      %v2347 = vpop.permute.xlu0 %2346
      %2348 = vrot.lane.b32.xlu0 %v2245, 16
      %v2349 = vpop.permute.xlu0 %2348
      %2350 = vrot.lane.b32.xlu0 %v2259, 16
      %v2351 = vpop.permute.xlu0 %2350
      %2352 = vrot.lane.b32.xlu0 %v2269, 16
      %v2353 = vpop.permute.xlu0 %2352
      %2354 = vrot.lane.b32.xlu0 %v2283, 16
      %v2355 = vpop.permute.xlu0 %2354
      %2356 = vrot.lane.b32.xlu0 %v2293, 16
      %v2357 = vpop.permute.xlu0 %2356
      %vm2390 = vcmask 158848
      %2391 = vst.msk [vmem:[#allocation3] sm:$0xf] %vm2390, %v2295
      %2392 = vst.msk [vmem:[#allocation3 + $0x4] sm:$0xf] %vm2390, %v2297
      %2393 = vst.msk [vmem:[#allocation3 + $0x8] sm:$0xf] %vm2390, %v2299
      %2394 = vst.msk [vmem:[#allocation3 + $0xc] sm:$0xf] %vm2390, %v2301
      %2395 = vst.msk [vmem:[#allocation3 + $0x10] sm:$0xf] %vm2390, %v2303
      %2396 = vst.msk [vmem:[#allocation3 + $0x14] sm:$0xf] %vm2390, %v2305
      %2397 = vst.msk [vmem:[#allocation3 + $0x18] sm:$0xf] %vm2390, %v2307
      %2398 = vst.msk [vmem:[#allocation3 + $0x1c] sm:$0xf] %vm2390, %v2309
      %2399 = vst.msk [vmem:[#allocation3 + $0x20] sm:$0xf] %vm2390, %v2311
      %2400 = vst.msk [vmem:[#allocation3 + $0x24] sm:$0xf] %vm2390, %v2313
      %2401 = vst.msk [vmem:[#allocation3 + $0x28] sm:$0xf] %vm2390, %v2315
      %2402 = vst.msk [vmem:[#allocation3 + $0x2c] sm:$0xf] %vm2390, %v2317
      %2403 = vst.msk [vmem:[#allocation3 + $0x30] sm:$0xf] %vm2390, %v2319
      %2404 = vst.msk [vmem:[#allocation3 + $0x34] sm:$0xf] %vm2390, %v2321
      %2405 = vst.msk [vmem:[#allocation3 + $0x38] sm:$0xf] %vm2390, %v2323
      %2406 = vst.msk [vmem:[#allocation3 + $0x3c] sm:$0xf] %vm2390, %v2325
      %2407 = vst.msk [vmem:[#allocation3 + $0x40] sm:$0xf] %vm2390, %v2327
      %2408 = vst.msk [vmem:[#allocation3 + $0x44] sm:$0xf] %vm2390, %v2329
      %2409 = vst.msk [vmem:[#allocation3 + $0x48] sm:$0xf] %vm2390, %v2331
      %2410 = vst.msk [vmem:[#allocation3 + $0x4c] sm:$0xf] %vm2390, %v2333
      %2411 = vst.msk [vmem:[#allocation3 + $0x50] sm:$0xf] %vm2390, %v2335
      %2412 = vst.msk [vmem:[#allocation3 + $0x54] sm:$0xf] %vm2390, %v2337
      %2413 = vst.msk [vmem:[#allocation3 + $0x58] sm:$0xf] %vm2390, %v2339
      %2414 = vst.msk [vmem:[#allocation3 + $0x5c] sm:$0xf] %vm2390, %v2341
      %2415 = vst.msk [vmem:[#allocation3 + $0x60] sm:$0xf] %vm2390, %v2343
      %2416 = vst.msk [vmem:[#allocation3 + $0x64] sm:$0xf] %vm2390, %v2345
      %2417 = vst.msk [vmem:[#allocation3 + $0x68] sm:$0xf] %vm2390, %v2347
      %2418 = vst.msk [vmem:[#allocation3 + $0x6c] sm:$0xf] %vm2390, %v2349
      %2419 = vst.msk [vmem:[#allocation3 + $0x70] sm:$0xf] %vm2390, %v2351
      %2420 = vst.msk [vmem:[#allocation3 + $0x74] sm:$0xf] %vm2390, %v2353
      %2421 = vst.msk [vmem:[#allocation3 + $0x78] sm:$0xf] %vm2390, %v2355
      %2422 = vst.msk [vmem:[#allocation3 + $0x7c] sm:$0xf] %vm2390, %v2357
      %v2423 = vld [vmem:[%s583] sm:$0xe]
      %v2424 = vld [vmem:[%s583 + $0x4] sm:$0xf]
      %v2425 = vld [vmem:[%s583 + $0x8] sm:$0x1]
      %v2426 = vld [vmem:[%s583 + $0xc] sm:$0xe]
      %v2427 = vld [vmem:[%s583 + $0x10] sm:$0xf]
      %v2428 = vld [vmem:[%s583 + $0x14] sm:$0x1]
      %v2429 = vld [vmem:[%s583 + $0x18] sm:$0xe]
      %v2430 = vld [vmem:[%s583 + $0x1c] sm:$0xf]
      %v2431 = vld [vmem:[%s583 + $0x20] sm:$0x1]
      %v2432 = vld [vmem:[%s583 + $0x24] sm:$0xe]
      %v2433 = vld [vmem:[%s583 + $0x28] sm:$0xf]
      %v2434 = vld [vmem:[%s583 + $0x2c] sm:$0x1]
      %v2435 = vld [vmem:[%s583 + $0x30] sm:$0xe]
      %v2436 = vld [vmem:[%s583 + $0x34] sm:$0xf]
      %v2437 = vld [vmem:[%s583 + $0x38] sm:$0x1]
      %v2438 = vld [vmem:[%s583 + $0x3c] sm:$0xe]
      %v2439 = vld [vmem:[%s583 + $0x40] sm:$0xf]
      %v2440 = vld [vmem:[%s583 + $0x44] sm:$0x1]
      %v2441 = vld [vmem:[%s583 + $0x48] sm:$0xe]
      %v2442 = vld [vmem:[%s583 + $0x4c] sm:$0xf]
      %v2443 = vld [vmem:[%s583 + $0x50] sm:$0x1]
      %v2444 = vld [vmem:[%s583 + $0x54] sm:$0xe]
      %v2445 = vld [vmem:[%s583 + $0x58] sm:$0xf]
      %v2446 = vld [vmem:[%s583 + $0x5c] sm:$0x1]
      %v2447 = vld [vmem:[%s583 + $0x60] sm:$0xe]
      %v2448 = vld [vmem:[%s583 + $0x64] sm:$0xf]
      %v2449 = vld [vmem:[%s583 + $0x68] sm:$0x1]
      %v2450 = vld [vmem:[%s583 + $0x6c] sm:$0xe]
      %v2451 = vld [vmem:[%s583 + $0x70] sm:$0xf]
      %v2452 = vld [vmem:[%s583 + $0x74] sm:$0x1]
      %v2453 = vld [vmem:[%s583 + $0x78] sm:$0xe]
      %v2454 = vld [vmem:[%s583 + $0x7c] sm:$0xf]
      %v2455 = vld [vmem:[%s583 + $0x80] sm:$0x1]
      %v2456 = vld [vmem:[%s583 + $0x84] sm:$0xe]
      %v2457 = vld [vmem:[%s583 + $0x88] sm:$0xf]
      %v2458 = vld [vmem:[%s583 + $0x8c] sm:$0x1]
      %v2459 = vld [vmem:[%s583 + $0x90] sm:$0xe]
      %v2460 = vld [vmem:[%s583 + $0x94] sm:$0xf]
      %v2461 = vld [vmem:[%s583 + $0x98] sm:$0x1]
      %v2462 = vld [vmem:[%s583 + $0x9c] sm:$0xe]
      %v2463 = vld [vmem:[%s583 + $0xa0] sm:$0xf]
      %v2464 = vld [vmem:[%s583 + $0xa4] sm:$0x1]
      %v2465 = vld [vmem:[%s583 + $0xa8] sm:$0xe]
      %v2466 = vld [vmem:[%s583 + $0xac] sm:$0xf]
      %v2467 = vld [vmem:[%s583 + $0xb0] sm:$0x1]
      %v2468 = vld [vmem:[%s583 + $0xb4] sm:$0xe]
      %v2469 = vld [vmem:[%s583 + $0xb8] sm:$0xf]
      %v2470 = vld [vmem:[%s583 + $0xbc] sm:$0x1]
      %v2519 = vrot.slane %v2423, 5
      %v2520 = vrot.slane %v2519, 4
      %v2521 = vrot.slane %v2424, 5
      %v2522 = vsel %vm1427, %v2520, %v2521
      %v2523 = vrot.slane %v2521, 4
      %v2524 = vrot.slane %v2425, 5
      %v2525 = vsel %vm1427, %v2523, %v2524
      %v2526 = vrot.slane %v2426, 5
      %v2527 = vrot.slane %v2526, 4
      %v2528 = vrot.slane %v2427, 5
      %v2529 = vsel %vm1427, %v2527, %v2528
      %v2530 = vrot.slane %v2528, 4
      %v2531 = vrot.slane %v2428, 5
      %v2532 = vsel %vm1427, %v2530, %v2531
      %v2533 = vrot.slane %v2429, 5
      %v2534 = vrot.slane %v2533, 4
      %v2535 = vrot.slane %v2430, 5
      %v2536 = vsel %vm1427, %v2534, %v2535
      %v2537 = vrot.slane %v2535, 4
      %v2538 = vrot.slane %v2431, 5
      %v2539 = vsel %vm1427, %v2537, %v2538
      %v2540 = vrot.slane %v2432, 5
      %v2541 = vrot.slane %v2540, 4
      %v2542 = vrot.slane %v2433, 5
      %v2543 = vsel %vm1427, %v2541, %v2542
      %v2544 = vrot.slane %v2542, 4
      %v2545 = vrot.slane %v2434, 5
      %v2546 = vsel %vm1427, %v2544, %v2545
      %v2547 = vrot.slane %v2435, 5
      %v2548 = vrot.slane %v2547, 4
      %v2549 = vrot.slane %v2436, 5
      %v2550 = vsel %vm1427, %v2548, %v2549
      %v2551 = vrot.slane %v2549, 4
      %v2552 = vrot.slane %v2437, 5
      %v2553 = vsel %vm1427, %v2551, %v2552
      %v2554 = vrot.slane %v2438, 5
      %v2555 = vrot.slane %v2554, 4
      %v2556 = vrot.slane %v2439, 5
      %v2557 = vsel %vm1427, %v2555, %v2556
      %v2558 = vrot.slane %v2556, 4
      %v2559 = vrot.slane %v2440, 5
      %v2560 = vsel %vm1427, %v2558, %v2559
      %v2561 = vrot.slane %v2441, 5
      %v2562 = vrot.slane %v2561, 4
      %v2563 = vrot.slane %v2442, 5
      %v2564 = vsel %vm1427, %v2562, %v2563
      %v2565 = vrot.slane %v2563, 4
      %v2566 = vrot.slane %v2443, 5
      %v2567 = vsel %vm1427, %v2565, %v2566
      %v2568 = vrot.slane %v2444, 5
      %v2569 = vrot.slane %v2568, 4
      %v2570 = vrot.slane %v2445, 5
      %v2571 = vsel %vm1427, %v2569, %v2570
      %v2572 = vrot.slane %v2570, 4
      %v2573 = vrot.slane %v2446, 5
      %v2574 = vsel %vm1427, %v2572, %v2573
      %v2575 = vrot.slane %v2447, 5
      %v2576 = vrot.slane %v2575, 4
      %v2577 = vrot.slane %v2448, 5
      %v2578 = vsel %vm1427, %v2576, %v2577
      %v2579 = vrot.slane %v2577, 4
      %v2580 = vrot.slane %v2449, 5
      %v2581 = vsel %vm1427, %v2579, %v2580
      %v2582 = vrot.slane %v2450, 5
      %v2583 = vrot.slane %v2582, 4
      %v2584 = vrot.slane %v2451, 5
      %v2585 = vsel %vm1427, %v2583, %v2584
      %v2586 = vrot.slane %v2584, 4
      %v2587 = vrot.slane %v2452, 5
      %v2588 = vsel %vm1427, %v2586, %v2587
      %v2589 = vrot.slane %v2453, 5
      %v2590 = vrot.slane %v2589, 4
      %v2591 = vrot.slane %v2454, 5
      %v2592 = vsel %vm1427, %v2590, %v2591
      %v2593 = vrot.slane %v2591, 4
      %v2594 = vrot.slane %v2455, 5
      %v2595 = vsel %vm1427, %v2593, %v2594
      %v2596 = vrot.slane %v2456, 5
      %v2597 = vrot.slane %v2596, 4
      %v2598 = vrot.slane %v2457, 5
      %v2599 = vsel %vm1427, %v2597, %v2598
      %v2600 = vrot.slane %v2598, 4
      %v2601 = vrot.slane %v2458, 5
      %v2602 = vsel %vm1427, %v2600, %v2601
      %v2603 = vrot.slane %v2459, 5
      %v2604 = vrot.slane %v2603, 4
      %v2605 = vrot.slane %v2460, 5
      %v2606 = vsel %vm1427, %v2604, %v2605
      %v2607 = vrot.slane %v2605, 4
      %v2608 = vrot.slane %v2461, 5
      %v2609 = vsel %vm1427, %v2607, %v2608
      %v2610 = vrot.slane %v2462, 5
      %v2611 = vrot.slane %v2610, 4
      %v2612 = vrot.slane %v2463, 5
      %v2613 = vsel %vm1427, %v2611, %v2612
      %v2614 = vrot.slane %v2612, 4
      %v2615 = vrot.slane %v2464, 5
      %v2616 = vsel %vm1427, %v2614, %v2615
      %v2617 = vrot.slane %v2465, 5
      %v2618 = vrot.slane %v2617, 4
      %v2619 = vrot.slane %v2466, 5
      %v2620 = vsel %vm1427, %v2618, %v2619
      %v2621 = vrot.slane %v2619, 4
      %v2622 = vrot.slane %v2467, 5
      %v2623 = vsel %vm1427, %v2621, %v2622
      %v2624 = vrot.slane %v2468, 5
      %v2625 = vrot.slane %v2624, 4
      %v2626 = vrot.slane %v2469, 5
      %v2627 = vsel %vm1427, %v2625, %v2626
      %v2628 = vrot.slane %v2626, 4
      %v2629 = vrot.slane %v2470, 5
      %v2630 = vsel %vm1427, %v2628, %v2629
      %2631 = vrot.lane.b32.xlu0 %v2522, 20
      %v2632 = vpop.permute.xlu0 %2631
      %2633 = vrot.lane.b32.xlu0 %v2525, 20
      %v2634 = vpop.permute.xlu0 %2633
      %2635 = vrot.lane.b32.xlu0 %v2529, 20
      %v2636 = vpop.permute.xlu0 %2635
      %2637 = vrot.lane.b32.xlu0 %v2532, 20
      %v2638 = vpop.permute.xlu0 %2637
      %2639 = vrot.lane.b32.xlu0 %v2536, 20
      %v2640 = vpop.permute.xlu0 %2639
      %2641 = vrot.lane.b32.xlu0 %v2539, 20
      %v2642 = vpop.permute.xlu0 %2641
      %2643 = vrot.lane.b32.xlu0 %v2543, 20
      %v2644 = vpop.permute.xlu0 %2643
      %2645 = vrot.lane.b32.xlu0 %v2546, 20
      %v2646 = vpop.permute.xlu0 %2645
      %2647 = vrot.lane.b32.xlu0 %v2550, 20
      %v2648 = vpop.permute.xlu0 %2647
      %2649 = vrot.lane.b32.xlu0 %v2553, 20
      %v2650 = vpop.permute.xlu0 %2649
      %2651 = vrot.lane.b32.xlu0 %v2557, 20
      %v2652 = vpop.permute.xlu0 %2651
      %2653 = vrot.lane.b32.xlu0 %v2560, 20
      %v2654 = vpop.permute.xlu0 %2653
      %2655 = vrot.lane.b32.xlu0 %v2564, 20
      %v2656 = vpop.permute.xlu0 %2655
      %2657 = vrot.lane.b32.xlu0 %v2567, 20
      %v2658 = vpop.permute.xlu0 %2657
      %2659 = vrot.lane.b32.xlu0 %v2571, 20
      %v2660 = vpop.permute.xlu0 %2659
      %2661 = vrot.lane.b32.xlu0 %v2574, 20
      %v2662 = vpop.permute.xlu0 %2661
      %2663 = vrot.lane.b32.xlu0 %v2578, 20
      %v2664 = vpop.permute.xlu0 %2663
      %2665 = vrot.lane.b32.xlu0 %v2581, 20
      %v2666 = vpop.permute.xlu0 %2665
      %2667 = vrot.lane.b32.xlu0 %v2585, 20
      %v2668 = vpop.permute.xlu0 %2667
      %2669 = vrot.lane.b32.xlu0 %v2588, 20
      %v2670 = vpop.permute.xlu0 %2669
      %2671 = vrot.lane.b32.xlu0 %v2592, 20
      %v2672 = vpop.permute.xlu0 %2671
      %2673 = vrot.lane.b32.xlu0 %v2595, 20
      %v2674 = vpop.permute.xlu0 %2673
      %2675 = vrot.lane.b32.xlu0 %v2599, 20
      %v2676 = vpop.permute.xlu0 %2675
      %2677 = vrot.lane.b32.xlu0 %v2602, 20
      %v2678 = vpop.permute.xlu0 %2677
      %2679 = vrot.lane.b32.xlu0 %v2606, 20
      %v2680 = vpop.permute.xlu0 %2679
      %2681 = vrot.lane.b32.xlu0 %v2609, 20
      %v2682 = vpop.permute.xlu0 %2681
      %2683 = vrot.lane.b32.xlu0 %v2613, 20
      %v2684 = vpop.permute.xlu0 %2683
      %2685 = vrot.lane.b32.xlu0 %v2616, 20
      %v2686 = vpop.permute.xlu0 %2685
      %2687 = vrot.lane.b32.xlu0 %v2620, 20
      %v2688 = vpop.permute.xlu0 %2687
      %2689 = vrot.lane.b32.xlu0 %v2623, 20
      %v2690 = vpop.permute.xlu0 %2689
      %2691 = vrot.lane.b32.xlu0 %v2627, 20
      %v2692 = vpop.permute.xlu0 %2691
      %2693 = vrot.lane.b32.xlu0 %v2630, 20
      %v2694 = vpop.permute.xlu0 %2693
      %vm2727 = vcmask 191648
      %2728 = vst.msk [vmem:[#allocation3] sm:$0xf] %vm2727, %v2632
      %2729 = vst.msk [vmem:[#allocation3 + $0x4] sm:$0xf] %vm2727, %v2634
      %2730 = vst.msk [vmem:[#allocation3 + $0x8] sm:$0xf] %vm2727, %v2636
      %2731 = vst.msk [vmem:[#allocation3 + $0xc] sm:$0xf] %vm2727, %v2638
      %2732 = vst.msk [vmem:[#allocation3 + $0x10] sm:$0xf] %vm2727, %v2640
      %2733 = vst.msk [vmem:[#allocation3 + $0x14] sm:$0xf] %vm2727, %v2642
      %2734 = vst.msk [vmem:[#allocation3 + $0x18] sm:$0xf] %vm2727, %v2644
      %2735 = vst.msk [vmem:[#allocation3 + $0x1c] sm:$0xf] %vm2727, %v2646
      %2736 = vst.msk [vmem:[#allocation3 + $0x20] sm:$0xf] %vm2727, %v2648
      %2737 = vst.msk [vmem:[#allocation3 + $0x24] sm:$0xf] %vm2727, %v2650
      %2738 = vst.msk [vmem:[#allocation3 + $0x28] sm:$0xf] %vm2727, %v2652
      %2739 = vst.msk [vmem:[#allocation3 + $0x2c] sm:$0xf] %vm2727, %v2654
      %2740 = vst.msk [vmem:[#allocation3 + $0x30] sm:$0xf] %vm2727, %v2656
      %2741 = vst.msk [vmem:[#allocation3 + $0x34] sm:$0xf] %vm2727, %v2658
      %2742 = vst.msk [vmem:[#allocation3 + $0x38] sm:$0xf] %vm2727, %v2660
      %2743 = vst.msk [vmem:[#allocation3 + $0x3c] sm:$0xf] %vm2727, %v2662
      %2744 = vst.msk [vmem:[#allocation3 + $0x40] sm:$0xf] %vm2727, %v2664
      %2745 = vst.msk [vmem:[#allocation3 + $0x44] sm:$0xf] %vm2727, %v2666
      %2746 = vst.msk [vmem:[#allocation3 + $0x48] sm:$0xf] %vm2727, %v2668
      %2747 = vst.msk [vmem:[#allocation3 + $0x4c] sm:$0xf] %vm2727, %v2670
      %2748 = vst.msk [vmem:[#allocation3 + $0x50] sm:$0xf] %vm2727, %v2672
      %2749 = vst.msk [vmem:[#allocation3 + $0x54] sm:$0xf] %vm2727, %v2674
      %2750 = vst.msk [vmem:[#allocation3 + $0x58] sm:$0xf] %vm2727, %v2676
      %2751 = vst.msk [vmem:[#allocation3 + $0x5c] sm:$0xf] %vm2727, %v2678
      %2752 = vst.msk [vmem:[#allocation3 + $0x60] sm:$0xf] %vm2727, %v2680
      %2753 = vst.msk [vmem:[#allocation3 + $0x64] sm:$0xf] %vm2727, %v2682
      %2754 = vst.msk [vmem:[#allocation3 + $0x68] sm:$0xf] %vm2727, %v2684
      %2755 = vst.msk [vmem:[#allocation3 + $0x6c] sm:$0xf] %vm2727, %v2686
      %2756 = vst.msk [vmem:[#allocation3 + $0x70] sm:$0xf] %vm2727, %v2688
      %2757 = vst.msk [vmem:[#allocation3 + $0x74] sm:$0xf] %vm2727, %v2690
      %2758 = vst.msk [vmem:[#allocation3 + $0x78] sm:$0xf] %vm2727, %v2692
      %2759 = vst.msk [vmem:[#allocation3 + $0x7c] sm:$0xf] %vm2727, %v2694
      %s2760 = scalar_lea.vmem [#allocation2], 24
      %v2761 = vld [vmem:[%s2760] sm:$0xf]
      %v2762 = vld [vmem:[%s2760 + $0x4] sm:$0xf]
      %v2763 = vld [vmem:[%s2760 + $0xc] sm:$0xf]
      %v2764 = vld [vmem:[%s2760 + $0x10] sm:$0xf]
      %v2765 = vld [vmem:[%s2760 + $0x18] sm:$0xf]
      %v2766 = vld [vmem:[%s2760 + $0x1c] sm:$0xf]
      %v2767 = vld [vmem:[%s2760 + $0x24] sm:$0xf]
      %v2768 = vld [vmem:[%s2760 + $0x28] sm:$0xf]
      %v2769 = vld [vmem:[%s2760 + $0x30] sm:$0xf]
      %v2770 = vld [vmem:[%s2760 + $0x34] sm:$0xf]
      %v2771 = vld [vmem:[%s2760 + $0x3c] sm:$0xf]
      %v2772 = vld [vmem:[%s2760 + $0x40] sm:$0xf]
      %v2773 = vld [vmem:[%s2760 + $0x48] sm:$0xf]
      %v2774 = vld [vmem:[%s2760 + $0x4c] sm:$0xf]
      %v2775 = vld [vmem:[%s2760 + $0x54] sm:$0xf]
      %v2776 = vld [vmem:[%s2760 + $0x58] sm:$0xf]
      %v2777 = vld [vmem:[%s2760 + $0x60] sm:$0xf]
      %v2778 = vld [vmem:[%s2760 + $0x64] sm:$0xf]
      %v2779 = vld [vmem:[%s2760 + $0x6c] sm:$0xf]
      %v2780 = vld [vmem:[%s2760 + $0x70] sm:$0xf]
      %v2781 = vld [vmem:[%s2760 + $0x78] sm:$0xf]
      %v2782 = vld [vmem:[%s2760 + $0x7c] sm:$0xf]
      %v2783 = vld [vmem:[%s2760 + $0x84] sm:$0xf]
      %v2784 = vld [vmem:[%s2760 + $0x88] sm:$0xf]
      %v2785 = vld [vmem:[%s2760 + $0x90] sm:$0xf]
      %v2786 = vld [vmem:[%s2760 + $0x94] sm:$0xf]
      %v2787 = vld [vmem:[%s2760 + $0x9c] sm:$0xf]
      %v2788 = vld [vmem:[%s2760 + $0xa0] sm:$0xf]
      %v2789 = vld [vmem:[%s2760 + $0xa8] sm:$0xf]
      %v2790 = vld [vmem:[%s2760 + $0xac] sm:$0xf]
      %v2791 = vld [vmem:[%s2760 + $0xb4] sm:$0xf]
      %v2792 = vld [vmem:[%s2760 + $0xb8] sm:$0xf]
      %2825 = vrot.lane.b32.xlu0 %v2761, 24
      %v2826 = vpop.permute.xlu0 %2825
      %2827 = vrot.lane.b32.xlu0 %v2762, 24
      %v2828 = vpop.permute.xlu0 %2827
      %2829 = vrot.lane.b32.xlu0 %v2763, 24
      %v2830 = vpop.permute.xlu0 %2829
      %2831 = vrot.lane.b32.xlu0 %v2764, 24
      %v2832 = vpop.permute.xlu0 %2831
      %2833 = vrot.lane.b32.xlu0 %v2765, 24
      %v2834 = vpop.permute.xlu0 %2833
      %2835 = vrot.lane.b32.xlu0 %v2766, 24
      %v2836 = vpop.permute.xlu0 %2835
      %2837 = vrot.lane.b32.xlu0 %v2767, 24
      %v2838 = vpop.permute.xlu0 %2837
      %2839 = vrot.lane.b32.xlu0 %v2768, 24
      %v2840 = vpop.permute.xlu0 %2839
      %2841 = vrot.lane.b32.xlu0 %v2769, 24
      %v2842 = vpop.permute.xlu0 %2841
      %2843 = vrot.lane.b32.xlu0 %v2770, 24
      %v2844 = vpop.permute.xlu0 %2843
      %2845 = vrot.lane.b32.xlu0 %v2771, 24
      %v2846 = vpop.permute.xlu0 %2845
      %2847 = vrot.lane.b32.xlu0 %v2772, 24
      %v2848 = vpop.permute.xlu0 %2847
      %2849 = vrot.lane.b32.xlu0 %v2773, 24
      %v2850 = vpop.permute.xlu0 %2849
      %2851 = vrot.lane.b32.xlu0 %v2774, 24
      %v2852 = vpop.permute.xlu0 %2851
      %2853 = vrot.lane.b32.xlu0 %v2775, 24
      %v2854 = vpop.permute.xlu0 %2853
      %2855 = vrot.lane.b32.xlu0 %v2776, 24
      %v2856 = vpop.permute.xlu0 %2855
      %2857 = vrot.lane.b32.xlu0 %v2777, 24
      %v2858 = vpop.permute.xlu0 %2857
      %2859 = vrot.lane.b32.xlu0 %v2778, 24
      %v2860 = vpop.permute.xlu0 %2859
      %2861 = vrot.lane.b32.xlu0 %v2779, 24
      %v2862 = vpop.permute.xlu0 %2861
      %2863 = vrot.lane.b32.xlu0 %v2780, 24
      %v2864 = vpop.permute.xlu0 %2863
      %2865 = vrot.lane.b32.xlu0 %v2781, 24
      %v2866 = vpop.permute.xlu0 %2865
      %2867 = vrot.lane.b32.xlu0 %v2782, 24
      %v2868 = vpop.permute.xlu0 %2867
      %2869 = vrot.lane.b32.xlu0 %v2783, 24
      %v2870 = vpop.permute.xlu0 %2869
      %2871 = vrot.lane.b32.xlu0 %v2784, 24
      %v2872 = vpop.permute.xlu0 %2871
      %2873 = vrot.lane.b32.xlu0 %v2785, 24
      %v2874 = vpop.permute.xlu0 %2873
      %2875 = vrot.lane.b32.xlu0 %v2786, 24
      %v2876 = vpop.permute.xlu0 %2875
      %2877 = vrot.lane.b32.xlu0 %v2787, 24
      %v2878 = vpop.permute.xlu0 %2877
      %2879 = vrot.lane.b32.xlu0 %v2788, 24
      %v2880 = vpop.permute.xlu0 %2879
      %2881 = vrot.lane.b32.xlu0 %v2789, 24
      %v2882 = vpop.permute.xlu0 %2881
      %2883 = vrot.lane.b32.xlu0 %v2790, 24
      %v2884 = vpop.permute.xlu0 %2883
      %2885 = vrot.lane.b32.xlu0 %v2791, 24
      %v2886 = vpop.permute.xlu0 %2885
      %2887 = vrot.lane.b32.xlu0 %v2792, 24
      %v2888 = vpop.permute.xlu0 %2887
      %vm2921 = vcmask 224448
      %2922 = vst.msk [vmem:[#allocation3] sm:$0xf] %vm2921, %v2826
      %2923 = vst.msk [vmem:[#allocation3 + $0x4] sm:$0xf] %vm2921, %v2828
      %2924 = vst.msk [vmem:[#allocation3 + $0x8] sm:$0xf] %vm2921, %v2830
      %2925 = vst.msk [vmem:[#allocation3 + $0xc] sm:$0xf] %vm2921, %v2832
      %2926 = vst.msk [vmem:[#allocation3 + $0x10] sm:$0xf] %vm2921, %v2834
      %2927 = vst.msk [vmem:[#allocation3 + $0x14] sm:$0xf] %vm2921, %v2836
      %2928 = vst.msk [vmem:[#allocation3 + $0x18] sm:$0xf] %vm2921, %v2838
      %2929 = vst.msk [vmem:[#allocation3 + $0x1c] sm:$0xf] %vm2921, %v2840
      %2930 = vst.msk [vmem:[#allocation3 + $0x20] sm:$0xf] %vm2921, %v2842
      %2931 = vst.msk [vmem:[#allocation3 + $0x24] sm:$0xf] %vm2921, %v2844
      %2932 = vst.msk [vmem:[#allocation3 + $0x28] sm:$0xf] %vm2921, %v2846
      %2933 = vst.msk [vmem:[#allocation3 + $0x2c] sm:$0xf] %vm2921, %v2848
      %2934 = vst.msk [vmem:[#allocation3 + $0x30] sm:$0xf] %vm2921, %v2850
      %2935 = vst.msk [vmem:[#allocation3 + $0x34] sm:$0xf] %vm2921, %v2852
      %2936 = vst.msk [vmem:[#allocation3 + $0x38] sm:$0xf] %vm2921, %v2854
      %2937 = vst.msk [vmem:[#allocation3 + $0x3c] sm:$0xf] %vm2921, %v2856
      %2938 = vst.msk [vmem:[#allocation3 + $0x40] sm:$0xf] %vm2921, %v2858
      %2939 = vst.msk [vmem:[#allocation3 + $0x44] sm:$0xf] %vm2921, %v2860
      %2940 = vst.msk [vmem:[#allocation3 + $0x48] sm:$0xf] %vm2921, %v2862
      %2941 = vst.msk [vmem:[#allocation3 + $0x4c] sm:$0xf] %vm2921, %v2864
      %2942 = vst.msk [vmem:[#allocation3 + $0x50] sm:$0xf] %vm2921, %v2866
      %2943 = vst.msk [vmem:[#allocation3 + $0x54] sm:$0xf] %vm2921, %v2868
      %2944 = vst.msk [vmem:[#allocation3 + $0x58] sm:$0xf] %vm2921, %v2870
      %2945 = vst.msk [vmem:[#allocation3 + $0x5c] sm:$0xf] %vm2921, %v2872
      %2946 = vst.msk [vmem:[#allocation3 + $0x60] sm:$0xf] %vm2921, %v2874
      %2947 = vst.msk [vmem:[#allocation3 + $0x64] sm:$0xf] %vm2921, %v2876
      %2948 = vst.msk [vmem:[#allocation3 + $0x68] sm:$0xf] %vm2921, %v2878
      %2949 = vst.msk [vmem:[#allocation3 + $0x6c] sm:$0xf] %vm2921, %v2880
      %2950 = vst.msk [vmem:[#allocation3 + $0x70] sm:$0xf] %vm2921, %v2882
      %2951 = vst.msk [vmem:[#allocation3 + $0x74] sm:$0xf] %vm2921, %v2884
      %2952 = vst.msk [vmem:[#allocation3 + $0x78] sm:$0xf] %vm2921, %v2886
      %2953 = vst.msk [vmem:[#allocation3 + $0x7c] sm:$0xf] %vm2921, %v2888
      %v2954 = vld [vmem:[%s2760] sm:$0xf]
      %v2955 = vld [vmem:[%s2760 + $0x4] sm:$0xf]
      %v2956 = vld [vmem:[%s2760 + $0x8] sm:$0x1]
      %v2957 = vld [vmem:[%s2760 + $0xc] sm:$0xf]
      %v2958 = vld [vmem:[%s2760 + $0x10] sm:$0xf]
      %v2959 = vld [vmem:[%s2760 + $0x14] sm:$0x1]
      %v2960 = vld [vmem:[%s2760 + $0x18] sm:$0xf]
      %v2961 = vld [vmem:[%s2760 + $0x1c] sm:$0xf]
      %v2962 = vld [vmem:[%s2760 + $0x20] sm:$0x1]
      %v2963 = vld [vmem:[%s2760 + $0x24] sm:$0xf]
      %v2964 = vld [vmem:[%s2760 + $0x28] sm:$0xf]
      %v2965 = vld [vmem:[%s2760 + $0x2c] sm:$0x1]
      %v2966 = vld [vmem:[%s2760 + $0x30] sm:$0xf]
      %v2967 = vld [vmem:[%s2760 + $0x34] sm:$0xf]
      %v2968 = vld [vmem:[%s2760 + $0x38] sm:$0x1]
      %v2969 = vld [vmem:[%s2760 + $0x3c] sm:$0xf]
      %v2970 = vld [vmem:[%s2760 + $0x40] sm:$0xf]
      %v2971 = vld [vmem:[%s2760 + $0x44] sm:$0x1]
      %v2972 = vld [vmem:[%s2760 + $0x48] sm:$0xf]
      %v2973 = vld [vmem:[%s2760 + $0x4c] sm:$0xf]
      %v2974 = vld [vmem:[%s2760 + $0x50] sm:$0x1]
      %v2975 = vld [vmem:[%s2760 + $0x54] sm:$0xf]
      %v2976 = vld [vmem:[%s2760 + $0x58] sm:$0xf]
      %v2977 = vld [vmem:[%s2760 + $0x5c] sm:$0x1]
      %v2978 = vld [vmem:[%s2760 + $0x60] sm:$0xf]
      %v2979 = vld [vmem:[%s2760 + $0x64] sm:$0xf]
      %v2980 = vld [vmem:[%s2760 + $0x68] sm:$0x1]
      %v2981 = vld [vmem:[%s2760 + $0x6c] sm:$0xf]
      %v2982 = vld [vmem:[%s2760 + $0x70] sm:$0xf]
      %v2983 = vld [vmem:[%s2760 + $0x74] sm:$0x1]
      %v2984 = vld [vmem:[%s2760 + $0x78] sm:$0xf]
      %v2985 = vld [vmem:[%s2760 + $0x7c] sm:$0xf]
      %v2986 = vld [vmem:[%s2760 + $0x80] sm:$0x1]
      %v2987 = vld [vmem:[%s2760 + $0x84] sm:$0xf]
      %v2988 = vld [vmem:[%s2760 + $0x88] sm:$0xf]
      %v2989 = vld [vmem:[%s2760 + $0x8c] sm:$0x1]
      %v2990 = vld [vmem:[%s2760 + $0x90] sm:$0xf]
      %v2991 = vld [vmem:[%s2760 + $0x94] sm:$0xf]
      %v2992 = vld [vmem:[%s2760 + $0x98] sm:$0x1]
      %v2993 = vld [vmem:[%s2760 + $0x9c] sm:$0xf]
      %v2994 = vld [vmem:[%s2760 + $0xa0] sm:$0xf]
      %v2995 = vld [vmem:[%s2760 + $0xa4] sm:$0x1]
      %v2996 = vld [vmem:[%s2760 + $0xa8] sm:$0xf]
      %v2997 = vld [vmem:[%s2760 + $0xac] sm:$0xf]
      %v2998 = vld [vmem:[%s2760 + $0xb0] sm:$0x1]
      %v2999 = vld [vmem:[%s2760 + $0xb4] sm:$0xf]
      %v3000 = vld [vmem:[%s2760 + $0xb8] sm:$0xf]
      %v3001 = vld [vmem:[%s2760 + $0xbc] sm:$0x1]
      %v3003 = vshrl.u32 %v2954, 16
      %v3005 = vrot.slane %v3003, 4
      %v3006 = vshll.u32 %v2954, 16
      %v3008 = vrot.slane %v3006, 5
      %v3009 = vor.u32 %v3005, %v3008
      %v3010 = vrot.slane %v3009, 4
      %v3012 = vshll.u32 %v2955, 16
      %v3014 = vrot.slane %v3012, 5
      %v3015 = vsel %vm815, %v3010, %v3014
      %v3016 = vshrl.u32 %v2955, 16
      %v3018 = vrot.slane %v3016, 4
      %v3019 = vor.u32 %v3018, %v3014
      %v3020 = vrot.slane %v3019, 4
      %v3022 = vshll.u32 %v2956, 16
      %v3024 = vrot.slane %v3022, 5
      %v3025 = vsel %vm815, %v3020, %v3024
      %v3027 = vshrl.u32 %v2957, 16
      %v3029 = vrot.slane %v3027, 4
      %v3030 = vshll.u32 %v2957, 16
      %v3032 = vrot.slane %v3030, 5
      %v3033 = vor.u32 %v3029, %v3032
      %v3034 = vrot.slane %v3033, 4
      %v3036 = vshll.u32 %v2958, 16
      %v3038 = vrot.slane %v3036, 5
      %v3039 = vsel %vm815, %v3034, %v3038
      %v3040 = vshrl.u32 %v2958, 16
      %v3042 = vrot.slane %v3040, 4
      %v3043 = vor.u32 %v3042, %v3038
      %v3044 = vrot.slane %v3043, 4
      %v3046 = vshll.u32 %v2959, 16
      %v3048 = vrot.slane %v3046, 5
      %v3049 = vsel %vm815, %v3044, %v3048
      %v3051 = vshrl.u32 %v2960, 16
      %v3053 = vrot.slane %v3051, 4
      %v3054 = vshll.u32 %v2960, 16
      %v3056 = vrot.slane %v3054, 5
      %v3057 = vor.u32 %v3053, %v3056
      %v3058 = vrot.slane %v3057, 4
      %v3060 = vshll.u32 %v2961, 16
      %v3062 = vrot.slane %v3060, 5
      %v3063 = vsel %vm815, %v3058, %v3062
      %v3064 = vshrl.u32 %v2961, 16
      %v3066 = vrot.slane %v3064, 4
      %v3067 = vor.u32 %v3066, %v3062
      %v3068 = vrot.slane %v3067, 4
      %v3070 = vshll.u32 %v2962, 16
      %v3072 = vrot.slane %v3070, 5
      %v3073 = vsel %vm815, %v3068, %v3072
      %v3075 = vshrl.u32 %v2963, 16
      %v3077 = vrot.slane %v3075, 4
      %v3078 = vshll.u32 %v2963, 16
      %v3080 = vrot.slane %v3078, 5
      %v3081 = vor.u32 %v3077, %v3080
      %v3082 = vrot.slane %v3081, 4
      %v3084 = vshll.u32 %v2964, 16
      %v3086 = vrot.slane %v3084, 5
      %v3087 = vsel %vm815, %v3082, %v3086
      %v3088 = vshrl.u32 %v2964, 16
      %v3090 = vrot.slane %v3088, 4
      %v3091 = vor.u32 %v3090, %v3086
      %v3092 = vrot.slane %v3091, 4
      %v3094 = vshll.u32 %v2965, 16
      %v3096 = vrot.slane %v3094, 5
      %v3097 = vsel %vm815, %v3092, %v3096
      %v3099 = vshrl.u32 %v2966, 16
      %v3101 = vrot.slane %v3099, 4
      %v3102 = vshll.u32 %v2966, 16
      %v3104 = vrot.slane %v3102, 5
      %v3105 = vor.u32 %v3101, %v3104
      %v3106 = vrot.slane %v3105, 4
      %v3108 = vshll.u32 %v2967, 16
      %v3110 = vrot.slane %v3108, 5
      %v3111 = vsel %vm815, %v3106, %v3110
      %v3112 = vshrl.u32 %v2967, 16
      %v3114 = vrot.slane %v3112, 4
      %v3115 = vor.u32 %v3114, %v3110
      %v3116 = vrot.slane %v3115, 4
      %v3118 = vshll.u32 %v2968, 16
      %v3120 = vrot.slane %v3118, 5
      %v3121 = vsel %vm815, %v3116, %v3120
      %v3123 = vshrl.u32 %v2969, 16
      %v3125 = vrot.slane %v3123, 4
      %v3126 = vshll.u32 %v2969, 16
      %v3128 = vrot.slane %v3126, 5
      %v3129 = vor.u32 %v3125, %v3128
      %v3130 = vrot.slane %v3129, 4
      %v3132 = vshll.u32 %v2970, 16
      %v3134 = vrot.slane %v3132, 5
      %v3135 = vsel %vm815, %v3130, %v3134
      %v3136 = vshrl.u32 %v2970, 16
      %v3138 = vrot.slane %v3136, 4
      %v3139 = vor.u32 %v3138, %v3134
      %v3140 = vrot.slane %v3139, 4
      %v3142 = vshll.u32 %v2971, 16
      %v3144 = vrot.slane %v3142, 5
      %v3145 = vsel %vm815, %v3140, %v3144
      %v3147 = vshrl.u32 %v2972, 16
      %v3149 = vrot.slane %v3147, 4
      %v3150 = vshll.u32 %v2972, 16
      %v3152 = vrot.slane %v3150, 5
      %v3153 = vor.u32 %v3149, %v3152
      %v3154 = vrot.slane %v3153, 4
      %v3156 = vshll.u32 %v2973, 16
      %v3158 = vrot.slane %v3156, 5
      %v3159 = vsel %vm815, %v3154, %v3158
      %v3160 = vshrl.u32 %v2973, 16
      %v3162 = vrot.slane %v3160, 4
      %v3163 = vor.u32 %v3162, %v3158
      %v3164 = vrot.slane %v3163, 4
      %v3166 = vshll.u32 %v2974, 16
      %v3168 = vrot.slane %v3166, 5
      %v3169 = vsel %vm815, %v3164, %v3168
      %v3171 = vshrl.u32 %v2975, 16
      %v3173 = vrot.slane %v3171, 4
      %v3174 = vshll.u32 %v2975, 16
      %v3176 = vrot.slane %v3174, 5
      %v3177 = vor.u32 %v3173, %v3176
      %v3178 = vrot.slane %v3177, 4
      %v3180 = vshll.u32 %v2976, 16
      %v3182 = vrot.slane %v3180, 5
      %v3183 = vsel %vm815, %v3178, %v3182
      %v3184 = vshrl.u32 %v2976, 16
      %v3186 = vrot.slane %v3184, 4
      %v3187 = vor.u32 %v3186, %v3182
      %v3188 = vrot.slane %v3187, 4
      %v3190 = vshll.u32 %v2977, 16
      %v3192 = vrot.slane %v3190, 5
      %v3193 = vsel %vm815, %v3188, %v3192
      %v3195 = vshrl.u32 %v2978, 16
      %v3197 = vrot.slane %v3195, 4
      %v3198 = vshll.u32 %v2978, 16
      %v3200 = vrot.slane %v3198, 5
      %v3201 = vor.u32 %v3197, %v3200
      %v3202 = vrot.slane %v3201, 4
      %v3204 = vshll.u32 %v2979, 16
      %v3206 = vrot.slane %v3204, 5
      %v3207 = vsel %vm815, %v3202, %v3206
      %v3208 = vshrl.u32 %v2979, 16
      %v3210 = vrot.slane %v3208, 4
      %v3211 = vor.u32 %v3210, %v3206
      %v3212 = vrot.slane %v3211, 4
      %v3214 = vshll.u32 %v2980, 16
      %v3216 = vrot.slane %v3214, 5
      %v3217 = vsel %vm815, %v3212, %v3216
      %v3219 = vshrl.u32 %v2981, 16
      %v3221 = vrot.slane %v3219, 4
      %v3222 = vshll.u32 %v2981, 16
      %v3224 = vrot.slane %v3222, 5
      %v3225 = vor.u32 %v3221, %v3224
      %v3226 = vrot.slane %v3225, 4
      %v3228 = vshll.u32 %v2982, 16
      %v3230 = vrot.slane %v3228, 5
      %v3231 = vsel %vm815, %v3226, %v3230
      %v3232 = vshrl.u32 %v2982, 16
      %v3234 = vrot.slane %v3232, 4
      %v3235 = vor.u32 %v3234, %v3230
      %v3236 = vrot.slane %v3235, 4
      %v3238 = vshll.u32 %v2983, 16
      %v3240 = vrot.slane %v3238, 5
      %v3241 = vsel %vm815, %v3236, %v3240
      %v3243 = vshrl.u32 %v2984, 16
      %v3245 = vrot.slane %v3243, 4
      %v3246 = vshll.u32 %v2984, 16
      %v3248 = vrot.slane %v3246, 5
      %v3249 = vor.u32 %v3245, %v3248
      %v3250 = vrot.slane %v3249, 4
      %v3252 = vshll.u32 %v2985, 16
      %v3254 = vrot.slane %v3252, 5
      %v3255 = vsel %vm815, %v3250, %v3254
      %v3256 = vshrl.u32 %v2985, 16
      %v3258 = vrot.slane %v3256, 4
      %v3259 = vor.u32 %v3258, %v3254
      %v3260 = vrot.slane %v3259, 4
      %v3262 = vshll.u32 %v2986, 16
      %v3264 = vrot.slane %v3262, 5
      %v3265 = vsel %vm815, %v3260, %v3264
      %v3267 = vshrl.u32 %v2987, 16
      %v3269 = vrot.slane %v3267, 4
      %v3270 = vshll.u32 %v2987, 16
      %v3272 = vrot.slane %v3270, 5
      %v3273 = vor.u32 %v3269, %v3272
      %v3274 = vrot.slane %v3273, 4
      %v3276 = vshll.u32 %v2988, 16
      %v3278 = vrot.slane %v3276, 5
      %v3279 = vsel %vm815, %v3274, %v3278
      %v3280 = vshrl.u32 %v2988, 16
      %v3282 = vrot.slane %v3280, 4
      %v3283 = vor.u32 %v3282, %v3278
      %v3284 = vrot.slane %v3283, 4
      %v3286 = vshll.u32 %v2989, 16
      %v3288 = vrot.slane %v3286, 5
      %v3289 = vsel %vm815, %v3284, %v3288
      %v3291 = vshrl.u32 %v2990, 16
      %v3293 = vrot.slane %v3291, 4
      %v3294 = vshll.u32 %v2990, 16
      %v3296 = vrot.slane %v3294, 5
      %v3297 = vor.u32 %v3293, %v3296
      %v3298 = vrot.slane %v3297, 4
      %v3300 = vshll.u32 %v2991, 16
      %v3302 = vrot.slane %v3300, 5
      %v3303 = vsel %vm815, %v3298, %v3302
      %v3304 = vshrl.u32 %v2991, 16
      %v3306 = vrot.slane %v3304, 4
      %v3307 = vor.u32 %v3306, %v3302
      %v3308 = vrot.slane %v3307, 4
      %v3310 = vshll.u32 %v2992, 16
      %v3312 = vrot.slane %v3310, 5
      %v3313 = vsel %vm815, %v3308, %v3312
      %v3315 = vshrl.u32 %v2993, 16
      %v3317 = vrot.slane %v3315, 4
      %v3318 = vshll.u32 %v2993, 16
      %v3320 = vrot.slane %v3318, 5
      %v3321 = vor.u32 %v3317, %v3320
      %v3322 = vrot.slane %v3321, 4
      %v3324 = vshll.u32 %v2994, 16
      %v3326 = vrot.slane %v3324, 5
      %v3327 = vsel %vm815, %v3322, %v3326
      %v3328 = vshrl.u32 %v2994, 16
      %v3330 = vrot.slane %v3328, 4
      %v3331 = vor.u32 %v3330, %v3326
      %v3332 = vrot.slane %v3331, 4
      %v3334 = vshll.u32 %v2995, 16
      %v3336 = vrot.slane %v3334, 5
      %v3337 = vsel %vm815, %v3332, %v3336
      %v3339 = vshrl.u32 %v2996, 16
      %v3341 = vrot.slane %v3339, 4
      %v3342 = vshll.u32 %v2996, 16
      %v3344 = vrot.slane %v3342, 5
      %v3345 = vor.u32 %v3341, %v3344
      %v3346 = vrot.slane %v3345, 4
      %v3348 = vshll.u32 %v2997, 16
      %v3350 = vrot.slane %v3348, 5
      %v3351 = vsel %vm815, %v3346, %v3350
      %v3352 = vshrl.u32 %v2997, 16
      %v3354 = vrot.slane %v3352, 4
      %v3355 = vor.u32 %v3354, %v3350
      %v3356 = vrot.slane %v3355, 4
      %v3358 = vshll.u32 %v2998, 16
      %v3360 = vrot.slane %v3358, 5
      %v3361 = vsel %vm815, %v3356, %v3360
      %v3363 = vshrl.u32 %v2999, 16
      %v3365 = vrot.slane %v3363, 4
      %v3366 = vshll.u32 %v2999, 16
      %v3368 = vrot.slane %v3366, 5
      %v3369 = vor.u32 %v3365, %v3368
      %v3370 = vrot.slane %v3369, 4
      %v3372 = vshll.u32 %v3000, 16
      %v3374 = vrot.slane %v3372, 5
      %v3375 = vsel %vm815, %v3370, %v3374
      %v3376 = vshrl.u32 %v3000, 16
      %v3378 = vrot.slane %v3376, 4
      %v3379 = vor.u32 %v3378, %v3374
      %v3380 = vrot.slane %v3379, 4
      %v3382 = vshll.u32 %v3001, 16
      %v3384 = vrot.slane %v3382, 5
      %v3385 = vsel %vm815, %v3380, %v3384
      %3386 = vrot.lane.b32.xlu0 %v3015, 28
      %v3387 = vpop.permute.xlu0 %3386
      %3388 = vrot.lane.b32.xlu0 %v3025, 28
      %v3389 = vpop.permute.xlu0 %3388
      %3390 = vrot.lane.b32.xlu0 %v3039, 28
      %v3391 = vpop.permute.xlu0 %3390
      %3392 = vrot.lane.b32.xlu0 %v3049, 28
      %v3393 = vpop.permute.xlu0 %3392
      %3394 = vrot.lane.b32.xlu0 %v3063, 28
      %v3395 = vpop.permute.xlu0 %3394
      %3396 = vrot.lane.b32.xlu0 %v3073, 28
      %v3397 = vpop.permute.xlu0 %3396
      %3398 = vrot.lane.b32.xlu0 %v3087, 28
      %v3399 = vpop.permute.xlu0 %3398
      %3400 = vrot.lane.b32.xlu0 %v3097, 28
      %v3401 = vpop.permute.xlu0 %3400
      %3402 = vrot.lane.b32.xlu0 %v3111, 28
      %v3403 = vpop.permute.xlu0 %3402
      %3404 = vrot.lane.b32.xlu0 %v3121, 28
      %v3405 = vpop.permute.xlu0 %3404
      %3406 = vrot.lane.b32.xlu0 %v3135, 28
      %v3407 = vpop.permute.xlu0 %3406
      %3408 = vrot.lane.b32.xlu0 %v3145, 28
      %v3409 = vpop.permute.xlu0 %3408
      %3410 = vrot.lane.b32.xlu0 %v3159, 28
      %v3411 = vpop.permute.xlu0 %3410
      %3412 = vrot.lane.b32.xlu0 %v3169, 28
      %v3413 = vpop.permute.xlu0 %3412
      %3414 = vrot.lane.b32.xlu0 %v3183, 28
      %v3415 = vpop.permute.xlu0 %3414
      %3416 = vrot.lane.b32.xlu0 %v3193, 28
      %v3417 = vpop.permute.xlu0 %3416
      %3418 = vrot.lane.b32.xlu0 %v3207, 28
      %v3419 = vpop.permute.xlu0 %3418
      %3420 = vrot.lane.b32.xlu0 %v3217, 28
      %v3421 = vpop.permute.xlu0 %3420
      %3422 = vrot.lane.b32.xlu0 %v3231, 28
      %v3423 = vpop.permute.xlu0 %3422
      %3424 = vrot.lane.b32.xlu0 %v3241, 28
      %v3425 = vpop.permute.xlu0 %3424
      %3426 = vrot.lane.b32.xlu0 %v3255, 28
      %v3427 = vpop.permute.xlu0 %3426
      %3428 = vrot.lane.b32.xlu0 %v3265, 28
      %v3429 = vpop.permute.xlu0 %3428
      %3430 = vrot.lane.b32.xlu0 %v3279, 28
      %v3431 = vpop.permute.xlu0 %3430
      %3432 = vrot.lane.b32.xlu0 %v3289, 28
      %v3433 = vpop.permute.xlu0 %3432
      %3434 = vrot.lane.b32.xlu0 %v3303, 28
      %v3435 = vpop.permute.xlu0 %3434
      %3436 = vrot.lane.b32.xlu0 %v3313, 28
      %v3437 = vpop.permute.xlu0 %3436
      %3438 = vrot.lane.b32.xlu0 %v3327, 28
      %v3439 = vpop.permute.xlu0 %3438
      %3440 = vrot.lane.b32.xlu0 %v3337, 28
      %v3441 = vpop.permute.xlu0 %3440
      %3442 = vrot.lane.b32.xlu0 %v3351, 28
      %v3443 = vpop.permute.xlu0 %3442
      %3444 = vrot.lane.b32.xlu0 %v3361, 28
      %v3445 = vpop.permute.xlu0 %3444
      %3446 = vrot.lane.b32.xlu0 %v3375, 28
      %v3447 = vpop.permute.xlu0 %3446
      %3448 = vrot.lane.b32.xlu0 %v3385, 28
      %v3449 = vpop.permute.xlu0 %3448
      %vm3482 = vcmask 257248
      %3483 = vst.msk [vmem:[#allocation3] sm:$0xf] %vm3482, %v3387
      %3484 = vst.msk [vmem:[#allocation3 + $0x4] sm:$0xf] %vm3482, %v3389
      %3485 = vst.msk [vmem:[#allocation3 + $0x8] sm:$0xf] %vm3482, %v3391
      %3486 = vst.msk [vmem:[#allocation3 + $0xc] sm:$0xf] %vm3482, %v3393
      %3487 = vst.msk [vmem:[#allocation3 + $0x10] sm:$0xf] %vm3482, %v3395
      %3488 = vst.msk [vmem:[#allocation3 + $0x14] sm:$0xf] %vm3482, %v3397
      %3489 = vst.msk [vmem:[#allocation3 + $0x18] sm:$0xf] %vm3482, %v3399
      %3490 = vst.msk [vmem:[#allocation3 + $0x1c] sm:$0xf] %vm3482, %v3401
      %3491 = vst.msk [vmem:[#allocation3 + $0x20] sm:$0xf] %vm3482, %v3403
      %3492 = vst.msk [vmem:[#allocation3 + $0x24] sm:$0xf] %vm3482, %v3405
      %3493 = vst.msk [vmem:[#allocation3 + $0x28] sm:$0xf] %vm3482, %v3407
      %3494 = vst.msk [vmem:[#allocation3 + $0x2c] sm:$0xf] %vm3482, %v3409
      %3495 = vst.msk [vmem:[#allocation3 + $0x30] sm:$0xf] %vm3482, %v3411
      %3496 = vst.msk [vmem:[#allocation3 + $0x34] sm:$0xf] %vm3482, %v3413
      %3497 = vst.msk [vmem:[#allocation3 + $0x38] sm:$0xf] %vm3482, %v3415
      %3498 = vst.msk [vmem:[#allocation3 + $0x3c] sm:$0xf] %vm3482, %v3417
      %3499 = vst.msk [vmem:[#allocation3 + $0x40] sm:$0xf] %vm3482, %v3419
      %3500 = vst.msk [vmem:[#allocation3 + $0x44] sm:$0xf] %vm3482, %v3421
      %3501 = vst.msk [vmem:[#allocation3 + $0x48] sm:$0xf] %vm3482, %v3423
      %3502 = vst.msk [vmem:[#allocation3 + $0x4c] sm:$0xf] %vm3482, %v3425
      %3503 = vst.msk [vmem:[#allocation3 + $0x50] sm:$0xf] %vm3482, %v3427
      %3504 = vst.msk [vmem:[#allocation3 + $0x54] sm:$0xf] %vm3482, %v3429
      %3505 = vst.msk [vmem:[#allocation3 + $0x58] sm:$0xf] %vm3482, %v3431
      %3506 = vst.msk [vmem:[#allocation3 + $0x5c] sm:$0xf] %vm3482, %v3433
      %3507 = vst.msk [vmem:[#allocation3 + $0x60] sm:$0xf] %vm3482, %v3435
      %3508 = vst.msk [vmem:[#allocation3 + $0x64] sm:$0xf] %vm3482, %v3437
      %3509 = vst.msk [vmem:[#allocation3 + $0x68] sm:$0xf] %vm3482, %v3439
      %3510 = vst.msk [vmem:[#allocation3 + $0x6c] sm:$0xf] %vm3482, %v3441
      %3511 = vst.msk [vmem:[#allocation3 + $0x70] sm:$0xf] %vm3482, %v3443
      %3512 = vst.msk [vmem:[#allocation3 + $0x74] sm:$0xf] %vm3482, %v3445
      %3513 = vst.msk [vmem:[#allocation3 + $0x78] sm:$0xf] %vm3482, %v3447
      %3514 = vst.msk [vmem:[#allocation3 + $0x7c] sm:$0xf] %vm3482, %v3449
      %v3515 = vld [vmem:[%s2760] sm:$0xe]
      %v3516 = vld [vmem:[%s2760 + $0x4] sm:$0xf]
      %v3517 = vld [vmem:[%s2760 + $0x8] sm:$0x1]
      %v3518 = vld [vmem:[%s2760 + $0xc] sm:$0xe]
      %v3519 = vld [vmem:[%s2760 + $0x10] sm:$0xf]
      %v3520 = vld [vmem:[%s2760 + $0x14] sm:$0x1]
      %v3521 = vld [vmem:[%s2760 + $0x18] sm:$0xe]
      %v3522 = vld [vmem:[%s2760 + $0x1c] sm:$0xf]
      %v3523 = vld [vmem:[%s2760 + $0x20] sm:$0x1]
      %v3524 = vld [vmem:[%s2760 + $0x24] sm:$0xe]
      %v3525 = vld [vmem:[%s2760 + $0x28] sm:$0xf]
      %v3526 = vld [vmem:[%s2760 + $0x2c] sm:$0x1]
      %v3527 = vld [vmem:[%s2760 + $0x30] sm:$0xe]
      %v3528 = vld [vmem:[%s2760 + $0x34] sm:$0xf]
      %v3529 = vld [vmem:[%s2760 + $0x38] sm:$0x1]
      %v3530 = vld [vmem:[%s2760 + $0x3c] sm:$0xe]
      %v3531 = vld [vmem:[%s2760 + $0x40] sm:$0xf]
      %v3532 = vld [vmem:[%s2760 + $0x44] sm:$0x1]
      %v3533 = vld [vmem:[%s2760 + $0x48] sm:$0xe]
      %v3534 = vld [vmem:[%s2760 + $0x4c] sm:$0xf]
      %v3535 = vld [vmem:[%s2760 + $0x50] sm:$0x1]
      %v3536 = vld [vmem:[%s2760 + $0x54] sm:$0xe]
      %v3537 = vld [vmem:[%s2760 + $0x58] sm:$0xf]
      %v3538 = vld [vmem:[%s2760 + $0x5c] sm:$0x1]
      %v3539 = vld [vmem:[%s2760 + $0x60] sm:$0xe]
      %v3540 = vld [vmem:[%s2760 + $0x64] sm:$0xf]
      %v3541 = vld [vmem:[%s2760 + $0x68] sm:$0x1]
      %v3542 = vld [vmem:[%s2760 + $0x6c] sm:$0xe]
      %v3543 = vld [vmem:[%s2760 + $0x70] sm:$0xf]
      %v3544 = vld [vmem:[%s2760 + $0x74] sm:$0x1]
      %v3545 = vld [vmem:[%s2760 + $0x78] sm:$0xe]
      %v3546 = vld [vmem:[%s2760 + $0x7c] sm:$0xf]
      %v3547 = vld [vmem:[%s2760 + $0x80] sm:$0x1]
      %v3548 = vld [vmem:[%s2760 + $0x84] sm:$0xe]
      %v3549 = vld [vmem:[%s2760 + $0x88] sm:$0xf]
      %v3550 = vld [vmem:[%s2760 + $0x8c] sm:$0x1]
      %v3551 = vld [vmem:[%s2760 + $0x90] sm:$0xe]
      %v3552 = vld [vmem:[%s2760 + $0x94] sm:$0xf]
      %v3553 = vld [vmem:[%s2760 + $0x98] sm:$0x1]
      %v3554 = vld [vmem:[%s2760 + $0x9c] sm:$0xe]
      %v3555 = vld [vmem:[%s2760 + $0xa0] sm:$0xf]
      %v3556 = vld [vmem:[%s2760 + $0xa4] sm:$0x1]
      %v3557 = vld [vmem:[%s2760 + $0xa8] sm:$0xe]
      %v3558 = vld [vmem:[%s2760 + $0xac] sm:$0xf]
      %v3559 = vld [vmem:[%s2760 + $0xb0] sm:$0x1]
      %v3560 = vld [vmem:[%s2760 + $0xb4] sm:$0xe]
      %v3561 = vld [vmem:[%s2760 + $0xb8] sm:$0xf]
      %v3562 = vld [vmem:[%s2760 + $0xbc] sm:$0x1]
      %v3611 = vrot.slane %v3515, 5
      %v3612 = vrot.slane %v3611, 4
      %v3613 = vrot.slane %v3516, 5
      %v3614 = vsel %vm1427, %v3612, %v3613
      %v3615 = vrot.slane %v3613, 4
      %v3616 = vrot.slane %v3517, 5
      %v3617 = vsel %vm1427, %v3615, %v3616
      %v3618 = vrot.slane %v3518, 5
      %v3619 = vrot.slane %v3618, 4
      %v3620 = vrot.slane %v3519, 5
      %v3621 = vsel %vm1427, %v3619, %v3620
      %v3622 = vrot.slane %v3620, 4
      %v3623 = vrot.slane %v3520, 5
      %v3624 = vsel %vm1427, %v3622, %v3623
      %v3625 = vrot.slane %v3521, 5
      %v3626 = vrot.slane %v3625, 4
      %v3627 = vrot.slane %v3522, 5
      %v3628 = vsel %vm1427, %v3626, %v3627
      %v3629 = vrot.slane %v3627, 4
      %v3630 = vrot.slane %v3523, 5
      %v3631 = vsel %vm1427, %v3629, %v3630
      %v3632 = vrot.slane %v3524, 5
      %v3633 = vrot.slane %v3632, 4
      %v3634 = vrot.slane %v3525, 5
      %v3635 = vsel %vm1427, %v3633, %v3634
      %v3636 = vrot.slane %v3634, 4
      %v3637 = vrot.slane %v3526, 5
      %v3638 = vsel %vm1427, %v3636, %v3637
      %v3639 = vrot.slane %v3527, 5
      %v3640 = vrot.slane %v3639, 4
      %v3641 = vrot.slane %v3528, 5
      %v3642 = vsel %vm1427, %v3640, %v3641
      %v3643 = vrot.slane %v3641, 4
      %v3644 = vrot.slane %v3529, 5
      %v3645 = vsel %vm1427, %v3643, %v3644
      %v3646 = vrot.slane %v3530, 5
      %v3647 = vrot.slane %v3646, 4
      %v3648 = vrot.slane %v3531, 5
      %v3649 = vsel %vm1427, %v3647, %v3648
      %v3650 = vrot.slane %v3648, 4
      %v3651 = vrot.slane %v3532, 5
      %v3652 = vsel %vm1427, %v3650, %v3651
      %v3653 = vrot.slane %v3533, 5
      %v3654 = vrot.slane %v3653, 4
      %v3655 = vrot.slane %v3534, 5
      %v3656 = vsel %vm1427, %v3654, %v3655
      %v3657 = vrot.slane %v3655, 4
      %v3658 = vrot.slane %v3535, 5
      %v3659 = vsel %vm1427, %v3657, %v3658
      %v3660 = vrot.slane %v3536, 5
      %v3661 = vrot.slane %v3660, 4
      %v3662 = vrot.slane %v3537, 5
      %v3663 = vsel %vm1427, %v3661, %v3662
      %v3664 = vrot.slane %v3662, 4
      %v3665 = vrot.slane %v3538, 5
      %v3666 = vsel %vm1427, %v3664, %v3665
      %v3667 = vrot.slane %v3539, 5
      %v3668 = vrot.slane %v3667, 4
      %v3669 = vrot.slane %v3540, 5
      %v3670 = vsel %vm1427, %v3668, %v3669
      %v3671 = vrot.slane %v3669, 4
      %v3672 = vrot.slane %v3541, 5
      %v3673 = vsel %vm1427, %v3671, %v3672
      %v3674 = vrot.slane %v3542, 5
      %v3675 = vrot.slane %v3674, 4
      %v3676 = vrot.slane %v3543, 5
      %v3677 = vsel %vm1427, %v3675, %v3676
      %v3678 = vrot.slane %v3676, 4
      %v3679 = vrot.slane %v3544, 5
      %v3680 = vsel %vm1427, %v3678, %v3679
      %v3681 = vrot.slane %v3545, 5
      %v3682 = vrot.slane %v3681, 4
      %v3683 = vrot.slane %v3546, 5
      %v3684 = vsel %vm1427, %v3682, %v3683
      %v3685 = vrot.slane %v3683, 4
      %v3686 = vrot.slane %v3547, 5
      %v3687 = vsel %vm1427, %v3685, %v3686
      %v3688 = vrot.slane %v3548, 5
      %v3689 = vrot.slane %v3688, 4
      %v3690 = vrot.slane %v3549, 5
      %v3691 = vsel %vm1427, %v3689, %v3690
      %v3692 = vrot.slane %v3690, 4
      %v3693 = vrot.slane %v3550, 5
      %v3694 = vsel %vm1427, %v3692, %v3693
      %v3695 = vrot.slane %v3551, 5
      %v3696 = vrot.slane %v3695, 4
      %v3697 = vrot.slane %v3552, 5
      %v3698 = vsel %vm1427, %v3696, %v3697
      %v3699 = vrot.slane %v3697, 4
      %v3700 = vrot.slane %v3553, 5
      %v3701 = vsel %vm1427, %v3699, %v3700
      %v3702 = vrot.slane %v3554, 5
      %v3703 = vrot.slane %v3702, 4
      %v3704 = vrot.slane %v3555, 5
      %v3705 = vsel %vm1427, %v3703, %v3704
      %v3706 = vrot.slane %v3704, 4
      %v3707 = vrot.slane %v3556, 5
      %v3708 = vsel %vm1427, %v3706, %v3707
      %v3709 = vrot.slane %v3557, 5
      %v3710 = vrot.slane %v3709, 4
      %v3711 = vrot.slane %v3558, 5
      %v3712 = vsel %vm1427, %v3710, %v3711
      %v3713 = vrot.slane %v3711, 4
      %v3714 = vrot.slane %v3559, 5
      %v3715 = vsel %vm1427, %v3713, %v3714
      %v3716 = vrot.slane %v3560, 5
      %v3717 = vrot.slane %v3716, 4
      %v3718 = vrot.slane %v3561, 5
      %v3719 = vsel %vm1427, %v3717, %v3718
      %v3720 = vrot.slane %v3718, 4
      %v3721 = vrot.slane %v3562, 5
      %v3722 = vsel %vm1427, %v3720, %v3721
      %3723 = vrot.lane.b32.xlu0 %v3614, 32
      %v3724 = vpop.permute.xlu0 %3723
      %3725 = vrot.lane.b32.xlu0 %v3617, 32
      %v3726 = vpop.permute.xlu0 %3725
      %3727 = vrot.lane.b32.xlu0 %v3621, 32
      %v3728 = vpop.permute.xlu0 %3727
      %3729 = vrot.lane.b32.xlu0 %v3624, 32
      %v3730 = vpop.permute.xlu0 %3729
      %3731 = vrot.lane.b32.xlu0 %v3628, 32
      %v3732 = vpop.permute.xlu0 %3731
      %3733 = vrot.lane.b32.xlu0 %v3631, 32
      %v3734 = vpop.permute.xlu0 %3733
      %3735 = vrot.lane.b32.xlu0 %v3635, 32
      %v3736 = vpop.permute.xlu0 %3735
      %3737 = vrot.lane.b32.xlu0 %v3638, 32
      %v3738 = vpop.permute.xlu0 %3737
      %3739 = vrot.lane.b32.xlu0 %v3642, 32
      %v3740 = vpop.permute.xlu0 %3739
      %3741 = vrot.lane.b32.xlu0 %v3645, 32
      %v3742 = vpop.permute.xlu0 %3741
      %3743 = vrot.lane.b32.xlu0 %v3649, 32
      %v3744 = vpop.permute.xlu0 %3743
      %3745 = vrot.lane.b32.xlu0 %v3652, 32
      %v3746 = vpop.permute.xlu0 %3745
      %3747 = vrot.lane.b32.xlu0 %v3656, 32
      %v3748 = vpop.permute.xlu0 %3747
      %3749 = vrot.lane.b32.xlu0 %v3659, 32
      %v3750 = vpop.permute.xlu0 %3749
      %3751 = vrot.lane.b32.xlu0 %v3663, 32
      %v3752 = vpop.permute.xlu0 %3751
      %3753 = vrot.lane.b32.xlu0 %v3666, 32
      %v3754 = vpop.permute.xlu0 %3753
      %3755 = vrot.lane.b32.xlu0 %v3670, 32
      %v3756 = vpop.permute.xlu0 %3755
      %3757 = vrot.lane.b32.xlu0 %v3673, 32
      %v3758 = vpop.permute.xlu0 %3757
      %3759 = vrot.lane.b32.xlu0 %v3677, 32
      %v3760 = vpop.permute.xlu0 %3759
      %3761 = vrot.lane.b32.xlu0 %v3680, 32
      %v3762 = vpop.permute.xlu0 %3761
      %3763 = vrot.lane.b32.xlu0 %v3684, 32
      %v3764 = vpop.permute.xlu0 %3763
      %3765 = vrot.lane.b32.xlu0 %v3687, 32
      %v3766 = vpop.permute.xlu0 %3765
      %3767 = vrot.lane.b32.xlu0 %v3691, 32
      %v3768 = vpop.permute.xlu0 %3767
      %3769 = vrot.lane.b32.xlu0 %v3694, 32
      %v3770 = vpop.permute.xlu0 %3769
      %3771 = vrot.lane.b32.xlu0 %v3698, 32
      %v3772 = vpop.permute.xlu0 %3771
      %3773 = vrot.lane.b32.xlu0 %v3701, 32
      %v3774 = vpop.permute.xlu0 %3773
      %3775 = vrot.lane.b32.xlu0 %v3705, 32
      %v3776 = vpop.permute.xlu0 %3775
      %3777 = vrot.lane.b32.xlu0 %v3708, 32
      %v3778 = vpop.permute.xlu0 %3777
      %3779 = vrot.lane.b32.xlu0 %v3712, 32
      %v3780 = vpop.permute.xlu0 %3779
      %3781 = vrot.lane.b32.xlu0 %v3715, 32
      %v3782 = vpop.permute.xlu0 %3781
      %3783 = vrot.lane.b32.xlu0 %v3719, 32
      %v3784 = vpop.permute.xlu0 %3783
      %3785 = vrot.lane.b32.xlu0 %v3722, 32
      %v3786 = vpop.permute.xlu0 %3785
      %vm3819 = vcmask 290048
      %3820 = vst.msk [vmem:[#allocation3] sm:$0xf] %vm3819, %v3724
      %3821 = vst.msk [vmem:[#allocation3 + $0x4] sm:$0xf] %vm3819, %v3726
      %3822 = vst.msk [vmem:[#allocation3 + $0x8] sm:$0xf] %vm3819, %v3728
      %3823 = vst.msk [vmem:[#allocation3 + $0xc] sm:$0xf] %vm3819, %v3730
      %3824 = vst.msk [vmem:[#allocation3 + $0x10] sm:$0xf] %vm3819, %v3732
      %3825 = vst.msk [vmem:[#allocation3 + $0x14] sm:$0xf] %vm3819, %v3734
      %3826 = vst.msk [vmem:[#allocation3 + $0x18] sm:$0xf] %vm3819, %v3736
      %3827 = vst.msk [vmem:[#allocation3 + $0x1c] sm:$0xf] %vm3819, %v3738
      %3828 = vst.msk [vmem:[#allocation3 + $0x20] sm:$0xf] %vm3819, %v3740
      %3829 = vst.msk [vmem:[#allocation3 + $0x24] sm:$0xf] %vm3819, %v3742
      %3830 = vst.msk [vmem:[#allocation3 + $0x28] sm:$0xf] %vm3819, %v3744
      %3831 = vst.msk [vmem:[#allocation3 + $0x2c] sm:$0xf] %vm3819, %v3746
      %3832 = vst.msk [vmem:[#allocation3 + $0x30] sm:$0xf] %vm3819, %v3748
      %3833 = vst.msk [vmem:[#allocation3 + $0x34] sm:$0xf] %vm3819, %v3750
      %3834 = vst.msk [vmem:[#allocation3 + $0x38] sm:$0xf] %vm3819, %v3752
      %3835 = vst.msk [vmem:[#allocation3 + $0x3c] sm:$0xf] %vm3819, %v3754
      %3836 = vst.msk [vmem:[#allocation3 + $0x40] sm:$0xf] %vm3819, %v3756
      %3837 = vst.msk [vmem:[#allocation3 + $0x44] sm:$0xf] %vm3819, %v3758
      %3838 = vst.msk [vmem:[#allocation3 + $0x48] sm:$0xf] %vm3819, %v3760
      %3839 = vst.msk [vmem:[#allocation3 + $0x4c] sm:$0xf] %vm3819, %v3762
      %3840 = vst.msk [vmem:[#allocation3 + $0x50] sm:$0xf] %vm3819, %v3764
      %3841 = vst.msk [vmem:[#allocation3 + $0x54] sm:$0xf] %vm3819, %v3766
      %3842 = vst.msk [vmem:[#allocation3 + $0x58] sm:$0xf] %vm3819, %v3768
      %3843 = vst.msk [vmem:[#allocation3 + $0x5c] sm:$0xf] %vm3819, %v3770
      %3844 = vst.msk [vmem:[#allocation3 + $0x60] sm:$0xf] %vm3819, %v3772
      %3845 = vst.msk [vmem:[#allocation3 + $0x64] sm:$0xf] %vm3819, %v3774
      %3846 = vst.msk [vmem:[#allocation3 + $0x68] sm:$0xf] %vm3819, %v3776
      %3847 = vst.msk [vmem:[#allocation3 + $0x6c] sm:$0xf] %vm3819, %v3778
      %3848 = vst.msk [vmem:[#allocation3 + $0x70] sm:$0xf] %vm3819, %v3780
      %3849 = vst.msk [vmem:[#allocation3 + $0x74] sm:$0xf] %vm3819, %v3782
      %3850 = vst.msk [vmem:[#allocation3 + $0x78] sm:$0xf] %vm3819, %v3784
      %3851 = vst.msk [vmem:[#allocation3 + $0x7c] sm:$0xf] %vm3819, %v3786
      %v3852 = vld [vmem:[#allocation3] sm:$0xf]
      %v3853 = vld [vmem:[#allocation3 + $0x4] sm:$0xf]
      %v3854 = vld [vmem:[#allocation3 + $0x8] sm:$0xf]
      %v3855 = vld [vmem:[#allocation3 + $0xc] sm:$0xf]
      %v3856 = vld [vmem:[#allocation3 + $0x10] sm:$0xf]
      %v3857 = vld [vmem:[#allocation3 + $0x14] sm:$0xf]
      %v3858 = vld [vmem:[#allocation3 + $0x18] sm:$0xf]
      %v3859 = vld [vmem:[#allocation3 + $0x1c] sm:$0xf]
      %v3860 = vld [vmem:[#allocation3 + $0x20] sm:$0xf]
      %v3861 = vld [vmem:[#allocation3 + $0x24] sm:$0xf]
      %v3862 = vld [vmem:[#allocation3 + $0x28] sm:$0xf]
      %v3863 = vld [vmem:[#allocation3 + $0x2c] sm:$0xf]
      %v3864 = vld [vmem:[#allocation3 + $0x30] sm:$0xf]
      %v3865 = vld [vmem:[#allocation3 + $0x34] sm:$0xf]
      %v3866 = vld [vmem:[#allocation3 + $0x38] sm:$0xf]
      %v3867 = vld [vmem:[#allocation3 + $0x3c] sm:$0xf]
      %v3868 = vld [vmem:[#allocation3 + $0x40] sm:$0xf]
      %v3869 = vld [vmem:[#allocation3 + $0x44] sm:$0xf]
      %v3870 = vld [vmem:[#allocation3 + $0x48] sm:$0xf]
      %v3871 = vld [vmem:[#allocation3 + $0x4c] sm:$0xf]
      %v3872 = vld [vmem:[#allocation3 + $0x50] sm:$0xf]
      %v3873 = vld [vmem:[#allocation3 + $0x54] sm:$0xf]
      %v3874 = vld [vmem:[#allocation3 + $0x58] sm:$0xf]
      %v3875 = vld [vmem:[#allocation3 + $0x5c] sm:$0xf]
      %v3876 = vld [vmem:[#allocation3 + $0x60] sm:$0xf]
      %v3877 = vld [vmem:[#allocation3 + $0x64] sm:$0xf]
      %v3878 = vld [vmem:[#allocation3 + $0x68] sm:$0xf]
      %v3879 = vld [vmem:[#allocation3 + $0x6c] sm:$0xf]
      %v3880 = vld [vmem:[#allocation3 + $0x70] sm:$0xf]
      %v3881 = vld [vmem:[#allocation3 + $0x74] sm:$0xf]
      %v3882 = vld [vmem:[#allocation3 + $0x78] sm:$0xf]
      %v3883 = vld [vmem:[#allocation3 + $0x7c] sm:$0xf]
      %v3884 = vld [vmem:[%s1] sm:$0xf]
      %v3885 = vld [vmem:[%s1 + $0x4] sm:$0xf]
      %v3886 = vld [vmem:[%s1 + $0x8] sm:$0xf]
      %v3887 = vld [vmem:[%s1 + $0xc] sm:$0xf]
      %v3888 = vld [vmem:[%s1 + $0x10] sm:$0x3]
      %v3889 = vld [vmem:[%s2] sm:$0x1]
      %v3891 = vperm.slane %v3889, 0
      %v3925 = vunpack.c.l.b16 %v3852
      %v3926 = vunpack.c.l.b16 %v3853
      %v3927 = vunpack.c.l.b16 %v3854
      %v3928 = vunpack.c.l.b16 %v3855
      %v3929 = vunpack.c.l.b16 %v3856
      %v3930 = vunpack.c.l.b16 %v3857
      %v3931 = vunpack.c.l.b16 %v3858
      %v3932 = vunpack.c.l.b16 %v3859
      %v3933 = vunpack.c.l.b16 %v3860
      %v3934 = vunpack.c.l.b16 %v3861
      %v3935 = vunpack.c.l.b16 %v3862
      %v3936 = vunpack.c.l.b16 %v3863
      %v3937 = vunpack.c.l.b16 %v3864
      %v3938 = vunpack.c.l.b16 %v3865
      %v3939 = vunpack.c.l.b16 %v3866
      %v3940 = vunpack.c.l.b16 %v3867
      %v3941 = vunpack.c.l.b16 %v3868
      %v3942 = vunpack.c.l.b16 %v3869
      %v3943 = vunpack.c.l.b16 %v3870
      %v3944 = vunpack.c.l.b16 %v3871
      %v3945 = vunpack.c.l.b16 %v3872
      %v3946 = vunpack.c.l.b16 %v3873
      %v3947 = vunpack.c.l.b16 %v3874
      %v3948 = vunpack.c.l.b16 %v3875
      %v3949 = vunpack.c.l.b16 %v3876
      %v3950 = vunpack.c.l.b16 %v3877
      %v3951 = vunpack.c.l.b16 %v3878
      %v3952 = vunpack.c.l.b16 %v3879
      %v3953 = vunpack.c.l.b16 %v3880
      %v3954 = vunpack.c.l.b16 %v3881
      %v3955 = vunpack.c.l.b16 %v3882
      %v3956 = vunpack.c.l.b16 %v3883
      %v3957 = vpack.c.b16 %v3926, %v3925
      %v3958 = vpack.c.b16 %v3928, %v3927
      %v3959 = vpack.c.b16 %v3930, %v3929
      %v3960 = vpack.c.b16 %v3932, %v3931
      %v3961 = vpack.c.b16 %v3934, %v3933
      %v3962 = vpack.c.b16 %v3936, %v3935
      %v3963 = vpack.c.b16 %v3938, %v3937
      %v3964 = vpack.c.b16 %v3940, %v3939
      %v3965 = vpack.c.b16 %v3942, %v3941
      %v3966 = vpack.c.b16 %v3944, %v3943
      %v3967 = vpack.c.b16 %v3946, %v3945
      %v3968 = vpack.c.b16 %v3948, %v3947
      %v3969 = vpack.c.b16 %v3950, %v3949
      %v3970 = vpack.c.b16 %v3952, %v3951
      %v3971 = vpack.c.b16 %v3954, %v3953
      %v3972 = vpack.c.b16 %v3956, %v3955
      %v3978 = vunpack.c.l.b16 %v3884
      %v3979 = vunpack.c.l.b16 %v3885
      %v3980 = vunpack.c.l.b16 %v3886
      %v3981 = vunpack.c.l.b16 %v3887
      %v3982 = vunpack.c.l.b16 %v3888
      %v3983 = vpack.c.b16 %v3979, %v3978
      %v3984 = vpack.c.b16 %v3981, %v3980
      %v3985 = vpack.c.b16 %v3982, %v3982
      %vm3988 = vcmask 293888
      %v3990 = vsel %vm3988, %v3957, 0
      %v3993 = vsel %vm3988, %v3958, 0
      %v3996 = vsel %vm3988, %v3959, 0
      %v3999 = vsel %vm3988, %v3960, 0
      %v4002 = vsel %vm3988, %v3961, 0
      %v4005 = vsel %vm3988, %v3962, 0
      %v4008 = vsel %vm3988, %v3963, 0
      %v4011 = vsel %vm3988, %v3964, 0
      %v4014 = vsel %vm3988, %v3965, 0
      %v4017 = vsel %vm3988, %v3966, 0
      %v4020 = vsel %vm3988, %v3967, 0
      %v4023 = vsel %vm3988, %v3968, 0
      %v4026 = vsel %vm3988, %v3969, 0
      %v4029 = vsel %vm3988, %v3970, 0
      %v4032 = vsel %vm3988, %v3971, 0
      %v4035 = vsel %vm3988, %v3972, 0
      %vm4037 = vcmask 1041408
      %v4039 = vsel %vm4037, %v3985, 0
      %4041 = vmatpush.bf16.msra.mxu0 0
      %4042 = vmatpush.bf16.msra.mxu0 0
      %4043 = vmatpush.bf16.msra.mxu0 0
      %4044 = vmatpush.bf16.msra.mxu0 0
      %4045 = vmatpush.bf16.msra.mxu0 0
      %4046 = vmatpush.bf16.msra.mxu0 %v4039
      %4047 = vmatpush.bf16.msra.mxu0 %v3984
      %4048 = vmatpush.bf16.msra.mxu0 %v3983
      %4049 = vmatmul.bf16.gmra.mxu0 %v3990
      %v4050 = vpop.f32.mrf.mxu0
      %v4051 = vadd.f32 %v3891, %v4050
      %v4052 = vpop.f32.mrf.mxu0
      %v4053 = vadd.f32 %v3891, %v4052
      %4054 = vmatmul.bf16.gmra.mxu0 %v3993
      %v4055 = vpop.f32.mrf.mxu0
      %v4056 = vadd.f32 %v3891, %v4055
      %v4057 = vpop.f32.mrf.mxu0
      %v4058 = vadd.f32 %v3891, %v4057
      %4059 = vmatmul.bf16.gmra.mxu0 %v3996
      %v4060 = vpop.f32.mrf.mxu0
      %v4061 = vadd.f32 %v3891, %v4060
      %v4062 = vpop.f32.mrf.mxu0
      %v4063 = vadd.f32 %v3891, %v4062
      %4064 = vmatmul.bf16.gmra.mxu0 %v3999
      %v4065 = vpop.f32.mrf.mxu0
      %v4066 = vadd.f32 %v3891, %v4065
      %v4067 = vpop.f32.mrf.mxu0
      %v4068 = vadd.f32 %v3891, %v4067
      %4069 = vmatmul.bf16.gmra.mxu0 %v4002
      %v4070 = vpop.f32.mrf.mxu0
      %v4071 = vadd.f32 %v3891, %v4070
      %v4072 = vpop.f32.mrf.mxu0
      %v4073 = vadd.f32 %v3891, %v4072
      %4074 = vmatmul.bf16.gmra.mxu0 %v4005
      %v4075 = vpop.f32.mrf.mxu0
      %v4076 = vadd.f32 %v3891, %v4075
      %v4077 = vpop.f32.mrf.mxu0
      %v4078 = vadd.f32 %v3891, %v4077
      %4079 = vmatmul.bf16.gmra.mxu0 %v4008
      %v4080 = vpop.f32.mrf.mxu0
      %v4081 = vadd.f32 %v3891, %v4080
      %v4082 = vpop.f32.mrf.mxu0
      %v4083 = vadd.f32 %v3891, %v4082
      %4084 = vmatmul.bf16.gmra.mxu0 %v4011
      %v4085 = vpop.f32.mrf.mxu0
      %v4086 = vadd.f32 %v3891, %v4085
      %v4087 = vpop.f32.mrf.mxu0
      %v4088 = vadd.f32 %v3891, %v4087
      %4089 = vmatmul.bf16.gmra.mxu0 %v4014
      %v4090 = vpop.f32.mrf.mxu0
      %v4091 = vadd.f32 %v3891, %v4090
      %v4092 = vpop.f32.mrf.mxu0
      %v4093 = vadd.f32 %v3891, %v4092
      %4094 = vmatmul.bf16.gmra.mxu0 %v4017
      %v4095 = vpop.f32.mrf.mxu0
      %v4096 = vadd.f32 %v3891, %v4095
      %v4097 = vpop.f32.mrf.mxu0
      %v4098 = vadd.f32 %v3891, %v4097
      %4099 = vmatmul.bf16.gmra.mxu0 %v4020
      %v4100 = vpop.f32.mrf.mxu0
      %v4101 = vadd.f32 %v3891, %v4100
      %v4102 = vpop.f32.mrf.mxu0
      %v4103 = vadd.f32 %v3891, %v4102
      %4104 = vmatmul.bf16.gmra.mxu0 %v4023
      %v4105 = vpop.f32.mrf.mxu0
      %v4106 = vadd.f32 %v3891, %v4105
      %v4107 = vpop.f32.mrf.mxu0
      %v4108 = vadd.f32 %v3891, %v4107
      %4109 = vmatmul.bf16.gmra.mxu0 %v4026
      %v4110 = vpop.f32.mrf.mxu0
      %v4111 = vadd.f32 %v3891, %v4110
      %v4112 = vpop.f32.mrf.mxu0
      %v4113 = vadd.f32 %v3891, %v4112
      %4114 = vmatmul.bf16.gmra.mxu0 %v4029
      %v4115 = vpop.f32.mrf.mxu0
      %v4116 = vadd.f32 %v3891, %v4115
      %v4117 = vpop.f32.mrf.mxu0
      %v4118 = vadd.f32 %v3891, %v4117
      %4119 = vmatmul.bf16.gmra.mxu0 %v4032
      %v4120 = vpop.f32.mrf.mxu0
      %v4121 = vadd.f32 %v3891, %v4120
      %v4122 = vpop.f32.mrf.mxu0
      %v4123 = vadd.f32 %v3891, %v4122
      %4124 = vmatmul.bf16.gmra.mxu0 %v4035
      %v4125 = vpop.f32.mrf.mxu0
      %v4126 = vadd.f32 %v3891, %v4125
      %v4127 = vpop.f32.mrf.mxu0
      %v4128 = vadd.f32 %v3891, %v4127
      %4129 = vdwg.mxu0
      %v4130 = vmax.f32 %v4051, 0.0
      %v4131 = vmax.f32 %v4053, 0.0
      %v4132 = vmax.f32 %v4056, 0.0
      %v4133 = vmax.f32 %v4058, 0.0
      %v4134 = vmax.f32 %v4061, 0.0
      %v4135 = vmax.f32 %v4063, 0.0
      %v4136 = vmax.f32 %v4066, 0.0
      %v4137 = vmax.f32 %v4068, 0.0
      %v4138 = vmax.f32 %v4071, 0.0
      %v4139 = vmax.f32 %v4073, 0.0
      %v4140 = vmax.f32 %v4076, 0.0
      %v4141 = vmax.f32 %v4078, 0.0
      %v4142 = vmax.f32 %v4081, 0.0
      %v4143 = vmax.f32 %v4083, 0.0
      %v4144 = vmax.f32 %v4086, 0.0
      %v4145 = vmax.f32 %v4088, 0.0
      %v4146 = vmax.f32 %v4091, 0.0
      %v4147 = vmax.f32 %v4093, 0.0
      %v4148 = vmax.f32 %v4096, 0.0
      %v4149 = vmax.f32 %v4098, 0.0
      %v4150 = vmax.f32 %v4101, 0.0
      %v4151 = vmax.f32 %v4103, 0.0
      %v4152 = vmax.f32 %v4106, 0.0
      %v4153 = vmax.f32 %v4108, 0.0
      %v4154 = vmax.f32 %v4111, 0.0
      %v4155 = vmax.f32 %v4113, 0.0
      %v4156 = vmax.f32 %v4116, 0.0
      %v4157 = vmax.f32 %v4118, 0.0
      %v4158 = vmax.f32 %v4121, 0.0
      %v4159 = vmax.f32 %v4123, 0.0
      %v4160 = vmax.f32 %v4126, 0.0
      %v4161 = vmax.f32 %v4128, 0.0
      %v4162 = vpack.c.bf16 %v4130, %v4130
      %v4163 = vpack.c.bf16 %v4131, %v4131
      %v4164 = vpack.c.bf16 %v4132, %v4132
      %v4165 = vpack.c.bf16 %v4133, %v4133
      %v4166 = vpack.c.bf16 %v4134, %v4134
      %v4167 = vpack.c.bf16 %v4135, %v4135
      %v4168 = vpack.c.bf16 %v4136, %v4136
      %v4169 = vpack.c.bf16 %v4137, %v4137
      %v4170 = vpack.c.bf16 %v4138, %v4138
      %v4171 = vpack.c.bf16 %v4139, %v4139
      %v4172 = vpack.c.bf16 %v4140, %v4140
      %v4173 = vpack.c.bf16 %v4141, %v4141
      %v4174 = vpack.c.bf16 %v4142, %v4142
      %v4175 = vpack.c.bf16 %v4143, %v4143
      %v4176 = vpack.c.bf16 %v4144, %v4144
      %v4177 = vpack.c.bf16 %v4145, %v4145
      %v4178 = vpack.c.bf16 %v4146, %v4146
      %v4179 = vpack.c.bf16 %v4147, %v4147
      %v4180 = vpack.c.bf16 %v4148, %v4148
      %v4181 = vpack.c.bf16 %v4149, %v4149
      %v4182 = vpack.c.bf16 %v4150, %v4150
      %v4183 = vpack.c.bf16 %v4151, %v4151
      %v4184 = vpack.c.bf16 %v4152, %v4152
      %v4185 = vpack.c.bf16 %v4153, %v4153
      %v4186 = vpack.c.bf16 %v4154, %v4154
      %v4187 = vpack.c.bf16 %v4155, %v4155
      %v4188 = vpack.c.bf16 %v4156, %v4156
      %v4189 = vpack.c.bf16 %v4157, %v4157
      %v4190 = vpack.c.bf16 %v4158, %v4158
      %v4191 = vpack.c.bf16 %v4159, %v4159
      %v4192 = vpack.c.bf16 %v4160, %v4160
      %v4193 = vpack.c.bf16 %v4161, %v4161
      %vm4194 = vcmask 60416
      %4195 = vst.msk [vmem:[%s170] sm:$0xf] %vm4194, %v4162
      %4196 = vst.msk [vmem:[%s170 + $0x4] sm:$0xf] %vm4194, %v4163
      %4197 = vst.msk [vmem:[%s170 + $0x8] sm:$0xf] %vm4194, %v4164
      %4198 = vst.msk [vmem:[%s170 + $0xc] sm:$0xf] %vm4194, %v4165
      %4199 = vst.msk [vmem:[%s170 + $0x10] sm:$0xf] %vm4194, %v4166
      %4200 = vst.msk [vmem:[%s170 + $0x14] sm:$0xf] %vm4194, %v4167
      %4201 = vst.msk [vmem:[%s170 + $0x18] sm:$0xf] %vm4194, %v4168
      %4202 = vst.msk [vmem:[%s170 + $0x1c] sm:$0xf] %vm4194, %v4169
      %4203 = vst.msk [vmem:[%s170 + $0x20] sm:$0xf] %vm4194, %v4170
      %4204 = vst.msk [vmem:[%s170 + $0x24] sm:$0xf] %vm4194, %v4171
      %4205 = vst.msk [vmem:[%s170 + $0x28] sm:$0xf] %vm4194, %v4172
      %4206 = vst.msk [vmem:[%s170 + $0x2c] sm:$0xf] %vm4194, %v4173
      %4207 = vst.msk [vmem:[%s170 + $0x30] sm:$0xf] %vm4194, %v4174
      %4208 = vst.msk [vmem:[%s170 + $0x34] sm:$0xf] %vm4194, %v4175
      %4209 = vst.msk [vmem:[%s170 + $0x38] sm:$0xf] %vm4194, %v4176
      %4210 = vst.msk [vmem:[%s170 + $0x3c] sm:$0xf] %vm4194, %v4177
      %4211 = vst.msk [vmem:[%s170 + $0x40] sm:$0xf] %vm4194, %v4178
      %4212 = vst.msk [vmem:[%s170 + $0x44] sm:$0xf] %vm4194, %v4179
      %4213 = vst.msk [vmem:[%s170 + $0x48] sm:$0xf] %vm4194, %v4180
      %4214 = vst.msk [vmem:[%s170 + $0x4c] sm:$0xf] %vm4194, %v4181
      %4215 = vst.msk [vmem:[%s170 + $0x50] sm:$0xf] %vm4194, %v4182
      %4216 = vst.msk [vmem:[%s170 + $0x54] sm:$0xf] %vm4194, %v4183
      %4217 = vst.msk [vmem:[%s170 + $0x58] sm:$0xf] %vm4194, %v4184
      %4218 = vst.msk [vmem:[%s170 + $0x5c] sm:$0xf] %vm4194, %v4185
      %4219 = vst.msk [vmem:[%s170 + $0x60] sm:$0xf] %vm4194, %v4186
      %4220 = vst.msk [vmem:[%s170 + $0x64] sm:$0xf] %vm4194, %v4187
      %4221 = vst.msk [vmem:[%s170 + $0x68] sm:$0xf] %vm4194, %v4188
      %4222 = vst.msk [vmem:[%s170 + $0x6c] sm:$0xf] %vm4194, %v4189
      %4223 = vst.msk [vmem:[%s170 + $0x70] sm:$0xf] %vm4194, %v4190
      %4224 = vst.msk [vmem:[%s170 + $0x74] sm:$0xf] %vm4194, %v4191
      %4225 = vst.msk [vmem:[%s170 + $0x78] sm:$0xf] %vm4194, %v4192
      %4226 = vst.msk [vmem:[%s170 + $0x7c] sm:$0xf] %vm4194, %v4193
      %p4227 = scmp.lt.s32.totalorder %s14, 1
      %s4228 = scalar_select %p4227, %s14, 1
      %s4229 = smul.addr %s4228, 32
      %s4230 = smul.addr %s4229, 4
      %s4231 = scalar_lea.vmem %s3, %s4230
      // Predicated region
      $region33: #{tpu_custom_call.1} parent=31 // pred_check
        %p4232 = pneg %p100
      $region34: #{tpu_custom_call.1} parent=31 // pred_check_branch
        %4234 = sbr.rel (%p4232) target = $region36
      $region35: #{tpu_custom_call.1} parent=31 // pred_region
        _
      $region36: #{tpu_custom_call.1} parent=31 // pred_fallthru
        _
    $region32: #{tpu_custom_call.1} parent=5 // pred_fallthru
      _
    %p4235 = scmp.le.s32.totalorder 2, %s9
    // Predicated region
    $region37: #{tpu_custom_call.1} parent=5 // pred_check
      %p4236 = pneg %p4235
    $region38: #{tpu_custom_call.1} parent=5 // pred_check_branch
      %4238 = sbr.rel (%p4236) target = $region40
    $region39: #{tpu_custom_call.1} parent=5 // pred_region
      %s4239 = ssub.s32 %s9, 2
      // Predicated region
      $region41: #{tpu_custom_call.1} parent=39 // pred_check
        %p4240 = pneg %p106
      $region42: #{tpu_custom_call.1} parent=39 // pred_check_branch
        %4242 = sbr.rel (%p4240) target = $region44
      $region43: #{tpu_custom_call.1} parent=39 // pred_region
        %p4243 = scmp.lt.s32.totalorder %s15, 1
        %s4244 = scalar_select %p4243, %s15, 1
        %s4245 = smul.addr %s4244, 32
        %s4246 = smul.addr %s4245, 4
        %s4247 = scalar_lea.vmem %s3, %s4246
      $region44: #{tpu_custom_call.1} parent=39 // pred_fallthru
        _
    $region40: #{tpu_custom_call.1} parent=5 // pred_fallthru
      _
  $region6: #{tpu_custom_call.1} parent=0 // loop_footer
    %s13 = sadd.s32 1, %s9
  $region7: #{tpu_custom_call.1} parent=0 // loop_footer_branch
    %8 = sbr.rel target = $region3
  $region8: #{tpu_custom_call.1} parent=0 // loop_exit
    _

</llo_original>
